<compile_context>
chip_gen: v5e
topology: v5e:2x2
jax: 0.10.0
libtpu: 0.0.40
codegen_flags: <defaults>
</compile_context>

<pallas_src>
import functools
import math

import jax
import jax.numpy as jnp
from jax.experimental import pallas as pl
from jax.experimental.pallas import tpu as pltpu

# ----------------------------- configuration -------------------------------
PATCH_H = 4
PATCH_W = 4
IMG_H = 16
IMG_W = 16
CHANNELS = 3                                   # cifar10
PATCH_DIM = PATCH_H * PATCH_W * CHANNELS       # args.patch_dim = 48
NUM_PATCHES = (IMG_H // PATCH_H) * (IMG_W // PATCH_W)  # args.num_patches = 16
EMBED_DIM = 32                                 # args.embed_dim
LATENT_DIM = 32                                # args.latent_dim
NUM_LATENTS = 8
NUM_HEADS = 2
NUM_BLOCKS = 2                                 # PerceiverIN(num_blocks=2)
NUMY = 10                                      # args.numy
MLP_MULT = 4
BATCH = 2

SLAB_WIDTH = 128            # lane-dense packing width for parameter slabs
MXU_DTYPE = jnp.bfloat16    # bf16 MXU inputs, f32 accumulation


# ------------------------------ fused kernel --------------------------------
def _fused_kernel(patches_ref, wslab_ref, vslab_ref, out_ref, *,
                  wmap, vmap, batch, num_heads, num_blocks,
                  num_patches, num_latents):
    L, N = num_latents, num_patches

    def w(name):                        # bf16 matmul weight (pre-cast offline)
        off, r, c = wmap[name]
        return wslab_ref[off:off + r, :c]

    def v(name):                        # f32 bias / LN / embedding vector
        off, r, c = vmap[name]
        return vslab_ref[off:off + r, :c]

    def mm(a, b_bf16):                  # activation @ (already bf16) weight
        return jax.lax.dot_general(
            a.astype(MXU_DTYPE), b_bf16,
            dimension_numbers=(((1,), (0,)), ((), ())),
            preferred_element_type=jnp.float32)

    def mm_aa(a, b):                    # activation @ activation
        return jax.lax.dot_general(
            a.astype(MXU_DTYPE), b.astype(MXU_DTYPE),
            dimension_numbers=(((1,), (0,)), ((), ())),
            preferred_element_type=jnp.float32)

    def mm_abt(a, b):                   # a[M,K] @ b[N,K]^T (attention scores)
        return jax.lax.dot_general(
            a.astype(MXU_DTYPE), b.astype(MXU_DTYPE),
            dimension_numbers=(((1,), (1,)), ((), ())),
            preferred_element_type=jnp.float32)

    def layernorm(x, gname, bname):
        mu = jnp.mean(x, axis=-1, keepdims=True)
        var = jnp.mean(jnp.square(x - mu), axis=-1, keepdims=True)
        return (x - mu) * jax.lax.rsqrt(var + 1e-5) * v(gname) + v(bname)

    def softmax(s):
        s = s - jnp.max(s, axis=-1, keepdims=True)
        e = jnp.exp(s)
        return e * pl.reciprocal(jnp.sum(e, axis=-1, keepdims=True), approx=True)

    def attend(prefix, xq, xkv, q_batched, q_rows, kv_rows):
        """Multi-head pre-norm attention.  xkv is batched [batch*kv_rows, D].
        xq is batched [batch*q_rows, D] (q_batched=True) or a single shared
        [q_rows, D] block reused by every image.  Returns [batch*q_rows, D]."""
        nq = layernorm(xq, f"{prefix}_lnq_g", f"{prefix}_lnq_b")
        nkv = layernorm(xkv, f"{prefix}_lnkv_g", f"{prefix}_lnkv_b")
        out = None
        for h in range(num_heads):      # per-head weights pre-split offline
            qh = mm(nq, w(f"{prefix}_wq{h}")) + v(f"{prefix}_bq{h}")   # [*, dh]
            kh = mm(nkv, w(f"{prefix}_wk{h}")) + v(f"{prefix}_bk{h}")
            vh = mm(nkv, w(f"{prefix}_wv{h}")) + v(f"{prefix}_bv{h}")
            o_blocks = []
            for b in range(batch):      # tiny per-image score / PV matmuls
                qb = qh[b * q_rows:(b + 1) * q_rows] if q_batched else qh
                kv_sl = slice(b * kv_rows, (b + 1) * kv_rows)
                p = softmax(mm_abt(qb, kh[kv_sl]))           # [q_rows, kv_rows]
                o_blocks.append(mm_aa(p, vh[kv_sl]))         # [q_rows, dh]
            o_all = jnp.concatenate(o_blocks, axis=0)        # [batch*q_rows, dh]
            contrib = mm(o_all, w(f"{prefix}_wo{h}"))        # [batch*q_rows, D]
            out = contrib if out is None else out + contrib
        return out + v(f"{prefix}_bo")

    def mlp(prefix, x):
        hdn = layernorm(x, f"{prefix}_ln_g", f"{prefix}_ln_b")
        hdn = mm(hdn, w(f"{prefix}_w1")) + v(f"{prefix}_b1")
        # TODO(synk): tanh-approx GELU; PyTorch nn.GELU defaults to exact erf.
        hdn = jax.nn.gelu(hdn)
        hdn = mm(hdn, w(f"{prefix}_w2")) + v(f"{prefix}_b2")
        return x + hdn

    # ---- batched patch embedding + position embedding (whole batch at once) --
    patches = patches_ref[...]                                  # [B*N, patch_dim]
    pos_all = jnp.concatenate([v("pos_emb")] * batch, axis=0)   # [B*N, D]
    embs = mm(patches, w("patch_w")) + v("patch_b") + pos_all

    # ---- Perceiver encoder ----------------------------------------------------
    lat0 = v("latents")                                         # [L, D] shared
    lat = jnp.concatenate([lat0] * batch, axis=0)               # [B*L, D]
    # Encoder cross-attention: initial latents are identical per image, so the
    # Q projection is computed once and shared across the batch.
    lat = lat + attend("enc", lat0, embs, q_batched=False, q_rows=L, kv_rows=N)
    lat = mlp("encmlp", lat)
    for i in range(num_blocks):
        lat = lat + attend(f"self{i}", lat, lat,
                           q_batched=True, q_rows=L, kv_rows=L)
        lat = mlp(f"self{i}mlp", lat)

    # ---- decoder cross-attention (shared task query) + classification head --
    # TODO(synk): assumed Perceiver-IO decode — no residual on the decoder
    # cross-attention; dropout is eval-mode identity.
    dec = attend("dec", v("query"), lat, q_batched=False, q_rows=1, kv_rows=L)
    out_ref[...] = mm(dec, w("head_w")) + v("head_b")           # [B, 128] lane-dense


# ------------------------------- model glue ---------------------------------
def rearrange_patches(x):
    # einops: 'b c (h p1) (w p2) -> b (h w) (p1 p2 c)', then flatten batch
    B, C, H, W = x.shape
    h, w = H // PATCH_H, W // PATCH_W
    x = x.reshape(B, C, h, PATCH_H, w, PATCH_W)
    x = jnp.transpose(x, (0, 2, 4, 3, 5, 1))   # b h w p1 p2 c
    return x.reshape(B * h * w, PATCH_H * PATCH_W * C)


def build_forward(wmap, vmap):
    """wmap/vmap are static slab layouts {name: (row_off, rows, cols)}."""

    @jax.jit
    def forward(x, wslab, vslab):
        B = x.shape[0]
        patches = rearrange_patches(x)                          # [B*N, patch_dim]

        kern = functools.partial(
            _fused_kernel, wmap=wmap, vmap=vmap, batch=B,
            num_heads=NUM_HEADS, num_blocks=NUM_BLOCKS,
            num_patches=NUM_PATCHES, num_latents=NUM_LATENTS)

        # Advisory cost estimate: this custom call is tiny.
        dh = LATENT_DIM // NUM_HEADS
        def attn_flops(tq, tk):
            return 2 * NUM_HEADS * (tq * LATENT_DIM * dh + 2 * tk * LATENT_DIM * dh
                                    + 2 * tq * tk * dh + tq * dh * LATENT_DIM)
        mlp_flops = 4 * NUM_LATENTS * LATENT_DIM * MLP_MULT * LATENT_DIM
        per_image = (2 * NUM_PATCHES * PATCH_DIM * EMBED_DIM
                     + attn_flops(NUM_LATENTS, NUM_PATCHES) + mlp_flops
                     + NUM_BLOCKS * (attn_flops(NUM_LATENTS, NUM_LATENTS) + mlp_flops)
                     + attn_flops(1, NUM_LATENTS) + 2 * LATENT_DIM * SLAB_WIDTH)
        exps = NUM_HEADS * (NUM_LATENTS * NUM_PATCHES
                            + NUM_BLOCKS * NUM_LATENTS * NUM_LATENTS + NUM_LATENTS)
        gelus = (1 + NUM_BLOCKS) * NUM_LATENTS * MLP_MULT * LATENT_DIM
        cost = pl.CostEstimate(
            flops=int(B * per_image),
            transcendentals=int(B * (exps + gelus)),
            bytes_accessed=int(patches.size * 4 + wslab.size * 2 + vslab.size * 4
                               + B * SLAB_WIDTH * 4))

        out = pl.pallas_call(
            kern,
            out_shape=jax.ShapeDtypeStruct((B, SLAB_WIDTH), jnp.float32),
            in_specs=[pl.BlockSpec(memory_space=pltpu.MemorySpace.VMEM)] * 3,
            out_specs=pl.BlockSpec(memory_space=pltpu.MemorySpace.VMEM),
            cost_estimate=cost,
        )(patches, wslab, vslab)
        # Original module does `out.squeeze()`; keep the batch dim explicit.
        return out[:, :NUMY]

    return forward


# ------------------------------- parameters ---------------------------------
def init_attn_params(key, dim):
    ks = jax.random.split(key, 4)
    p = {}
    for name, k in zip(("q", "k", "v", "o"), ks):
        p[f"w{name}"] = jax.random.normal(k, (dim, dim), jnp.float32) * 0.02
        p[f"b{name}"] = jnp.zeros((dim,), jnp.float32)
    p["ln_q_g"] = jnp.ones((dim,), jnp.float32)
    p["ln_q_b"] = jnp.zeros((dim,), jnp.float32)
    p["ln_kv_g"] = jnp.ones((dim,), jnp.float32)
    p["ln_kv_b"] = jnp.zeros((dim,), jnp.float32)
    return p


def init_mlp_params(key, dim):
    k1, k2 = jax.random.split(key)
    return {
        "ln_g": jnp.ones((dim,), jnp.float32),
        "ln_b": jnp.zeros((dim,), jnp.float32),
        "w1": jax.random.normal(k1, (dim, MLP_MULT * dim), jnp.float32) * 0.02,
        "b1": jnp.zeros((MLP_MULT * dim,), jnp.float32),
        "w2": jax.random.normal(k2, (MLP_MULT * dim, dim), jnp.float32) * 0.02,
        "b2": jnp.zeros((dim,), jnp.float32),
    }


def init_params(key):
    keys = jax.random.split(key, 8 + 2 * NUM_BLOCKS)
    params = {
        "patch_w": jax.random.normal(keys[0], (PATCH_DIM, EMBED_DIM), jnp.float32) * 0.02,
        "patch_b": jnp.zeros((EMBED_DIM,), jnp.float32),
        "pos_emb": jax.random.normal(keys[1], (NUM_PATCHES, EMBED_DIM), jnp.float32) * 0.02,
        "query_emb": jax.random.normal(keys[2], (1, EMBED_DIM), jnp.float32) * 0.02,
        "latents": jax.random.normal(keys[3], (NUM_LATENTS, LATENT_DIM), jnp.float32) * 0.02,
        "enc_cross": init_attn_params(keys[4], LATENT_DIM),
        "enc_cross_mlp": init_mlp_params(keys[5], LATENT_DIM),
        "dec_cross": init_attn_params(keys[6], LATENT_DIM),
        "head_w": jax.random.normal(keys[7], (LATENT_DIM, NUMY), jnp.float32) * 0.02,
        "head_b": jnp.zeros((NUMY,), jnp.float32),
    }
    for i in range(NUM_BLOCKS):
        params[f"self_{i}"] = init_attn_params(keys[8 + 2 * i], LATENT_DIM)
        params[f"self_{i}_mlp"] = init_mlp_params(keys[9 + 2 * i], LATENT_DIM)
    return params


# --------------------------- slab packing (offline) --------------------------
def _pack_slab(entries, dtype):
    """entries: list of (name, 2-D f32 array).  Each entry is padded to an
    8-row-aligned, 128-lane block and stacked along rows.  Returns
    (slab, layout) with layout[name] = (row_offset, rows, cols) — all static
    Python ints so the kernel can take aligned, lane-offset-0 ref slices."""
    blocks, layout, row = [], {}, 0
    for name, arr in entries:
        arr = jnp.asarray(arr, jnp.float32)
        r, c = arr.shape
        assert c <= SLAB_WIDTH, (name, arr.shape)
        rp = ((r + 7) // 8) * 8
        blk = jnp.zeros((rp, SLAB_WIDTH), jnp.float32).at[:r, :c].set(arr)
        blocks.append(blk.astype(dtype))
        layout[name] = (row, r, c)
        row += rp
    return jnp.concatenate(blocks, axis=0), layout


def fuse_params(params):
    """One-time re-layout of module parameters for the fused kernel:
    per-head weight splits with the 1/sqrt(dh) scale folded into wq/bq,
    bf16 pre-cast of all matmul weights, lane-dense padded head, and packing
    of everything into one bf16 weight slab + one f32 vector slab."""
    dh = LATENT_DIM // NUM_HEADS
    scale = 1.0 / math.sqrt(dh)
    wmat, wvec = [], []

    def add_attn(prefix, p):
        for h in range(NUM_HEADS):
            sl = slice(h * dh, (h + 1) * dh)
            wmat.append((f"{prefix}_wq{h}", p["wq"][:, sl] * scale))  # [D, dh]
            wmat.append((f"{prefix}_wk{h}", p["wk"][:, sl]))
            wmat.append((f"{prefix}_wv{h}", p["wv"][:, sl]))
            wmat.append((f"{prefix}_wo{h}", p["wo"][sl, :]))          # [dh, D]
            wvec.append((f"{prefix}_bq{h}", (p["bq"][sl] * scale).reshape(1, dh)))
            wvec.append((f"{prefix}_bk{h}", p["bk"][sl].reshape(1, dh)))
            wvec.append((f"{prefix}_bv{h}", p["bv"][sl].reshape(1, dh)))
        wvec.append((f"{prefix}_bo", p["bo"].reshape(1, -1)))
        wvec.append((f"{prefix}_lnq_g", p["ln_q_g"].reshape(1, -1)))
        wvec.append((f"{prefix}_lnq_b", p["ln_q_b"].reshape(1, -1)))
        wvec.append((f"{prefix}_lnkv_g", p["ln_kv_g"].reshape(1, -1)))
        wvec.append((f"{prefix}_lnkv_b", p["ln_kv_b"].reshape(1, -1)))

    def add_mlp(prefix, p):
        wmat.append((f"{prefix}_w1", p["w1"]))
        wmat.append((f"{prefix}_w2", p["w2"]))
        wvec.append((f"{prefix}_ln_g", p["ln_g"].reshape(1, -1)))
        wvec.append((f"{prefix}_ln_b", p["ln_b"].reshape(1, -1)))
        wvec.append((f"{prefix}_b1", p["b1"].reshape(1, -1)))
        wvec.append((f"{prefix}_b2", p["b2"].reshape(1, -1)))

    wmat.append(("patch_w", params["patch_w"]))
    wvec.append(("patch_b", params["patch_b"].reshape(1, -1)))
    wvec.append(("pos_emb", params["pos_emb"]))
    wvec.append(("query", params["query_emb"]))
    wvec.append(("latents", params["latents"]))

    add_attn("enc", params["enc_cross"])
    add_mlp("encmlp", params["enc_cross_mlp"])
    for i in range(NUM_BLOCKS):
        add_attn(f"self{i}", params[f"self_{i}"])
        add_mlp(f"self{i}mlp", params[f"self_{i}_mlp"])
    add_attn("dec", params["dec_cross"])

    # Classification head padded to 128 lanes -> lane-dense final store.
    head_w = jnp.zeros((LATENT_DIM, SLAB_WIDTH), jnp.float32).at[:, :NUMY].set(params["head_w"])
    head_b = jnp.zeros((1, SLAB_WIDTH), jnp.float32).at[:, :NUMY].set(params["head_b"].reshape(1, NUMY))
    wmat.append(("head_w", head_w))
    wvec.append(("head_b", head_b))

    wslab, wmap = _pack_slab(wmat, MXU_DTYPE)     # bf16 matmul weights
    vslab, vmap = _pack_slab(wvec, jnp.float32)   # f32 biases / LN / embeddings
    return wslab, vslab, wmap, vmap


# ---------------------------------- main -------------------------------------
if __name__ == "__main__":
    key = jax.random.PRNGKey(0)
    xkey, pkey = jax.random.split(key)
    x = jax.random.normal(xkey, (BATCH, CHANNELS, IMG_H, IMG_W), jnp.float32)
    params = init_params(pkey)
    wslab, vslab, wmap, vmap = fuse_params(params)   # one-time param re-layout
    forward = build_forward(wmap, vmap)
    out = jax.block_until_ready(forward(x, wslab, vslab))
    assert out.shape == (BATCH, NUMY), out.shape
    assert bool(jnp.all(jnp.isfinite(out)))
    print("KERNEL_OK")
</pallas_src>

<mosaic_0001>
module attributes {stable_mosaic.version = 11 : i64} {
  func.func @_fused_kernel(%arg0: memref<32x48xf32, #tpu.memory_space<vmem>>, %arg1: memref<1456x128xbf16, #tpu.memory_space<vmem>>, %arg2: memref<496x128xf32, #tpu.memory_space<vmem>>, %arg3: memref<2x128xf32, #tpu.memory_space<vmem>>) attributes {dimension_semantics = [], scalar_prefetch = 0 : i64, scratch_operands = 0 : i64, tpu.core_type = #tpu.core_type<tc>} {
    %c0 = arith.constant 0 : index
    %c0_0 = arith.constant 0 : index
    %0 = vector.load %arg0[%c0, %c0_0] : memref<32x48xf32, #tpu.memory_space<vmem>>, vector<32x48xf32>
    %c8 = arith.constant 8 : index
    %c0_1 = arith.constant 0 : index
    %1 = vector.load %arg2[%c8, %c0_1] : memref<496x128xf32, #tpu.memory_space<vmem>>, vector<16x32xf32>
    %2 = tpu.concatenate %1, %1 in 0 : vector<16x32xf32>, vector<16x32xf32> -> vector<32x32xf32>
    %c0_2 = arith.constant 0 : index
    %c0_3 = arith.constant 0 : index
    %3 = vector.load %arg1[%c0_2, %c0_3] : memref<1456x128xbf16, #tpu.memory_space<vmem>>, vector<48x32xbf16>
    %4 = arith.truncf %0 : vector<32x48xf32> to vector<32x48xbf16>
    %cst = arith.constant dense<0.000000e+00> : vector<32x32xf32>
    %5 = tpu.matmul %4, %3, %cst {dimension_numbers = #tpu.dot_dimension_numbers<[1], [0], [0], [1], [0, 0, 1, 1], [], []>} : vector<32x48xbf16>, vector<48x32xbf16>, vector<32x32xf32> -> vector<32x32xf32>
    %c0_4 = arith.constant 0 : index
    %c0_5 = arith.constant 0 : index
    %6 = vector.load %arg2[%c0_4, %c0_5] : memref<496x128xf32, #tpu.memory_space<vmem>>, vector<1x32xf32>
    %7 = vector.broadcast %6 : vector<1x32xf32> to vector<32x32xf32>
    %8 = arith.addf %5, %7 : vector<32x32xf32>
    %9 = arith.addf %8, %2 : vector<32x32xf32>
    %c32 = arith.constant 32 : index
    %c0_6 = arith.constant 0 : index
    %10 = vector.load %arg2[%c32, %c0_6] : memref<496x128xf32, #tpu.memory_space<vmem>>, vector<8x32xf32>
    %11 = tpu.concatenate %10, %10 in 0 : vector<8x32xf32>, vector<8x32xf32> -> vector<16x32xf32>
    %cst_7 = arith.constant dense<0.000000e+00> : vector<8xf32>
    %12 = vector.multi_reduction <add>, %10, %cst_7 [1] : vector<8x32xf32> to vector<8xf32>
    %13 = vector.shape_cast %12 : vector<8xf32> to vector<8x1xf32>
    %cst_8 = arith.constant 3.200000e+01 : f32
    %14 = vector.broadcast %cst_8 : f32 to vector<8x1xf32>
    %15 = arith.divf %13, %14 : vector<8x1xf32>
    %16 = vector.broadcast %15 : vector<8x1xf32> to vector<8x32xf32>
    %17 = arith.subf %10, %16 : vector<8x32xf32>
    %18 = arith.mulf %17, %17 : vector<8x32xf32>
    %cst_9 = arith.constant dense<0.000000e+00> : vector<8xf32>
    %19 = vector.multi_reduction <add>, %18, %cst_9 [1] : vector<8x32xf32> to vector<8xf32>
    %20 = vector.shape_cast %19 : vector<8xf32> to vector<8x1xf32>
    %cst_10 = arith.constant 3.200000e+01 : f32
    %21 = vector.broadcast %cst_10 : f32 to vector<8x1xf32>
    %22 = arith.divf %20, %21 : vector<8x1xf32>
    %23 = vector.broadcast %15 : vector<8x1xf32> to vector<8x32xf32>
    %24 = arith.subf %10, %23 : vector<8x32xf32>
    %cst_11 = arith.constant 9.99999974E-6 : f32
    %25 = vector.broadcast %cst_11 : f32 to vector<8x1xf32>
    %26 = arith.addf %22, %25 : vector<8x1xf32>
    %27 = math.rsqrt %26 : vector<8x1xf32>
    %28 = vector.broadcast %27 : vector<8x1xf32> to vector<8x32xf32>
    %29 = arith.mulf %24, %28 : vector<8x32xf32>
    %c96 = arith.constant 96 : index
    %c0_12 = arith.constant 0 : index
    %30 = vector.load %arg2[%c96, %c0_12] : memref<496x128xf32, #tpu.memory_space<vmem>>, vector<1x32xf32>
    %31 = vector.broadcast %30 : vector<1x32xf32> to vector<8x32xf32>
    %32 = arith.mulf %29, %31 : vector<8x32xf32>
    %c104 = arith.constant 104 : index
    %c0_13 = arith.constant 0 : index
    %33 = vector.load %arg2[%c104, %c0_13] : memref<496x128xf32, #tpu.memory_space<vmem>>, vector<1x32xf32>
    %34 = vector.broadcast %33 : vector<1x32xf32> to vector<8x32xf32>
    %35 = arith.addf %32, %34 : vector<8x32xf32>
    %cst_14 = arith.constant dense<0.000000e+00> : vector<32xf32>
    %36 = vector.multi_reduction <add>, %9, %cst_14 [1] : vector<32x32xf32> to vector<32xf32>
    %37 = vector.shape_cast %36 : vector<32xf32> to vector<32x1xf32>
    %cst_15 = arith.constant 3.200000e+01 : f32
    %38 = vector.broadcast %cst_15 : f32 to vector<32x1xf32>
    %39 = arith.divf %37, %38 : vector<32x1xf32>
    %40 = vector.broadcast %39 : vector<32x1xf32> to vector<32x32xf32>
    %41 = arith.subf %9, %40 : vector<32x32xf32>
    %42 = arith.mulf %41, %41 : vector<32x32xf32>
    %cst_16 = arith.constant dense<0.000000e+00> : vector<32xf32>
    %43 = vector.multi_reduction <add>, %42, %cst_16 [1] : vector<32x32xf32> to vector<32xf32>
    %44 = vector.shape_cast %43 : vector<32xf32> to vector<32x1xf32>
    %cst_17 = arith.constant 3.200000e+01 : f32
    %45 = vector.broadcast %cst_17 : f32 to vector<32x1xf32>
    %46 = arith.divf %44, %45 : vector<32x1xf32>
    %47 = vector.broadcast %39 : vector<32x1xf32> to vector<32x32xf32>
    %48 = arith.subf %9, %47 : vector<32x32xf32>
    %cst_18 = arith.constant 9.99999974E-6 : f32
    %49 = vector.broadcast %cst_18 : f32 to vector<32x1xf32>
    %50 = arith.addf %46, %49 : vector<32x1xf32>
    %51 = math.rsqrt %50 : vector<32x1xf32>
    %52 = vector.broadcast %51 : vector<32x1xf32> to vector<32x32xf32>
    %53 = arith.mulf %48, %52 : vector<32x32xf32>
    %c112 = arith.constant 112 : index
    %c0_19 = arith.constant 0 : index
    %54 = vector.load %arg2[%c112, %c0_19] : memref<496x128xf32, #tpu.memory_space<vmem>>, vector<1x32xf32>
    %55 = vector.broadcast %54 : vector<1x32xf32> to vector<32x32xf32>
    %56 = arith.mulf %53, %55 : vector<32x32xf32>
    %c120 = arith.constant 120 : index
    %c0_20 = arith.constant 0 : index
    %57 = vector.load %arg2[%c120, %c0_20] : memref<496x128xf32, #tpu.memory_space<vmem>>, vector<1x32xf32>
    %58 = vector.broadcast %57 : vector<1x32xf32> to vector<32x32xf32>
    %59 = arith.addf %56, %58 : vector<32x32xf32>
    %c48 = arith.constant 48 : index
    %c0_21 = arith.constant 0 : index
    %60 = vector.load %arg1[%c48, %c0_21] : memref<1456x128xbf16, #tpu.memory_space<vmem>>, vector<32x16xbf16>
    %61 = arith.truncf %35 : vector<8x32xf32> to vector<8x32xbf16>
    %cst_22 = arith.constant dense<0.000000e+00> : vector<8x16xf32>
    %62 = tpu.matmul %61, %60, %cst_22 {dimension_numbers = #tpu.dot_dimension_numbers<[1], [0], [0], [1], [0, 0, 1, 1], [], []>} : vector<8x32xbf16>, vector<32x16xbf16>, vector<8x16xf32> -> vector<8x16xf32>
    %c40 = arith.constant 40 : index
    %c0_23 = arith.constant 0 : index
    %63 = vector.load %arg2[%c40, %c0_23] : memref<496x128xf32, #tpu.memory_space<vmem>>, vector<1x16xf32>
    %64 = vector.broadcast %63 : vector<1x16xf32> to vector<8x16xf32>
    %65 = arith.addf %62, %64 : vector<8x16xf32>
    %c80 = arith.constant 80 : index
    %c0_24 = arith.constant 0 : index
    %66 = vector.load %arg1[%c80, %c0_24] : memref<1456x128xbf16, #tpu.memory_space<vmem>>, vector<32x16xbf16>
    %67 = arith.truncf %59 : vector<32x32xf32> to vector<32x32xbf16>
    %cst_25 = arith.constant dense<0.000000e+00> : vector<32x16xf32>
    %68 = tpu.matmul %67, %66, %cst_25 {dimension_numbers = #tpu.dot_dimension_numbers<[1], [0], [0], [1], [0, 0, 1, 1], [], []>} : vector<32x32xbf16>, vector<32x16xbf16>, vector<32x16xf32> -> vector<32x16xf32>
    %c48_26 = arith.constant 48 : index
    %c0_27 = arith.constant 0 : index
    %69 = vector.load %arg2[%c48_26, %c0_27] : memref<496x128xf32, #tpu.memory_space<vmem>>, vector<1x16xf32>
    %70 = vector.broadcast %69 : vector<1x16xf32> to vector<32x16xf32>
    %71 = arith.addf %68, %70 : vector<32x16xf32>
    %c112_28 = arith.constant 112 : index
    %c0_29 = arith.constant 0 : index
    %72 = vector.load %arg1[%c112_28, %c0_29] : memref<1456x128xbf16, #tpu.memory_space<vmem>>, vector<32x16xbf16>
    %73 = arith.truncf %59 : vector<32x32xf32> to vector<32x32xbf16>
    %cst_30 = arith.constant dense<0.000000e+00> : vector<32x16xf32>
    %74 = tpu.matmul %73, %72, %cst_30 {dimension_numbers = #tpu.dot_dimension_numbers<[1], [0], [0], [1], [0, 0, 1, 1], [], []>} : vector<32x32xbf16>, vector<32x16xbf16>, vector<32x16xf32> -> vector<32x16xf32>
    %c56 = arith.constant 56 : index
    %c0_31 = arith.constant 0 : index
    %75 = vector.load %arg2[%c56, %c0_31] : memref<496x128xf32, #tpu.memory_space<vmem>>, vector<1x16xf32>
    %76 = vector.broadcast %75 : vector<1x16xf32> to vector<32x16xf32>
    %77 = arith.addf %74, %76 : vector<32x16xf32>
    %78 = vector.extract_strided_slice %71 {offsets = [0, 0], sizes = [16, 16], strides = [1, 1]} : vector<32x16xf32> to vector<16x16xf32>
    %79 = arith.truncf %65 : vector<8x16xf32> to vector<8x16xbf16>
    %80 = arith.truncf %78 : vector<16x16xf32> to vector<16x16xbf16>
    %cst_32 = arith.constant dense<0.000000e+00> : vector<8x16xf32>
    %81 = tpu.matmul %79, %80, %cst_32 {dimension_numbers = #tpu.dot_dimension_numbers<[1], [1], [0], [0], [0, 0, 1, 0], [], []>} : vector<8x16xbf16>, vector<16x16xbf16>, vector<8x16xf32> -> vector<8x16xf32>
    %cst_33 = arith.constant dense<0xFF800000> : vector<8xf32>
    %82 = vector.multi_reduction <maximumf>, %81, %cst_33 [1] : vector<8x16xf32> to vector<8xf32>
    %83 = vector.shape_cast %82 : vector<8xf32> to vector<8x1xf32>
    %84 = vector.broadcast %83 : vector<8x1xf32> to vector<8x16xf32>
    %85 = arith.subf %81, %84 : vector<8x16xf32>
    %86 = math.exp %85 : vector<8x16xf32>
    %cst_34 = arith.constant dense<0.000000e+00> : vector<8xf32>
    %87 = vector.multi_reduction <add>, %86, %cst_34 [1] : vector<8x16xf32> to vector<8xf32>
    %88 = vector.shape_cast %87 : vector<8xf32> to vector<8x1xf32>
    %89 = tpu.reciprocal %88 {approx = true} : vector<8x1xf32> -> vector<8x1xf32>
    %90 = vector.broadcast %89 : vector<8x1xf32> to vector<8x16xf32>
    %91 = arith.mulf %86, %90 : vector<8x16xf32>
    %92 = vector.extract_strided_slice %77 {offsets = [0, 0], sizes = [16, 16], strides = [1, 1]} : vector<32x16xf32> to vector<16x16xf32>
    %93 = arith.truncf %91 : vector<8x16xf32> to vector<8x16xbf16>
    %94 = arith.truncf %92 : vector<16x16xf32> to vector<16x16xbf16>
    %cst_35 = arith.constant dense<0.000000e+00> : vector<8x16xf32>
    %95 = tpu.matmul %93, %94, %cst_35 {dimension_numbers = #tpu.dot_dimension_numbers<[1], [0], [0], [1], [0, 0, 1, 1], [], []>} : vector<8x16xbf16>, vector<16x16xbf16>, vector<8x16xf32> -> vector<8x16xf32>
    %96 = vector.extract_strided_slice %71 {offsets = [16, 0], sizes = [16, 16], strides = [1, 1]} : vector<32x16xf32> to vector<16x16xf32>
    %97 = arith.truncf %65 : vector<8x16xf32> to vector<8x16xbf16>
    %98 = arith.truncf %96 : vector<16x16xf32> to vector<16x16xbf16>
    %cst_36 = arith.constant dense<0.000000e+00> : vector<8x16xf32>
    %99 = tpu.matmul %97, %98, %cst_36 {dimension_numbers = #tpu.dot_dimension_numbers<[1], [1], [0], [0], [0, 0, 1, 0], [], []>} : vector<8x16xbf16>, vector<16x16xbf16>, vector<8x16xf32> -> vector<8x16xf32>
    %cst_37 = arith.constant dense<0xFF800000> : vector<8xf32>
    %100 = vector.multi_reduction <maximumf>, %99, %cst_37 [1] : vector<8x16xf32> to vector<8xf32>
    %101 = vector.shape_cast %100 : vector<8xf32> to vector<8x1xf32>
    %102 = vector.broadcast %101 : vector<8x1xf32> to vector<8x16xf32>
    %103 = arith.subf %99, %102 : vector<8x16xf32>
    %104 = math.exp %103 : vector<8x16xf32>
    %cst_38 = arith.constant dense<0.000000e+00> : vector<8xf32>
    %105 = vector.multi_reduction <add>, %104, %cst_38 [1] : vector<8x16xf32> to vector<8xf32>
    %106 = vector.shape_cast %105 : vector<8xf32> to vector<8x1xf32>
    %107 = tpu.reciprocal %106 {approx = true} : vector<8x1xf32> -> vector<8x1xf32>
    %108 = vector.broadcast %107 : vector<8x1xf32> to vector<8x16xf32>
    %109 = arith.mulf %104, %108 : vector<8x16xf32>
    %110 = vector.extract_strided_slice %77 {offsets = [16, 0], sizes = [16, 16], strides = [1, 1]} : vector<32x16xf32> to vector<16x16xf32>
    %111 = arith.truncf %109 : vector<8x16xf32> to vector<8x16xbf16>
    %112 = arith.truncf %110 : vector<16x16xf32> to vector<16x16xbf16>
    %cst_39 = arith.constant dense<0.000000e+00> : vector<8x16xf32>
    %113 = tpu.matmul %111, %112, %cst_39 {dimension_numbers = #tpu.dot_dimension_numbers<[1], [0], [0], [1], [0, 0, 1, 1], [], []>} : vector<8x16xbf16>, vector<16x16xbf16>, vector<8x16xf32> -> vector<8x16xf32>
    %114 = tpu.concatenate %95, %113 in 0 : vector<8x16xf32>, vector<8x16xf32> -> vector<16x16xf32>
    %c144 = arith.constant 144 : index
    %c0_40 = arith.constant 0 : index
    %115 = vector.load %arg1[%c144, %c0_40] : memref<1456x128xbf16, #tpu.memory_space<vmem>>, vector<16x32xbf16>
    %116 = arith.truncf %114 : vector<16x16xf32> to vector<16x16xbf16>
    %cst_41 = arith.constant dense<0.000000e+00> : vector<16x32xf32>
    %117 = tpu.matmul %116, %115, %cst_41 {dimension_numbers = #tpu.dot_dimension_numbers<[1], [0], [0], [1], [0, 0, 1, 1], [], []>} : vector<16x16xbf16>, vector<16x32xbf16>, vector<16x32xf32> -> vector<16x32xf32>
    %c160 = arith.constant 160 : index
    %c0_42 = arith.constant 0 : index
    %118 = vector.load %arg1[%c160, %c0_42] : memref<1456x128xbf16, #tpu.memory_space<vmem>>, vector<32x16xbf16>
    %119 = arith.truncf %35 : vector<8x32xf32> to vector<8x32xbf16>
    %cst_43 = arith.constant dense<0.000000e+00> : vector<8x16xf32>
    %120 = tpu.matmul %119, %118, %cst_43 {dimension_numbers = #tpu.dot_dimension_numbers<[1], [0], [0], [1], [0, 0, 1, 1], [], []>} : vector<8x32xbf16>, vector<32x16xbf16>, vector<8x16xf32> -> vector<8x16xf32>
    %c64 = arith.constant 64 : index
    %c0_44 = arith.constant 0 : index
    %121 = vector.load %arg2[%c64, %c0_44] : memref<496x128xf32, #tpu.memory_space<vmem>>, vector<1x16xf32>
    %122 = vector.broadcast %121 : vector<1x16xf32> to vector<8x16xf32>
    %123 = arith.addf %120, %122 : vector<8x16xf32>
    %c192 = arith.constant 192 : index
    %c0_45 = arith.constant 0 : index
    %124 = vector.load %arg1[%c192, %c0_45] : memref<1456x128xbf16, #tpu.memory_space<vmem>>, vector<32x16xbf16>
    %125 = arith.truncf %59 : vector<32x32xf32> to vector<32x32xbf16>
    %cst_46 = arith.constant dense<0.000000e+00> : vector<32x16xf32>
    %126 = tpu.matmul %125, %124, %cst_46 {dimension_numbers = #tpu.dot_dimension_numbers<[1], [0], [0], [1], [0, 0, 1, 1], [], []>} : vector<32x32xbf16>, vector<32x16xbf16>, vector<32x16xf32> -> vector<32x16xf32>
    %c72 = arith.constant 72 : index
    %c0_47 = arith.constant 0 : index
    %127 = vector.load %arg2[%c72, %c0_47] : memref<496x128xf32, #tpu.memory_space<vmem>>, vector<1x16xf32>
    %128 = vector.broadcast %127 : vector<1x16xf32> to vector<32x16xf32>
    %129 = arith.addf %126, %128 : vector<32x16xf32>
    %c224 = arith.constant 224 : index
    %c0_48 = arith.constant 0 : index
    %130 = vector.load %arg1[%c224, %c0_48] : memref<1456x128xbf16, #tpu.memory_space<vmem>>, vector<32x16xbf16>
    %131 = arith.truncf %59 : vector<32x32xf32> to vector<32x32xbf16>
    %cst_49 = arith.constant dense<0.000000e+00> : vector<32x16xf32>
    %132 = tpu.matmul %131, %130, %cst_49 {dimension_numbers = #tpu.dot_dimension_numbers<[1], [0], [0], [1], [0, 0, 1, 1], [], []>} : vector<32x32xbf16>, vector<32x16xbf16>, vector<32x16xf32> -> vector<32x16xf32>
    %c80_50 = arith.constant 80 : index
    %c0_51 = arith.constant 0 : index
    %133 = vector.load %arg2[%c80_50, %c0_51] : memref<496x128xf32, #tpu.memory_space<vmem>>, vector<1x16xf32>
    %134 = vector.broadcast %133 : vector<1x16xf32> to vector<32x16xf32>
    %135 = arith.addf %132, %134 : vector<32x16xf32>
    %136 = vector.extract_strided_slice %129 {offsets = [0, 0], sizes = [16, 16], strides = [1, 1]} : vector<32x16xf32> to vector<16x16xf32>
    %137 = arith.truncf %123 : vector<8x16xf32> to vector<8x16xbf16>
    %138 = arith.truncf %136 : vector<16x16xf32> to vector<16x16xbf16>
    %cst_52 = arith.constant dense<0.000000e+00> : vector<8x16xf32>
    %139 = tpu.matmul %137, %138, %cst_52 {dimension_numbers = #tpu.dot_dimension_numbers<[1], [1], [0], [0], [0, 0, 1, 0], [], []>} : vector<8x16xbf16>, vector<16x16xbf16>, vector<8x16xf32> -> vector<8x16xf32>
    %cst_53 = arith.constant dense<0xFF800000> : vector<8xf32>
    %140 = vector.multi_reduction <maximumf>, %139, %cst_53 [1] : vector<8x16xf32> to vector<8xf32>
    %141 = vector.shape_cast %140 : vector<8xf32> to vector<8x1xf32>
    %142 = vector.broadcast %141 : vector<8x1xf32> to vector<8x16xf32>
    %143 = arith.subf %139, %142 : vector<8x16xf32>
    %144 = math.exp %143 : vector<8x16xf32>
    %cst_54 = arith.constant dense<0.000000e+00> : vector<8xf32>
    %145 = vector.multi_reduction <add>, %144, %cst_54 [1] : vector<8x16xf32> to vector<8xf32>
    %146 = vector.shape_cast %145 : vector<8xf32> to vector<8x1xf32>
    %147 = tpu.reciprocal %146 {approx = true} : vector<8x1xf32> -> vector<8x1xf32>
    %148 = vector.broadcast %147 : vector<8x1xf32> to vector<8x16xf32>
    %149 = arith.mulf %144, %148 : vector<8x16xf32>
    %150 = vector.extract_strided_slice %135 {offsets = [0, 0], sizes = [16, 16], strides = [1, 1]} : vector<32x16xf32> to vector<16x16xf32>
    %151 = arith.truncf %149 : vector<8x16xf32> to vector<8x16xbf16>
    %152 = arith.truncf %150 : vector<16x16xf32> to vector<16x16xbf16>
    %cst_55 = arith.constant dense<0.000000e+00> : vector<8x16xf32>
    %153 = tpu.matmul %151, %152, %cst_55 {dimension_numbers = #tpu.dot_dimension_numbers<[1], [0], [0], [1], [0, 0, 1, 1], [], []>} : vector<8x16xbf16>, vector<16x16xbf16>, vector<8x16xf32> -> vector<8x16xf32>
    %154 = vector.extract_strided_slice %129 {offsets = [16, 0], sizes = [16, 16], strides = [1, 1]} : vector<32x16xf32> to vector<16x16xf32>
    %155 = arith.truncf %123 : vector<8x16xf32> to vector<8x16xbf16>
    %156 = arith.truncf %154 : vector<16x16xf32> to vector<16x16xbf16>
    %cst_56 = arith.constant dense<0.000000e+00> : vector<8x16xf32>
    %157 = tpu.matmul %155, %156, %cst_56 {dimension_numbers = #tpu.dot_dimension_numbers<[1], [1], [0], [0], [0, 0, 1, 0], [], []>} : vector<8x16xbf16>, vector<16x16xbf16>, vector<8x16xf32> -> vector<8x16xf32>
    %cst_57 = arith.constant dense<0xFF800000> : vector<8xf32>
    %158 = vector.multi_reduction <maximumf>, %157, %cst_57 [1] : vector<8x16xf32> to vector<8xf32>
    %159 = vector.shape_cast %158 : vector<8xf32> to vector<8x1xf32>
    %160 = vector.broadcast %159 : vector<8x1xf32> to vector<8x16xf32>
    %161 = arith.subf %157, %160 : vector<8x16xf32>
    %162 = math.exp %161 : vector<8x16xf32>
    %cst_58 = arith.constant dense<0.000000e+00> : vector<8xf32>
    %163 = vector.multi_reduction <add>, %162, %cst_58 [1] : vector<8x16xf32> to vector<8xf32>
    %164 = vector.shape_cast %163 : vector<8xf32> to vector<8x1xf32>
    %165 = tpu.reciprocal %164 {approx = true} : vector<8x1xf32> -> vector<8x1xf32>
    %166 = vector.broadcast %165 : vector<8x1xf32> to vector<8x16xf32>
    %167 = arith.mulf %162, %166 : vector<8x16xf32>
    %168 = vector.extract_strided_slice %135 {offsets = [16, 0], sizes = [16, 16], strides = [1, 1]} : vector<32x16xf32> to vector<16x16xf32>
    %169 = arith.truncf %167 : vector<8x16xf32> to vector<8x16xbf16>
    %170 = arith.truncf %168 : vector<16x16xf32> to vector<16x16xbf16>
    %cst_59 = arith.constant dense<0.000000e+00> : vector<8x16xf32>
    %171 = tpu.matmul %169, %170, %cst_59 {dimension_numbers = #tpu.dot_dimension_numbers<[1], [0], [0], [1], [0, 0, 1, 1], [], []>} : vector<8x16xbf16>, vector<16x16xbf16>, vector<8x16xf32> -> vector<8x16xf32>
    %172 = tpu.concatenate %153, %171 in 0 : vector<8x16xf32>, vector<8x16xf32> -> vector<16x16xf32>
    %c256 = arith.constant 256 : index
    %c0_60 = arith.constant 0 : index
    %173 = vector.load %arg1[%c256, %c0_60] : memref<1456x128xbf16, #tpu.memory_space<vmem>>, vector<16x32xbf16>
    %174 = arith.truncf %172 : vector<16x16xf32> to vector<16x16xbf16>
    %cst_61 = arith.constant dense<0.000000e+00> : vector<16x32xf32>
    %175 = tpu.matmul %174, %173, %cst_61 {dimension_numbers = #tpu.dot_dimension_numbers<[1], [0], [0], [1], [0, 0, 1, 1], [], []>} : vector<16x16xbf16>, vector<16x32xbf16>, vector<16x32xf32> -> vector<16x32xf32>
    %176 = arith.addf %117, %175 : vector<16x32xf32>
    %c88 = arith.constant 88 : index
    %c0_62 = arith.constant 0 : index
    %177 = vector.load %arg2[%c88, %c0_62] : memref<496x128xf32, #tpu.memory_space<vmem>>, vector<1x32xf32>
    %178 = vector.broadcast %177 : vector<1x32xf32> to vector<16x32xf32>
    %179 = arith.addf %176, %178 : vector<16x32xf32>
    %180 = arith.addf %11, %179 : vector<16x32xf32>
    %cst_63 = arith.constant dense<0.000000e+00> : vector<16xf32>
    %181 = vector.multi_reduction <add>, %180, %cst_63 [1] : vector<16x32xf32> to vector<16xf32>
    %182 = vector.shape_cast %181 : vector<16xf32> to vector<16x1xf32>
    %cst_64 = arith.constant 3.200000e+01 : f32
    %183 = vector.broadcast %cst_64 : f32 to vector<16x1xf32>
    %184 = arith.divf %182, %183 : vector<16x1xf32>
    %185 = vector.broadcast %184 : vector<16x1xf32> to vector<16x32xf32>
    %186 = arith.subf %180, %185 : vector<16x32xf32>
    %187 = arith.mulf %186, %186 : vector<16x32xf32>
    %cst_65 = arith.constant dense<0.000000e+00> : vector<16xf32>
    %188 = vector.multi_reduction <add>, %187, %cst_65 [1] : vector<16x32xf32> to vector<16xf32>
    %189 = vector.shape_cast %188 : vector<16xf32> to vector<16x1xf32>
    %cst_66 = arith.constant 3.200000e+01 : f32
    %190 = vector.broadcast %cst_66 : f32 to vector<16x1xf32>
    %191 = arith.divf %189, %190 : vector<16x1xf32>
    %192 = vector.broadcast %184 : vector<16x1xf32> to vector<16x32xf32>
    %193 = arith.subf %180, %192 : vector<16x32xf32>
    %cst_67 = arith.constant 9.99999974E-6 : f32
    %194 = vector.broadcast %cst_67 : f32 to vector<16x1xf32>
    %195 = arith.addf %191, %194 : vector<16x1xf32>
    %196 = math.rsqrt %195 : vector<16x1xf32>
    %197 = vector.broadcast %196 : vector<16x1xf32> to vector<16x32xf32>
    %198 = arith.mulf %193, %197 : vector<16x32xf32>
    %c128 = arith.constant 128 : index
    %c0_68 = arith.constant 0 : index
    %199 = vector.load %arg2[%c128, %c0_68] : memref<496x128xf32, #tpu.memory_space<vmem>>, vector<1x32xf32>
    %200 = vector.broadcast %199 : vector<1x32xf32> to vector<16x32xf32>
    %201 = arith.mulf %198, %200 : vector<16x32xf32>
    %c136 = arith.constant 136 : index
    %c0_69 = arith.constant 0 : index
    %202 = vector.load %arg2[%c136, %c0_69] : memref<496x128xf32, #tpu.memory_space<vmem>>, vector<1x32xf32>
    %203 = vector.broadcast %202 : vector<1x32xf32> to vector<16x32xf32>
    %204 = arith.addf %201, %203 : vector<16x32xf32>
    %c272 = arith.constant 272 : index
    %c0_70 = arith.constant 0 : index
    %205 = vector.load %arg1[%c272, %c0_70] : memref<1456x128xbf16, #tpu.memory_space<vmem>>, vector<32x128xbf16>
    %206 = arith.truncf %204 : vector<16x32xf32> to vector<16x32xbf16>
    %cst_71 = arith.constant dense<0.000000e+00> : vector<16x128xf32>
    %207 = tpu.matmul %206, %205, %cst_71 {dimension_numbers = #tpu.dot_dimension_numbers<[1], [0], [0], [1], [0, 0, 1, 1], [], []>} : vector<16x32xbf16>, vector<32x128xbf16>, vector<16x128xf32> -> vector<16x128xf32>
    %c144_72 = arith.constant 144 : index
    %c0_73 = arith.constant 0 : index
    %208 = vector.load %arg2[%c144_72, %c0_73] : memref<496x128xf32, #tpu.memory_space<vmem>>, vector<1x128xf32>
    %209 = vector.broadcast %208 : vector<1x128xf32> to vector<16x128xf32>
    %210 = arith.addf %207, %209 : vector<16x128xf32>
    %211 = arith.mulf %210, %210 : vector<16x128xf32>
    %212 = arith.mulf %210, %211 : vector<16x128xf32>
    %cst_74 = arith.constant 4.471500e-02 : f32
    %213 = vector.broadcast %cst_74 : f32 to vector<16x128xf32>
    %214 = arith.mulf %213, %212 : vector<16x128xf32>
    %215 = arith.addf %210, %214 : vector<16x128xf32>
    %cst_75 = arith.constant 0.797884583 : f32
    %216 = vector.broadcast %cst_75 : f32 to vector<16x128xf32>
    %217 = arith.mulf %216, %215 : vector<16x128xf32>
    %218 = math.tanh %217 : vector<16x128xf32>
    %cst_76 = arith.constant 1.000000e+00 : f32
    %219 = vector.broadcast %cst_76 : f32 to vector<16x128xf32>
    %220 = arith.addf %219, %218 : vector<16x128xf32>
    %cst_77 = arith.constant 5.000000e-01 : f32
    %221 = vector.broadcast %cst_77 : f32 to vector<16x128xf32>
    %222 = arith.mulf %221, %220 : vector<16x128xf32>
    %223 = arith.mulf %210, %222 : vector<16x128xf32>
    %c304 = arith.constant 304 : index
    %c0_78 = arith.constant 0 : index
    %224 = vector.load %arg1[%c304, %c0_78] : memref<1456x128xbf16, #tpu.memory_space<vmem>>, vector<128x32xbf16>
    %225 = arith.truncf %223 : vector<16x128xf32> to vector<16x128xbf16>
    %cst_79 = arith.constant dense<0.000000e+00> : vector<16x32xf32>
    %226 = tpu.matmul %225, %224, %cst_79 {dimension_numbers = #tpu.dot_dimension_numbers<[1], [0], [0], [1], [0, 0, 1, 1], [], []>} : vector<16x128xbf16>, vector<128x32xbf16>, vector<16x32xf32> -> vector<16x32xf32>
    %c152 = arith.constant 152 : index
    %c0_80 = arith.constant 0 : index
    %227 = vector.load %arg2[%c152, %c0_80] : memref<496x128xf32, #tpu.memory_space<vmem>>, vector<1x32xf32>
    %228 = vector.broadcast %227 : vector<1x32xf32> to vector<16x32xf32>
    %229 = arith.addf %226, %228 : vector<16x32xf32>
    %230 = arith.addf %180, %229 : vector<16x32xf32>
    %cst_81 = arith.constant dense<0.000000e+00> : vector<16xf32>
    %231 = vector.multi_reduction <add>, %230, %cst_81 [1] : vector<16x32xf32> to vector<16xf32>
    %232 = vector.shape_cast %231 : vector<16xf32> to vector<16x1xf32>
    %cst_82 = arith.constant 3.200000e+01 : f32
    %233 = vector.broadcast %cst_82 : f32 to vector<16x1xf32>
    %234 = arith.divf %232, %233 : vector<16x1xf32>
    %235 = vector.broadcast %234 : vector<16x1xf32> to vector<16x32xf32>
    %236 = arith.subf %230, %235 : vector<16x32xf32>
    %237 = arith.mulf %236, %236 : vector<16x32xf32>
    %cst_83 = arith.constant dense<0.000000e+00> : vector<16xf32>
    %238 = vector.multi_reduction <add>, %237, %cst_83 [1] : vector<16x32xf32> to vector<16xf32>
    %239 = vector.shape_cast %238 : vector<16xf32> to vector<16x1xf32>
    %cst_84 = arith.constant 3.200000e+01 : f32
    %240 = vector.broadcast %cst_84 : f32 to vector<16x1xf32>
    %241 = arith.divf %239, %240 : vector<16x1xf32>
    %242 = vector.broadcast %234 : vector<16x1xf32> to vector<16x32xf32>
    %243 = arith.subf %230, %242 : vector<16x32xf32>
    %cst_85 = arith.constant 9.99999974E-6 : f32
    %244 = vector.broadcast %cst_85 : f32 to vector<16x1xf32>
    %245 = arith.addf %241, %244 : vector<16x1xf32>
    %246 = math.rsqrt %245 : vector<16x1xf32>
    %247 = vector.broadcast %246 : vector<16x1xf32> to vector<16x32xf32>
    %248 = arith.mulf %243, %247 : vector<16x32xf32>
    %c216 = arith.constant 216 : index
    %c0_86 = arith.constant 0 : index
    %249 = vector.load %arg2[%c216, %c0_86] : memref<496x128xf32, #tpu.memory_space<vmem>>, vector<1x32xf32>
    %250 = vector.broadcast %249 : vector<1x32xf32> to vector<16x32xf32>
    %251 = arith.mulf %248, %250 : vector<16x32xf32>
    %c224_87 = arith.constant 224 : index
    %c0_88 = arith.constant 0 : index
    %252 = vector.load %arg2[%c224_87, %c0_88] : memref<496x128xf32, #tpu.memory_space<vmem>>, vector<1x32xf32>
    %253 = vector.broadcast %252 : vector<1x32xf32> to vector<16x32xf32>
    %254 = arith.addf %251, %253 : vector<16x32xf32>
    %cst_89 = arith.constant dense<0.000000e+00> : vector<16xf32>
    %255 = vector.multi_reduction <add>, %230, %cst_89 [1] : vector<16x32xf32> to vector<16xf32>
    %256 = vector.shape_cast %255 : vector<16xf32> to vector<16x1xf32>
    %cst_90 = arith.constant 3.200000e+01 : f32
    %257 = vector.broadcast %cst_90 : f32 to vector<16x1xf32>
    %258 = arith.divf %256, %257 : vector<16x1xf32>
    %259 = vector.broadcast %258 : vector<16x1xf32> to vector<16x32xf32>
    %260 = arith.subf %230, %259 : vector<16x32xf32>
    %261 = arith.mulf %260, %260 : vector<16x32xf32>
    %cst_91 = arith.constant dense<0.000000e+00> : vector<16xf32>
    %262 = vector.multi_reduction <add>, %261, %cst_91 [1] : vector<16x32xf32> to vector<16xf32>
    %263 = vector.shape_cast %262 : vector<16xf32> to vector<16x1xf32>
    %cst_92 = arith.constant 3.200000e+01 : f32
    %264 = vector.broadcast %cst_92 : f32 to vector<16x1xf32>
    %265 = arith.divf %263, %264 : vector<16x1xf32>
    %266 = vector.broadcast %258 : vector<16x1xf32> to vector<16x32xf32>
    %267 = arith.subf %230, %266 : vector<16x32xf32>
    %cst_93 = arith.constant 9.99999974E-6 : f32
    %268 = vector.broadcast %cst_93 : f32 to vector<16x1xf32>
    %269 = arith.addf %265, %268 : vector<16x1xf32>
    %270 = math.rsqrt %269 : vector<16x1xf32>
    %271 = vector.broadcast %270 : vector<16x1xf32> to vector<16x32xf32>
    %272 = arith.mulf %267, %271 : vector<16x32xf32>
    %c232 = arith.constant 232 : index
    %c0_94 = arith.constant 0 : index
    %273 = vector.load %arg2[%c232, %c0_94] : memref<496x128xf32, #tpu.memory_space<vmem>>, vector<1x32xf32>
    %274 = vector.broadcast %273 : vector<1x32xf32> to vector<16x32xf32>
    %275 = arith.mulf %272, %274 : vector<16x32xf32>
    %c240 = arith.constant 240 : index
    %c0_95 = arith.constant 0 : index
    %276 = vector.load %arg2[%c240, %c0_95] : memref<496x128xf32, #tpu.memory_space<vmem>>, vector<1x32xf32>
    %277 = vector.broadcast %276 : vector<1x32xf32> to vector<16x32xf32>
    %278 = arith.addf %275, %277 : vector<16x32xf32>
    %c432 = arith.constant 432 : index
    %c0_96 = arith.constant 0 : index
    %279 = vector.load %arg1[%c432, %c0_96] : memref<1456x128xbf16, #tpu.memory_space<vmem>>, vector<32x16xbf16>
    %280 = arith.truncf %254 : vector<16x32xf32> to vector<16x32xbf16>
    %cst_97 = arith.constant dense<0.000000e+00> : vector<16x16xf32>
    %281 = tpu.matmul %280, %279, %cst_97 {dimension_numbers = #tpu.dot_dimension_numbers<[1], [0], [0], [1], [0, 0, 1, 1], [], []>} : vector<16x32xbf16>, vector<32x16xbf16>, vector<16x16xf32> -> vector<16x16xf32>
    %c160_98 = arith.constant 160 : index
    %c0_99 = arith.constant 0 : index
    %282 = vector.load %arg2[%c160_98, %c0_99] : memref<496x128xf32, #tpu.memory_space<vmem>>, vector<1x16xf32>
    %283 = vector.broadcast %282 : vector<1x16xf32> to vector<16x16xf32>
    %284 = arith.addf %281, %283 : vector<16x16xf32>
    %c464 = arith.constant 464 : index
    %c0_100 = arith.constant 0 : index
    %285 = vector.load %arg1[%c464, %c0_100] : memref<1456x128xbf16, #tpu.memory_space<vmem>>, vector<32x16xbf16>
    %286 = arith.truncf %278 : vector<16x32xf32> to vector<16x32xbf16>
    %cst_101 = arith.constant dense<0.000000e+00> : vector<16x16xf32>
    %287 = tpu.matmul %286, %285, %cst_101 {dimension_numbers = #tpu.dot_dimension_numbers<[1], [0], [0], [1], [0, 0, 1, 1], [], []>} : vector<16x32xbf16>, vector<32x16xbf16>, vector<16x16xf32> -> vector<16x16xf32>
    %c168 = arith.constant 168 : index
    %c0_102 = arith.constant 0 : index
    %288 = vector.load %arg2[%c168, %c0_102] : memref<496x128xf32, #tpu.memory_space<vmem>>, vector<1x16xf32>
    %289 = vector.broadcast %288 : vector<1x16xf32> to vector<16x16xf32>
    %290 = arith.addf %287, %289 : vector<16x16xf32>
    %c496 = arith.constant 496 : index
    %c0_103 = arith.constant 0 : index
    %291 = vector.load %arg1[%c496, %c0_103] : memref<1456x128xbf16, #tpu.memory_space<vmem>>, vector<32x16xbf16>
    %292 = arith.truncf %278 : vector<16x32xf32> to vector<16x32xbf16>
    %cst_104 = arith.constant dense<0.000000e+00> : vector<16x16xf32>
    %293 = tpu.matmul %292, %291, %cst_104 {dimension_numbers = #tpu.dot_dimension_numbers<[1], [0], [0], [1], [0, 0, 1, 1], [], []>} : vector<16x32xbf16>, vector<32x16xbf16>, vector<16x16xf32> -> vector<16x16xf32>
    %c176 = arith.constant 176 : index
    %c0_105 = arith.constant 0 : index
    %294 = vector.load %arg2[%c176, %c0_105] : memref<496x128xf32, #tpu.memory_space<vmem>>, vector<1x16xf32>
    %295 = vector.broadcast %294 : vector<1x16xf32> to vector<16x16xf32>
    %296 = arith.addf %293, %295 : vector<16x16xf32>
    %297 = vector.extract_strided_slice %284 {offsets = [0, 0], sizes = [8, 16], strides = [1, 1]} : vector<16x16xf32> to vector<8x16xf32>
    %298 = vector.extract_strided_slice %290 {offsets = [0, 0], sizes = [8, 16], strides = [1, 1]} : vector<16x16xf32> to vector<8x16xf32>
    %299 = arith.truncf %297 : vector<8x16xf32> to vector<8x16xbf16>
    %300 = arith.truncf %298 : vector<8x16xf32> to vector<8x16xbf16>
    %cst_106 = arith.constant dense<0.000000e+00> : vector<8x8xf32>
    %301 = tpu.matmul %299, %300, %cst_106 {dimension_numbers = #tpu.dot_dimension_numbers<[1], [1], [0], [0], [0, 0, 1, 0], [], []>} : vector<8x16xbf16>, vector<8x16xbf16>, vector<8x8xf32> -> vector<8x8xf32>
    %cst_107 = arith.constant dense<0xFF800000> : vector<8xf32>
    %302 = vector.multi_reduction <maximumf>, %301, %cst_107 [1] : vector<8x8xf32> to vector<8xf32>
    %303 = vector.shape_cast %302 : vector<8xf32> to vector<8x1xf32>
    %304 = vector.broadcast %303 : vector<8x1xf32> to vector<8x8xf32>
    %305 = arith.subf %301, %304 : vector<8x8xf32>
    %306 = math.exp %305 : vector<8x8xf32>
    %cst_108 = arith.constant dense<0.000000e+00> : vector<8xf32>
    %307 = vector.multi_reduction <add>, %306, %cst_108 [1] : vector<8x8xf32> to vector<8xf32>
    %308 = vector.shape_cast %307 : vector<8xf32> to vector<8x1xf32>
    %309 = tpu.reciprocal %308 {approx = true} : vector<8x1xf32> -> vector<8x1xf32>
    %310 = vector.broadcast %309 : vector<8x1xf32> to vector<8x8xf32>
    %311 = arith.mulf %306, %310 : vector<8x8xf32>
    %312 = vector.extract_strided_slice %296 {offsets = [0, 0], sizes = [8, 16], strides = [1, 1]} : vector<16x16xf32> to vector<8x16xf32>
    %313 = arith.truncf %311 : vector<8x8xf32> to vector<8x8xbf16>
    %314 = arith.truncf %312 : vector<8x16xf32> to vector<8x16xbf16>
    %cst_109 = arith.constant dense<0.000000e+00> : vector<8x16xf32>
    %315 = tpu.matmul %313, %314, %cst_109 {dimension_numbers = #tpu.dot_dimension_numbers<[1], [0], [0], [1], [0, 0, 1, 1], [], []>} : vector<8x8xbf16>, vector<8x16xbf16>, vector<8x16xf32> -> vector<8x16xf32>
    %316 = vector.extract_strided_slice %284 {offsets = [8, 0], sizes = [8, 16], strides = [1, 1]} : vector<16x16xf32> to vector<8x16xf32>
    %317 = vector.extract_strided_slice %290 {offsets = [8, 0], sizes = [8, 16], strides = [1, 1]} : vector<16x16xf32> to vector<8x16xf32>
    %318 = arith.truncf %316 : vector<8x16xf32> to vector<8x16xbf16>
    %319 = arith.truncf %317 : vector<8x16xf32> to vector<8x16xbf16>
    %cst_110 = arith.constant dense<0.000000e+00> : vector<8x8xf32>
    %320 = tpu.matmul %318, %319, %cst_110 {dimension_numbers = #tpu.dot_dimension_numbers<[1], [1], [0], [0], [0, 0, 1, 0], [], []>} : vector<8x16xbf16>, vector<8x16xbf16>, vector<8x8xf32> -> vector<8x8xf32>
    %cst_111 = arith.constant dense<0xFF800000> : vector<8xf32>
    %321 = vector.multi_reduction <maximumf>, %320, %cst_111 [1] : vector<8x8xf32> to vector<8xf32>
    %322 = vector.shape_cast %321 : vector<8xf32> to vector<8x1xf32>
    %323 = vector.broadcast %322 : vector<8x1xf32> to vector<8x8xf32>
    %324 = arith.subf %320, %323 : vector<8x8xf32>
    %325 = math.exp %324 : vector<8x8xf32>
    %cst_112 = arith.constant dense<0.000000e+00> : vector<8xf32>
    %326 = vector.multi_reduction <add>, %325, %cst_112 [1] : vector<8x8xf32> to vector<8xf32>
    %327 = vector.shape_cast %326 : vector<8xf32> to vector<8x1xf32>
    %328 = tpu.reciprocal %327 {approx = true} : vector<8x1xf32> -> vector<8x1xf32>
    %329 = vector.broadcast %328 : vector<8x1xf32> to vector<8x8xf32>
    %330 = arith.mulf %325, %329 : vector<8x8xf32>
    %331 = vector.extract_strided_slice %296 {offsets = [8, 0], sizes = [8, 16], strides = [1, 1]} : vector<16x16xf32> to vector<8x16xf32>
    %332 = arith.truncf %330 : vector<8x8xf32> to vector<8x8xbf16>
    %333 = arith.truncf %331 : vector<8x16xf32> to vector<8x16xbf16>
    %cst_113 = arith.constant dense<0.000000e+00> : vector<8x16xf32>
    %334 = tpu.matmul %332, %333, %cst_113 {dimension_numbers = #tpu.dot_dimension_numbers<[1], [0], [0], [1], [0, 0, 1, 1], [], []>} : vector<8x8xbf16>, vector<8x16xbf16>, vector<8x16xf32> -> vector<8x16xf32>
    %335 = tpu.concatenate %315, %334 in 0 : vector<8x16xf32>, vector<8x16xf32> -> vector<16x16xf32>
    %c528 = arith.constant 528 : index
    %c0_114 = arith.constant 0 : index
    %336 = vector.load %arg1[%c528, %c0_114] : memref<1456x128xbf16, #tpu.memory_space<vmem>>, vector<16x32xbf16>
    %337 = arith.truncf %335 : vector<16x16xf32> to vector<16x16xbf16>
    %cst_115 = arith.constant dense<0.000000e+00> : vector<16x32xf32>
    %338 = tpu.matmul %337, %336, %cst_115 {dimension_numbers = #tpu.dot_dimension_numbers<[1], [0], [0], [1], [0, 0, 1, 1], [], []>} : vector<16x16xbf16>, vector<16x32xbf16>, vector<16x32xf32> -> vector<16x32xf32>
    %c544 = arith.constant 544 : index
    %c0_116 = arith.constant 0 : index
    %339 = vector.load %arg1[%c544, %c0_116] : memref<1456x128xbf16, #tpu.memory_space<vmem>>, vector<32x16xbf16>
    %340 = arith.truncf %254 : vector<16x32xf32> to vector<16x32xbf16>
    %cst_117 = arith.constant dense<0.000000e+00> : vector<16x16xf32>
    %341 = tpu.matmul %340, %339, %cst_117 {dimension_numbers = #tpu.dot_dimension_numbers<[1], [0], [0], [1], [0, 0, 1, 1], [], []>} : vector<16x32xbf16>, vector<32x16xbf16>, vector<16x16xf32> -> vector<16x16xf32>
    %c184 = arith.constant 184 : index
    %c0_118 = arith.constant 0 : index
    %342 = vector.load %arg2[%c184, %c0_118] : memref<496x128xf32, #tpu.memory_space<vmem>>, vector<1x16xf32>
    %343 = vector.broadcast %342 : vector<1x16xf32> to vector<16x16xf32>
    %344 = arith.addf %341, %343 : vector<16x16xf32>
    %c576 = arith.constant 576 : index
    %c0_119 = arith.constant 0 : index
    %345 = vector.load %arg1[%c576, %c0_119] : memref<1456x128xbf16, #tpu.memory_space<vmem>>, vector<32x16xbf16>
    %346 = arith.truncf %278 : vector<16x32xf32> to vector<16x32xbf16>
    %cst_120 = arith.constant dense<0.000000e+00> : vector<16x16xf32>
    %347 = tpu.matmul %346, %345, %cst_120 {dimension_numbers = #tpu.dot_dimension_numbers<[1], [0], [0], [1], [0, 0, 1, 1], [], []>} : vector<16x32xbf16>, vector<32x16xbf16>, vector<16x16xf32> -> vector<16x16xf32>
    %c192_121 = arith.constant 192 : index
    %c0_122 = arith.constant 0 : index
    %348 = vector.load %arg2[%c192_121, %c0_122] : memref<496x128xf32, #tpu.memory_space<vmem>>, vector<1x16xf32>
    %349 = vector.broadcast %348 : vector<1x16xf32> to vector<16x16xf32>
    %350 = arith.addf %347, %349 : vector<16x16xf32>
    %c608 = arith.constant 608 : index
    %c0_123 = arith.constant 0 : index
    %351 = vector.load %arg1[%c608, %c0_123] : memref<1456x128xbf16, #tpu.memory_space<vmem>>, vector<32x16xbf16>
    %352 = arith.truncf %278 : vector<16x32xf32> to vector<16x32xbf16>
    %cst_124 = arith.constant dense<0.000000e+00> : vector<16x16xf32>
    %353 = tpu.matmul %352, %351, %cst_124 {dimension_numbers = #tpu.dot_dimension_numbers<[1], [0], [0], [1], [0, 0, 1, 1], [], []>} : vector<16x32xbf16>, vector<32x16xbf16>, vector<16x16xf32> -> vector<16x16xf32>
    %c200 = arith.constant 200 : index
    %c0_125 = arith.constant 0 : index
    %354 = vector.load %arg2[%c200, %c0_125] : memref<496x128xf32, #tpu.memory_space<vmem>>, vector<1x16xf32>
    %355 = vector.broadcast %354 : vector<1x16xf32> to vector<16x16xf32>
    %356 = arith.addf %353, %355 : vector<16x16xf32>
    %357 = vector.extract_strided_slice %344 {offsets = [0, 0], sizes = [8, 16], strides = [1, 1]} : vector<16x16xf32> to vector<8x16xf32>
    %358 = vector.extract_strided_slice %350 {offsets = [0, 0], sizes = [8, 16], strides = [1, 1]} : vector<16x16xf32> to vector<8x16xf32>
    %359 = arith.truncf %357 : vector<8x16xf32> to vector<8x16xbf16>
    %360 = arith.truncf %358 : vector<8x16xf32> to vector<8x16xbf16>
    %cst_126 = arith.constant dense<0.000000e+00> : vector<8x8xf32>
    %361 = tpu.matmul %359, %360, %cst_126 {dimension_numbers = #tpu.dot_dimension_numbers<[1], [1], [0], [0], [0, 0, 1, 0], [], []>} : vector<8x16xbf16>, vector<8x16xbf16>, vector<8x8xf32> -> vector<8x8xf32>
    %cst_127 = arith.constant dense<0xFF800000> : vector<8xf32>
    %362 = vector.multi_reduction <maximumf>, %361, %cst_127 [1] : vector<8x8xf32> to vector<8xf32>
    %363 = vector.shape_cast %362 : vector<8xf32> to vector<8x1xf32>
    %364 = vector.broadcast %363 : vector<8x1xf32> to vector<8x8xf32>
    %365 = arith.subf %361, %364 : vector<8x8xf32>
    %366 = math.exp %365 : vector<8x8xf32>
    %cst_128 = arith.constant dense<0.000000e+00> : vector<8xf32>
    %367 = vector.multi_reduction <add>, %366, %cst_128 [1] : vector<8x8xf32> to vector<8xf32>
    %368 = vector.shape_cast %367 : vector<8xf32> to vector<8x1xf32>
    %369 = tpu.reciprocal %368 {approx = true} : vector<8x1xf32> -> vector<8x1xf32>
    %370 = vector.broadcast %369 : vector<8x1xf32> to vector<8x8xf32>
    %371 = arith.mulf %366, %370 : vector<8x8xf32>
    %372 = vector.extract_strided_slice %356 {offsets = [0, 0], sizes = [8, 16], strides = [1, 1]} : vector<16x16xf32> to vector<8x16xf32>
    %373 = arith.truncf %371 : vector<8x8xf32> to vector<8x8xbf16>
    %374 = arith.truncf %372 : vector<8x16xf32> to vector<8x16xbf16>
    %cst_129 = arith.constant dense<0.000000e+00> : vector<8x16xf32>
    %375 = tpu.matmul %373, %374, %cst_129 {dimension_numbers = #tpu.dot_dimension_numbers<[1], [0], [0], [1], [0, 0, 1, 1], [], []>} : vector<8x8xbf16>, vector<8x16xbf16>, vector<8x16xf32> -> vector<8x16xf32>
    %376 = vector.extract_strided_slice %344 {offsets = [8, 0], sizes = [8, 16], strides = [1, 1]} : vector<16x16xf32> to vector<8x16xf32>
    %377 = vector.extract_strided_slice %350 {offsets = [8, 0], sizes = [8, 16], strides = [1, 1]} : vector<16x16xf32> to vector<8x16xf32>
    %378 = arith.truncf %376 : vector<8x16xf32> to vector<8x16xbf16>
    %379 = arith.truncf %377 : vector<8x16xf32> to vector<8x16xbf16>
    %cst_130 = arith.constant dense<0.000000e+00> : vector<8x8xf32>
    %380 = tpu.matmul %378, %379, %cst_130 {dimension_numbers = #tpu.dot_dimension_numbers<[1], [1], [0], [0], [0, 0, 1, 0], [], []>} : vector<8x16xbf16>, vector<8x16xbf16>, vector<8x8xf32> -> vector<8x8xf32>
    %cst_131 = arith.constant dense<0xFF800000> : vector<8xf32>
    %381 = vector.multi_reduction <maximumf>, %380, %cst_131 [1] : vector<8x8xf32> to vector<8xf32>
    %382 = vector.shape_cast %381 : vector<8xf32> to vector<8x1xf32>
    %383 = vector.broadcast %382 : vector<8x1xf32> to vector<8x8xf32>
    %384 = arith.subf %380, %383 : vector<8x8xf32>
    %385 = math.exp %384 : vector<8x8xf32>
    %cst_132 = arith.constant dense<0.000000e+00> : vector<8xf32>
    %386 = vector.multi_reduction <add>, %385, %cst_132 [1] : vector<8x8xf32> to vector<8xf32>
    %387 = vector.shape_cast %386 : vector<8xf32> to vector<8x1xf32>
    %388 = tpu.reciprocal %387 {approx = true} : vector<8x1xf32> -> vector<8x1xf32>
    %389 = vector.broadcast %388 : vector<8x1xf32> to vector<8x8xf32>
    %390 = arith.mulf %385, %389 : vector<8x8xf32>
    %391 = vector.extract_strided_slice %356 {offsets = [8, 0], sizes = [8, 16], strides = [1, 1]} : vector<16x16xf32> to vector<8x16xf32>
    %392 = arith.truncf %390 : vector<8x8xf32> to vector<8x8xbf16>
    %393 = arith.truncf %391 : vector<8x16xf32> to vector<8x16xbf16>
    %cst_133 = arith.constant dense<0.000000e+00> : vector<8x16xf32>
    %394 = tpu.matmul %392, %393, %cst_133 {dimension_numbers = #tpu.dot_dimension_numbers<[1], [0], [0], [1], [0, 0, 1, 1], [], []>} : vector<8x8xbf16>, vector<8x16xbf16>, vector<8x16xf32> -> vector<8x16xf32>
    %395 = tpu.concatenate %375, %394 in 0 : vector<8x16xf32>, vector<8x16xf32> -> vector<16x16xf32>
    %c640 = arith.constant 640 : index
    %c0_134 = arith.constant 0 : index
    %396 = vector.load %arg1[%c640, %c0_134] : memref<1456x128xbf16, #tpu.memory_space<vmem>>, vector<16x32xbf16>
    %397 = arith.truncf %395 : vector<16x16xf32> to vector<16x16xbf16>
    %cst_135 = arith.constant dense<0.000000e+00> : vector<16x32xf32>
    %398 = tpu.matmul %397, %396, %cst_135 {dimension_numbers = #tpu.dot_dimension_numbers<[1], [0], [0], [1], [0, 0, 1, 1], [], []>} : vector<16x16xbf16>, vector<16x32xbf16>, vector<16x32xf32> -> vector<16x32xf32>
    %399 = arith.addf %338, %398 : vector<16x32xf32>
    %c208 = arith.constant 208 : index
    %c0_136 = arith.constant 0 : index
    %400 = vector.load %arg2[%c208, %c0_136] : memref<496x128xf32, #tpu.memory_space<vmem>>, vector<1x32xf32>
    %401 = vector.broadcast %400 : vector<1x32xf32> to vector<16x32xf32>
    %402 = arith.addf %399, %401 : vector<16x32xf32>
    %403 = arith.addf %230, %402 : vector<16x32xf32>
    %cst_137 = arith.constant dense<0.000000e+00> : vector<16xf32>
    %404 = vector.multi_reduction <add>, %403, %cst_137 [1] : vector<16x32xf32> to vector<16xf32>
    %405 = vector.shape_cast %404 : vector<16xf32> to vector<16x1xf32>
    %cst_138 = arith.constant 3.200000e+01 : f32
    %406 = vector.broadcast %cst_138 : f32 to vector<16x1xf32>
    %407 = arith.divf %405, %406 : vector<16x1xf32>
    %408 = vector.broadcast %407 : vector<16x1xf32> to vector<16x32xf32>
    %409 = arith.subf %403, %408 : vector<16x32xf32>
    %410 = arith.mulf %409, %409 : vector<16x32xf32>
    %cst_139 = arith.constant dense<0.000000e+00> : vector<16xf32>
    %411 = vector.multi_reduction <add>, %410, %cst_139 [1] : vector<16x32xf32> to vector<16xf32>
    %412 = vector.shape_cast %411 : vector<16xf32> to vector<16x1xf32>
    %cst_140 = arith.constant 3.200000e+01 : f32
    %413 = vector.broadcast %cst_140 : f32 to vector<16x1xf32>
    %414 = arith.divf %412, %413 : vector<16x1xf32>
    %415 = vector.broadcast %407 : vector<16x1xf32> to vector<16x32xf32>
    %416 = arith.subf %403, %415 : vector<16x32xf32>
    %cst_141 = arith.constant 9.99999974E-6 : f32
    %417 = vector.broadcast %cst_141 : f32 to vector<16x1xf32>
    %418 = arith.addf %414, %417 : vector<16x1xf32>
    %419 = math.rsqrt %418 : vector<16x1xf32>
    %420 = vector.broadcast %419 : vector<16x1xf32> to vector<16x32xf32>
    %421 = arith.mulf %416, %420 : vector<16x32xf32>
    %c248 = arith.constant 248 : index
    %c0_142 = arith.constant 0 : index
    %422 = vector.load %arg2[%c248, %c0_142] : memref<496x128xf32, #tpu.memory_space<vmem>>, vector<1x32xf32>
    %423 = vector.broadcast %422 : vector<1x32xf32> to vector<16x32xf32>
    %424 = arith.mulf %421, %423 : vector<16x32xf32>
    %c256_143 = arith.constant 256 : index
    %c0_144 = arith.constant 0 : index
    %425 = vector.load %arg2[%c256_143, %c0_144] : memref<496x128xf32, #tpu.memory_space<vmem>>, vector<1x32xf32>
    %426 = vector.broadcast %425 : vector<1x32xf32> to vector<16x32xf32>
    %427 = arith.addf %424, %426 : vector<16x32xf32>
    %c656 = arith.constant 656 : index
    %c0_145 = arith.constant 0 : index
    %428 = vector.load %arg1[%c656, %c0_145] : memref<1456x128xbf16, #tpu.memory_space<vmem>>, vector<32x128xbf16>
    %429 = arith.truncf %427 : vector<16x32xf32> to vector<16x32xbf16>
    %cst_146 = arith.constant dense<0.000000e+00> : vector<16x128xf32>
    %430 = tpu.matmul %429, %428, %cst_146 {dimension_numbers = #tpu.dot_dimension_numbers<[1], [0], [0], [1], [0, 0, 1, 1], [], []>} : vector<16x32xbf16>, vector<32x128xbf16>, vector<16x128xf32> -> vector<16x128xf32>
    %c264 = arith.constant 264 : index
    %c0_147 = arith.constant 0 : index
    %431 = vector.load %arg2[%c264, %c0_147] : memref<496x128xf32, #tpu.memory_space<vmem>>, vector<1x128xf32>
    %432 = vector.broadcast %431 : vector<1x128xf32> to vector<16x128xf32>
    %433 = arith.addf %430, %432 : vector<16x128xf32>
    %434 = arith.mulf %433, %433 : vector<16x128xf32>
    %435 = arith.mulf %433, %434 : vector<16x128xf32>
    %cst_148 = arith.constant 4.471500e-02 : f32
    %436 = vector.broadcast %cst_148 : f32 to vector<16x128xf32>
    %437 = arith.mulf %436, %435 : vector<16x128xf32>
    %438 = arith.addf %433, %437 : vector<16x128xf32>
    %cst_149 = arith.constant 0.797884583 : f32
    %439 = vector.broadcast %cst_149 : f32 to vector<16x128xf32>
    %440 = arith.mulf %439, %438 : vector<16x128xf32>
    %441 = math.tanh %440 : vector<16x128xf32>
    %cst_150 = arith.constant 1.000000e+00 : f32
    %442 = vector.broadcast %cst_150 : f32 to vector<16x128xf32>
    %443 = arith.addf %442, %441 : vector<16x128xf32>
    %cst_151 = arith.constant 5.000000e-01 : f32
    %444 = vector.broadcast %cst_151 : f32 to vector<16x128xf32>
    %445 = arith.mulf %444, %443 : vector<16x128xf32>
    %446 = arith.mulf %433, %445 : vector<16x128xf32>
    %c688 = arith.constant 688 : index
    %c0_152 = arith.constant 0 : index
    %447 = vector.load %arg1[%c688, %c0_152] : memref<1456x128xbf16, #tpu.memory_space<vmem>>, vector<128x32xbf16>
    %448 = arith.truncf %446 : vector<16x128xf32> to vector<16x128xbf16>
    %cst_153 = arith.constant dense<0.000000e+00> : vector<16x32xf32>
    %449 = tpu.matmul %448, %447, %cst_153 {dimension_numbers = #tpu.dot_dimension_numbers<[1], [0], [0], [1], [0, 0, 1, 1], [], []>} : vector<16x128xbf16>, vector<128x32xbf16>, vector<16x32xf32> -> vector<16x32xf32>
    %c272_154 = arith.constant 272 : index
    %c0_155 = arith.constant 0 : index
    %450 = vector.load %arg2[%c272_154, %c0_155] : memref<496x128xf32, #tpu.memory_space<vmem>>, vector<1x32xf32>
    %451 = vector.broadcast %450 : vector<1x32xf32> to vector<16x32xf32>
    %452 = arith.addf %449, %451 : vector<16x32xf32>
    %453 = arith.addf %403, %452 : vector<16x32xf32>
    %cst_156 = arith.constant dense<0.000000e+00> : vector<16xf32>
    %454 = vector.multi_reduction <add>, %453, %cst_156 [1] : vector<16x32xf32> to vector<16xf32>
    %455 = vector.shape_cast %454 : vector<16xf32> to vector<16x1xf32>
    %cst_157 = arith.constant 3.200000e+01 : f32
    %456 = vector.broadcast %cst_157 : f32 to vector<16x1xf32>
    %457 = arith.divf %455, %456 : vector<16x1xf32>
    %458 = vector.broadcast %457 : vector<16x1xf32> to vector<16x32xf32>
    %459 = arith.subf %453, %458 : vector<16x32xf32>
    %460 = arith.mulf %459, %459 : vector<16x32xf32>
    %cst_158 = arith.constant dense<0.000000e+00> : vector<16xf32>
    %461 = vector.multi_reduction <add>, %460, %cst_158 [1] : vector<16x32xf32> to vector<16xf32>
    %462 = vector.shape_cast %461 : vector<16xf32> to vector<16x1xf32>
    %cst_159 = arith.constant 3.200000e+01 : f32
    %463 = vector.broadcast %cst_159 : f32 to vector<16x1xf32>
    %464 = arith.divf %462, %463 : vector<16x1xf32>
    %465 = vector.broadcast %457 : vector<16x1xf32> to vector<16x32xf32>
    %466 = arith.subf %453, %465 : vector<16x32xf32>
    %cst_160 = arith.constant 9.99999974E-6 : f32
    %467 = vector.broadcast %cst_160 : f32 to vector<16x1xf32>
    %468 = arith.addf %464, %467 : vector<16x1xf32>
    %469 = math.rsqrt %468 : vector<16x1xf32>
    %470 = vector.broadcast %469 : vector<16x1xf32> to vector<16x32xf32>
    %471 = arith.mulf %466, %470 : vector<16x32xf32>
    %c336 = arith.constant 336 : index
    %c0_161 = arith.constant 0 : index
    %472 = vector.load %arg2[%c336, %c0_161] : memref<496x128xf32, #tpu.memory_space<vmem>>, vector<1x32xf32>
    %473 = vector.broadcast %472 : vector<1x32xf32> to vector<16x32xf32>
    %474 = arith.mulf %471, %473 : vector<16x32xf32>
    %c344 = arith.constant 344 : index
    %c0_162 = arith.constant 0 : index
    %475 = vector.load %arg2[%c344, %c0_162] : memref<496x128xf32, #tpu.memory_space<vmem>>, vector<1x32xf32>
    %476 = vector.broadcast %475 : vector<1x32xf32> to vector<16x32xf32>
    %477 = arith.addf %474, %476 : vector<16x32xf32>
    %cst_163 = arith.constant dense<0.000000e+00> : vector<16xf32>
    %478 = vector.multi_reduction <add>, %453, %cst_163 [1] : vector<16x32xf32> to vector<16xf32>
    %479 = vector.shape_cast %478 : vector<16xf32> to vector<16x1xf32>
    %cst_164 = arith.constant 3.200000e+01 : f32
    %480 = vector.broadcast %cst_164 : f32 to vector<16x1xf32>
    %481 = arith.divf %479, %480 : vector<16x1xf32>
    %482 = vector.broadcast %481 : vector<16x1xf32> to vector<16x32xf32>
    %483 = arith.subf %453, %482 : vector<16x32xf32>
    %484 = arith.mulf %483, %483 : vector<16x32xf32>
    %cst_165 = arith.constant dense<0.000000e+00> : vector<16xf32>
    %485 = vector.multi_reduction <add>, %484, %cst_165 [1] : vector<16x32xf32> to vector<16xf32>
    %486 = vector.shape_cast %485 : vector<16xf32> to vector<16x1xf32>
    %cst_166 = arith.constant 3.200000e+01 : f32
    %487 = vector.broadcast %cst_166 : f32 to vector<16x1xf32>
    %488 = arith.divf %486, %487 : vector<16x1xf32>
    %489 = vector.broadcast %481 : vector<16x1xf32> to vector<16x32xf32>
    %490 = arith.subf %453, %489 : vector<16x32xf32>
    %cst_167 = arith.constant 9.99999974E-6 : f32
    %491 = vector.broadcast %cst_167 : f32 to vector<16x1xf32>
    %492 = arith.addf %488, %491 : vector<16x1xf32>
    %493 = math.rsqrt %492 : vector<16x1xf32>
    %494 = vector.broadcast %493 : vector<16x1xf32> to vector<16x32xf32>
    %495 = arith.mulf %490, %494 : vector<16x32xf32>
    %c352 = arith.constant 352 : index
    %c0_168 = arith.constant 0 : index
    %496 = vector.load %arg2[%c352, %c0_168] : memref<496x128xf32, #tpu.memory_space<vmem>>, vector<1x32xf32>
    %497 = vector.broadcast %496 : vector<1x32xf32> to vector<16x32xf32>
    %498 = arith.mulf %495, %497 : vector<16x32xf32>
    %c360 = arith.constant 360 : index
    %c0_169 = arith.constant 0 : index
    %499 = vector.load %arg2[%c360, %c0_169] : memref<496x128xf32, #tpu.memory_space<vmem>>, vector<1x32xf32>
    %500 = vector.broadcast %499 : vector<1x32xf32> to vector<16x32xf32>
    %501 = arith.addf %498, %500 : vector<16x32xf32>
    %c816 = arith.constant 816 : index
    %c0_170 = arith.constant 0 : index
    %502 = vector.load %arg1[%c816, %c0_170] : memref<1456x128xbf16, #tpu.memory_space<vmem>>, vector<32x16xbf16>
    %503 = arith.truncf %477 : vector<16x32xf32> to vector<16x32xbf16>
    %cst_171 = arith.constant dense<0.000000e+00> : vector<16x16xf32>
    %504 = tpu.matmul %503, %502, %cst_171 {dimension_numbers = #tpu.dot_dimension_numbers<[1], [0], [0], [1], [0, 0, 1, 1], [], []>} : vector<16x32xbf16>, vector<32x16xbf16>, vector<16x16xf32> -> vector<16x16xf32>
    %c280 = arith.constant 280 : index
    %c0_172 = arith.constant 0 : index
    %505 = vector.load %arg2[%c280, %c0_172] : memref<496x128xf32, #tpu.memory_space<vmem>>, vector<1x16xf32>
    %506 = vector.broadcast %505 : vector<1x16xf32> to vector<16x16xf32>
    %507 = arith.addf %504, %506 : vector<16x16xf32>
    %c848 = arith.constant 848 : index
    %c0_173 = arith.constant 0 : index
    %508 = vector.load %arg1[%c848, %c0_173] : memref<1456x128xbf16, #tpu.memory_space<vmem>>, vector<32x16xbf16>
    %509 = arith.truncf %501 : vector<16x32xf32> to vector<16x32xbf16>
    %cst_174 = arith.constant dense<0.000000e+00> : vector<16x16xf32>
    %510 = tpu.matmul %509, %508, %cst_174 {dimension_numbers = #tpu.dot_dimension_numbers<[1], [0], [0], [1], [0, 0, 1, 1], [], []>} : vector<16x32xbf16>, vector<32x16xbf16>, vector<16x16xf32> -> vector<16x16xf32>
    %c288 = arith.constant 288 : index
    %c0_175 = arith.constant 0 : index
    %511 = vector.load %arg2[%c288, %c0_175] : memref<496x128xf32, #tpu.memory_space<vmem>>, vector<1x16xf32>
    %512 = vector.broadcast %511 : vector<1x16xf32> to vector<16x16xf32>
    %513 = arith.addf %510, %512 : vector<16x16xf32>
    %c880 = arith.constant 880 : index
    %c0_176 = arith.constant 0 : index
    %514 = vector.load %arg1[%c880, %c0_176] : memref<1456x128xbf16, #tpu.memory_space<vmem>>, vector<32x16xbf16>
    %515 = arith.truncf %501 : vector<16x32xf32> to vector<16x32xbf16>
    %cst_177 = arith.constant dense<0.000000e+00> : vector<16x16xf32>
    %516 = tpu.matmul %515, %514, %cst_177 {dimension_numbers = #tpu.dot_dimension_numbers<[1], [0], [0], [1], [0, 0, 1, 1], [], []>} : vector<16x32xbf16>, vector<32x16xbf16>, vector<16x16xf32> -> vector<16x16xf32>
    %c296 = arith.constant 296 : index
    %c0_178 = arith.constant 0 : index
    %517 = vector.load %arg2[%c296, %c0_178] : memref<496x128xf32, #tpu.memory_space<vmem>>, vector<1x16xf32>
    %518 = vector.broadcast %517 : vector<1x16xf32> to vector<16x16xf32>
    %519 = arith.addf %516, %518 : vector<16x16xf32>
    %520 = vector.extract_strided_slice %507 {offsets = [0, 0], sizes = [8, 16], strides = [1, 1]} : vector<16x16xf32> to vector<8x16xf32>
    %521 = vector.extract_strided_slice %513 {offsets = [0, 0], sizes = [8, 16], strides = [1, 1]} : vector<16x16xf32> to vector<8x16xf32>
    %522 = arith.truncf %520 : vector<8x16xf32> to vector<8x16xbf16>
    %523 = arith.truncf %521 : vector<8x16xf32> to vector<8x16xbf16>
    %cst_179 = arith.constant dense<0.000000e+00> : vector<8x8xf32>
    %524 = tpu.matmul %522, %523, %cst_179 {dimension_numbers = #tpu.dot_dimension_numbers<[1], [1], [0], [0], [0, 0, 1, 0], [], []>} : vector<8x16xbf16>, vector<8x16xbf16>, vector<8x8xf32> -> vector<8x8xf32>
    %cst_180 = arith.constant dense<0xFF800000> : vector<8xf32>
    %525 = vector.multi_reduction <maximumf>, %524, %cst_180 [1] : vector<8x8xf32> to vector<8xf32>
    %526 = vector.shape_cast %525 : vector<8xf32> to vector<8x1xf32>
    %527 = vector.broadcast %526 : vector<8x1xf32> to vector<8x8xf32>
    %528 = arith.subf %524, %527 : vector<8x8xf32>
    %529 = math.exp %528 : vector<8x8xf32>
    %cst_181 = arith.constant dense<0.000000e+00> : vector<8xf32>
    %530 = vector.multi_reduction <add>, %529, %cst_181 [1] : vector<8x8xf32> to vector<8xf32>
    %531 = vector.shape_cast %530 : vector<8xf32> to vector<8x1xf32>
    %532 = tpu.reciprocal %531 {approx = true} : vector<8x1xf32> -> vector<8x1xf32>
    %533 = vector.broadcast %532 : vector<8x1xf32> to vector<8x8xf32>
    %534 = arith.mulf %529, %533 : vector<8x8xf32>
    %535 = vector.extract_strided_slice %519 {offsets = [0, 0], sizes = [8, 16], strides = [1, 1]} : vector<16x16xf32> to vector<8x16xf32>
    %536 = arith.truncf %534 : vector<8x8xf32> to vector<8x8xbf16>
    %537 = arith.truncf %535 : vector<8x16xf32> to vector<8x16xbf16>
    %cst_182 = arith.constant dense<0.000000e+00> : vector<8x16xf32>
    %538 = tpu.matmul %536, %537, %cst_182 {dimension_numbers = #tpu.dot_dimension_numbers<[1], [0], [0], [1], [0, 0, 1, 1], [], []>} : vector<8x8xbf16>, vector<8x16xbf16>, vector<8x16xf32> -> vector<8x16xf32>
    %539 = vector.extract_strided_slice %507 {offsets = [8, 0], sizes = [8, 16], strides = [1, 1]} : vector<16x16xf32> to vector<8x16xf32>
    %540 = vector.extract_strided_slice %513 {offsets = [8, 0], sizes = [8, 16], strides = [1, 1]} : vector<16x16xf32> to vector<8x16xf32>
    %541 = arith.truncf %539 : vector<8x16xf32> to vector<8x16xbf16>
    %542 = arith.truncf %540 : vector<8x16xf32> to vector<8x16xbf16>
    %cst_183 = arith.constant dense<0.000000e+00> : vector<8x8xf32>
    %543 = tpu.matmul %541, %542, %cst_183 {dimension_numbers = #tpu.dot_dimension_numbers<[1], [1], [0], [0], [0, 0, 1, 0], [], []>} : vector<8x16xbf16>, vector<8x16xbf16>, vector<8x8xf32> -> vector<8x8xf32>
    %cst_184 = arith.constant dense<0xFF800000> : vector<8xf32>
    %544 = vector.multi_reduction <maximumf>, %543, %cst_184 [1] : vector<8x8xf32> to vector<8xf32>
    %545 = vector.shape_cast %544 : vector<8xf32> to vector<8x1xf32>
    %546 = vector.broadcast %545 : vector<8x1xf32> to vector<8x8xf32>
    %547 = arith.subf %543, %546 : vector<8x8xf32>
    %548 = math.exp %547 : vector<8x8xf32>
    %cst_185 = arith.constant dense<0.000000e+00> : vector<8xf32>
    %549 = vector.multi_reduction <add>, %548, %cst_185 [1] : vector<8x8xf32> to vector<8xf32>
    %550 = vector.shape_cast %549 : vector<8xf32> to vector<8x1xf32>
    %551 = tpu.reciprocal %550 {approx = true} : vector<8x1xf32> -> vector<8x1xf32>
    %552 = vector.broadcast %551 : vector<8x1xf32> to vector<8x8xf32>
    %553 = arith.mulf %548, %552 : vector<8x8xf32>
    %554 = vector.extract_strided_slice %519 {offsets = [8, 0], sizes = [8, 16], strides = [1, 1]} : vector<16x16xf32> to vector<8x16xf32>
    %555 = arith.truncf %553 : vector<8x8xf32> to vector<8x8xbf16>
    %556 = arith.truncf %554 : vector<8x16xf32> to vector<8x16xbf16>
    %cst_186 = arith.constant dense<0.000000e+00> : vector<8x16xf32>
    %557 = tpu.matmul %555, %556, %cst_186 {dimension_numbers = #tpu.dot_dimension_numbers<[1], [0], [0], [1], [0, 0, 1, 1], [], []>} : vector<8x8xbf16>, vector<8x16xbf16>, vector<8x16xf32> -> vector<8x16xf32>
    %558 = tpu.concatenate %538, %557 in 0 : vector<8x16xf32>, vector<8x16xf32> -> vector<16x16xf32>
    %c912 = arith.constant 912 : index
    %c0_187 = arith.constant 0 : index
    %559 = vector.load %arg1[%c912, %c0_187] : memref<1456x128xbf16, #tpu.memory_space<vmem>>, vector<16x32xbf16>
    %560 = arith.truncf %558 : vector<16x16xf32> to vector<16x16xbf16>
    %cst_188 = arith.constant dense<0.000000e+00> : vector<16x32xf32>
    %561 = tpu.matmul %560, %559, %cst_188 {dimension_numbers = #tpu.dot_dimension_numbers<[1], [0], [0], [1], [0, 0, 1, 1], [], []>} : vector<16x16xbf16>, vector<16x32xbf16>, vector<16x32xf32> -> vector<16x32xf32>
    %c928 = arith.constant 928 : index
    %c0_189 = arith.constant 0 : index
    %562 = vector.load %arg1[%c928, %c0_189] : memref<1456x128xbf16, #tpu.memory_space<vmem>>, vector<32x16xbf16>
    %563 = arith.truncf %477 : vector<16x32xf32> to vector<16x32xbf16>
    %cst_190 = arith.constant dense<0.000000e+00> : vector<16x16xf32>
    %564 = tpu.matmul %563, %562, %cst_190 {dimension_numbers = #tpu.dot_dimension_numbers<[1], [0], [0], [1], [0, 0, 1, 1], [], []>} : vector<16x32xbf16>, vector<32x16xbf16>, vector<16x16xf32> -> vector<16x16xf32>
    %c304_191 = arith.constant 304 : index
    %c0_192 = arith.constant 0 : index
    %565 = vector.load %arg2[%c304_191, %c0_192] : memref<496x128xf32, #tpu.memory_space<vmem>>, vector<1x16xf32>
    %566 = vector.broadcast %565 : vector<1x16xf32> to vector<16x16xf32>
    %567 = arith.addf %564, %566 : vector<16x16xf32>
    %c960 = arith.constant 960 : index
    %c0_193 = arith.constant 0 : index
    %568 = vector.load %arg1[%c960, %c0_193] : memref<1456x128xbf16, #tpu.memory_space<vmem>>, vector<32x16xbf16>
    %569 = arith.truncf %501 : vector<16x32xf32> to vector<16x32xbf16>
    %cst_194 = arith.constant dense<0.000000e+00> : vector<16x16xf32>
    %570 = tpu.matmul %569, %568, %cst_194 {dimension_numbers = #tpu.dot_dimension_numbers<[1], [0], [0], [1], [0, 0, 1, 1], [], []>} : vector<16x32xbf16>, vector<32x16xbf16>, vector<16x16xf32> -> vector<16x16xf32>
    %c312 = arith.constant 312 : index
    %c0_195 = arith.constant 0 : index
    %571 = vector.load %arg2[%c312, %c0_195] : memref<496x128xf32, #tpu.memory_space<vmem>>, vector<1x16xf32>
    %572 = vector.broadcast %571 : vector<1x16xf32> to vector<16x16xf32>
    %573 = arith.addf %570, %572 : vector<16x16xf32>
    %c992 = arith.constant 992 : index
    %c0_196 = arith.constant 0 : index
    %574 = vector.load %arg1[%c992, %c0_196] : memref<1456x128xbf16, #tpu.memory_space<vmem>>, vector<32x16xbf16>
    %575 = arith.truncf %501 : vector<16x32xf32> to vector<16x32xbf16>
    %cst_197 = arith.constant dense<0.000000e+00> : vector<16x16xf32>
    %576 = tpu.matmul %575, %574, %cst_197 {dimension_numbers = #tpu.dot_dimension_numbers<[1], [0], [0], [1], [0, 0, 1, 1], [], []>} : vector<16x32xbf16>, vector<32x16xbf16>, vector<16x16xf32> -> vector<16x16xf32>
    %c320 = arith.constant 320 : index
    %c0_198 = arith.constant 0 : index
    %577 = vector.load %arg2[%c320, %c0_198] : memref<496x128xf32, #tpu.memory_space<vmem>>, vector<1x16xf32>
    %578 = vector.broadcast %577 : vector<1x16xf32> to vector<16x16xf32>
    %579 = arith.addf %576, %578 : vector<16x16xf32>
    %580 = vector.extract_strided_slice %567 {offsets = [0, 0], sizes = [8, 16], strides = [1, 1]} : vector<16x16xf32> to vector<8x16xf32>
    %581 = vector.extract_strided_slice %573 {offsets = [0, 0], sizes = [8, 16], strides = [1, 1]} : vector<16x16xf32> to vector<8x16xf32>
    %582 = arith.truncf %580 : vector<8x16xf32> to vector<8x16xbf16>
    %583 = arith.truncf %581 : vector<8x16xf32> to vector<8x16xbf16>
    %cst_199 = arith.constant dense<0.000000e+00> : vector<8x8xf32>
    %584 = tpu.matmul %582, %583, %cst_199 {dimension_numbers = #tpu.dot_dimension_numbers<[1], [1], [0], [0], [0, 0, 1, 0], [], []>} : vector<8x16xbf16>, vector<8x16xbf16>, vector<8x8xf32> -> vector<8x8xf32>
    %cst_200 = arith.constant dense<0xFF800000> : vector<8xf32>
    %585 = vector.multi_reduction <maximumf>, %584, %cst_200 [1] : vector<8x8xf32> to vector<8xf32>
    %586 = vector.shape_cast %585 : vector<8xf32> to vector<8x1xf32>
    %587 = vector.broadcast %586 : vector<8x1xf32> to vector<8x8xf32>
    %588 = arith.subf %584, %587 : vector<8x8xf32>
    %589 = math.exp %588 : vector<8x8xf32>
    %cst_201 = arith.constant dense<0.000000e+00> : vector<8xf32>
    %590 = vector.multi_reduction <add>, %589, %cst_201 [1] : vector<8x8xf32> to vector<8xf32>
    %591 = vector.shape_cast %590 : vector<8xf32> to vector<8x1xf32>
    %592 = tpu.reciprocal %591 {approx = true} : vector<8x1xf32> -> vector<8x1xf32>
    %593 = vector.broadcast %592 : vector<8x1xf32> to vector<8x8xf32>
    %594 = arith.mulf %589, %593 : vector<8x8xf32>
    %595 = vector.extract_strided_slice %579 {offsets = [0, 0], sizes = [8, 16], strides = [1, 1]} : vector<16x16xf32> to vector<8x16xf32>
    %596 = arith.truncf %594 : vector<8x8xf32> to vector<8x8xbf16>
    %597 = arith.truncf %595 : vector<8x16xf32> to vector<8x16xbf16>
    %cst_202 = arith.constant dense<0.000000e+00> : vector<8x16xf32>
    %598 = tpu.matmul %596, %597, %cst_202 {dimension_numbers = #tpu.dot_dimension_numbers<[1], [0], [0], [1], [0, 0, 1, 1], [], []>} : vector<8x8xbf16>, vector<8x16xbf16>, vector<8x16xf32> -> vector<8x16xf32>
    %599 = vector.extract_strided_slice %567 {offsets = [8, 0], sizes = [8, 16], strides = [1, 1]} : vector<16x16xf32> to vector<8x16xf32>
    %600 = vector.extract_strided_slice %573 {offsets = [8, 0], sizes = [8, 16], strides = [1, 1]} : vector<16x16xf32> to vector<8x16xf32>
    %601 = arith.truncf %599 : vector<8x16xf32> to vector<8x16xbf16>
    %602 = arith.truncf %600 : vector<8x16xf32> to vector<8x16xbf16>
    %cst_203 = arith.constant dense<0.000000e+00> : vector<8x8xf32>
    %603 = tpu.matmul %601, %602, %cst_203 {dimension_numbers = #tpu.dot_dimension_numbers<[1], [1], [0], [0], [0, 0, 1, 0], [], []>} : vector<8x16xbf16>, vector<8x16xbf16>, vector<8x8xf32> -> vector<8x8xf32>
    %cst_204 = arith.constant dense<0xFF800000> : vector<8xf32>
    %604 = vector.multi_reduction <maximumf>, %603, %cst_204 [1] : vector<8x8xf32> to vector<8xf32>
    %605 = vector.shape_cast %604 : vector<8xf32> to vector<8x1xf32>
    %606 = vector.broadcast %605 : vector<8x1xf32> to vector<8x8xf32>
    %607 = arith.subf %603, %606 : vector<8x8xf32>
    %608 = math.exp %607 : vector<8x8xf32>
    %cst_205 = arith.constant dense<0.000000e+00> : vector<8xf32>
    %609 = vector.multi_reduction <add>, %608, %cst_205 [1] : vector<8x8xf32> to vector<8xf32>
    %610 = vector.shape_cast %609 : vector<8xf32> to vector<8x1xf32>
    %611 = tpu.reciprocal %610 {approx = true} : vector<8x1xf32> -> vector<8x1xf32>
    %612 = vector.broadcast %611 : vector<8x1xf32> to vector<8x8xf32>
    %613 = arith.mulf %608, %612 : vector<8x8xf32>
    %614 = vector.extract_strided_slice %579 {offsets = [8, 0], sizes = [8, 16], strides = [1, 1]} : vector<16x16xf32> to vector<8x16xf32>
    %615 = arith.truncf %613 : vector<8x8xf32> to vector<8x8xbf16>
    %616 = arith.truncf %614 : vector<8x16xf32> to vector<8x16xbf16>
    %cst_206 = arith.constant dense<0.000000e+00> : vector<8x16xf32>
    %617 = tpu.matmul %615, %616, %cst_206 {dimension_numbers = #tpu.dot_dimension_numbers<[1], [0], [0], [1], [0, 0, 1, 1], [], []>} : vector<8x8xbf16>, vector<8x16xbf16>, vector<8x16xf32> -> vector<8x16xf32>
    %618 = tpu.concatenate %598, %617 in 0 : vector<8x16xf32>, vector<8x16xf32> -> vector<16x16xf32>
    %c1024 = arith.constant 1024 : index
    %c0_207 = arith.constant 0 : index
    %619 = vector.load %arg1[%c1024, %c0_207] : memref<1456x128xbf16, #tpu.memory_space<vmem>>, vector<16x32xbf16>
    %620 = arith.truncf %618 : vector<16x16xf32> to vector<16x16xbf16>
    %cst_208 = arith.constant dense<0.000000e+00> : vector<16x32xf32>
    %621 = tpu.matmul %620, %619, %cst_208 {dimension_numbers = #tpu.dot_dimension_numbers<[1], [0], [0], [1], [0, 0, 1, 1], [], []>} : vector<16x16xbf16>, vector<16x32xbf16>, vector<16x32xf32> -> vector<16x32xf32>
    %622 = arith.addf %561, %621 : vector<16x32xf32>
    %c328 = arith.constant 328 : index
    %c0_209 = arith.constant 0 : index
    %623 = vector.load %arg2[%c328, %c0_209] : memref<496x128xf32, #tpu.memory_space<vmem>>, vector<1x32xf32>
    %624 = vector.broadcast %623 : vector<1x32xf32> to vector<16x32xf32>
    %625 = arith.addf %622, %624 : vector<16x32xf32>
    %626 = arith.addf %453, %625 : vector<16x32xf32>
    %cst_210 = arith.constant dense<0.000000e+00> : vector<16xf32>
    %627 = vector.multi_reduction <add>, %626, %cst_210 [1] : vector<16x32xf32> to vector<16xf32>
    %628 = vector.shape_cast %627 : vector<16xf32> to vector<16x1xf32>
    %cst_211 = arith.constant 3.200000e+01 : f32
    %629 = vector.broadcast %cst_211 : f32 to vector<16x1xf32>
    %630 = arith.divf %628, %629 : vector<16x1xf32>
    %631 = vector.broadcast %630 : vector<16x1xf32> to vector<16x32xf32>
    %632 = arith.subf %626, %631 : vector<16x32xf32>
    %633 = arith.mulf %632, %632 : vector<16x32xf32>
    %cst_212 = arith.constant dense<0.000000e+00> : vector<16xf32>
    %634 = vector.multi_reduction <add>, %633, %cst_212 [1] : vector<16x32xf32> to vector<16xf32>
    %635 = vector.shape_cast %634 : vector<16xf32> to vector<16x1xf32>
    %cst_213 = arith.constant 3.200000e+01 : f32
    %636 = vector.broadcast %cst_213 : f32 to vector<16x1xf32>
    %637 = arith.divf %635, %636 : vector<16x1xf32>
    %638 = vector.broadcast %630 : vector<16x1xf32> to vector<16x32xf32>
    %639 = arith.subf %626, %638 : vector<16x32xf32>
    %cst_214 = arith.constant 9.99999974E-6 : f32
    %640 = vector.broadcast %cst_214 : f32 to vector<16x1xf32>
    %641 = arith.addf %637, %640 : vector<16x1xf32>
    %642 = math.rsqrt %641 : vector<16x1xf32>
    %643 = vector.broadcast %642 : vector<16x1xf32> to vector<16x32xf32>
    %644 = arith.mulf %639, %643 : vector<16x32xf32>
    %c368 = arith.constant 368 : index
    %c0_215 = arith.constant 0 : index
    %645 = vector.load %arg2[%c368, %c0_215] : memref<496x128xf32, #tpu.memory_space<vmem>>, vector<1x32xf32>
    %646 = vector.broadcast %645 : vector<1x32xf32> to vector<16x32xf32>
    %647 = arith.mulf %644, %646 : vector<16x32xf32>
    %c376 = arith.constant 376 : index
    %c0_216 = arith.constant 0 : index
    %648 = vector.load %arg2[%c376, %c0_216] : memref<496x128xf32, #tpu.memory_space<vmem>>, vector<1x32xf32>
    %649 = vector.broadcast %648 : vector<1x32xf32> to vector<16x32xf32>
    %650 = arith.addf %647, %649 : vector<16x32xf32>
    %c1040 = arith.constant 1040 : index
    %c0_217 = arith.constant 0 : index
    %651 = vector.load %arg1[%c1040, %c0_217] : memref<1456x128xbf16, #tpu.memory_space<vmem>>, vector<32x128xbf16>
    %652 = arith.truncf %650 : vector<16x32xf32> to vector<16x32xbf16>
    %cst_218 = arith.constant dense<0.000000e+00> : vector<16x128xf32>
    %653 = tpu.matmul %652, %651, %cst_218 {dimension_numbers = #tpu.dot_dimension_numbers<[1], [0], [0], [1], [0, 0, 1, 1], [], []>} : vector<16x32xbf16>, vector<32x128xbf16>, vector<16x128xf32> -> vector<16x128xf32>
    %c384 = arith.constant 384 : index
    %c0_219 = arith.constant 0 : index
    %654 = vector.load %arg2[%c384, %c0_219] : memref<496x128xf32, #tpu.memory_space<vmem>>, vector<1x128xf32>
    %655 = vector.broadcast %654 : vector<1x128xf32> to vector<16x128xf32>
    %656 = arith.addf %653, %655 : vector<16x128xf32>
    %657 = arith.mulf %656, %656 : vector<16x128xf32>
    %658 = arith.mulf %656, %657 : vector<16x128xf32>
    %cst_220 = arith.constant 4.471500e-02 : f32
    %659 = vector.broadcast %cst_220 : f32 to vector<16x128xf32>
    %660 = arith.mulf %659, %658 : vector<16x128xf32>
    %661 = arith.addf %656, %660 : vector<16x128xf32>
    %cst_221 = arith.constant 0.797884583 : f32
    %662 = vector.broadcast %cst_221 : f32 to vector<16x128xf32>
    %663 = arith.mulf %662, %661 : vector<16x128xf32>
    %664 = math.tanh %663 : vector<16x128xf32>
    %cst_222 = arith.constant 1.000000e+00 : f32
    %665 = vector.broadcast %cst_222 : f32 to vector<16x128xf32>
    %666 = arith.addf %665, %664 : vector<16x128xf32>
    %cst_223 = arith.constant 5.000000e-01 : f32
    %667 = vector.broadcast %cst_223 : f32 to vector<16x128xf32>
    %668 = arith.mulf %667, %666 : vector<16x128xf32>
    %669 = arith.mulf %656, %668 : vector<16x128xf32>
    %c1072 = arith.constant 1072 : index
    %c0_224 = arith.constant 0 : index
    %670 = vector.load %arg1[%c1072, %c0_224] : memref<1456x128xbf16, #tpu.memory_space<vmem>>, vector<128x32xbf16>
    %671 = arith.truncf %669 : vector<16x128xf32> to vector<16x128xbf16>
    %cst_225 = arith.constant dense<0.000000e+00> : vector<16x32xf32>
    %672 = tpu.matmul %671, %670, %cst_225 {dimension_numbers = #tpu.dot_dimension_numbers<[1], [0], [0], [1], [0, 0, 1, 1], [], []>} : vector<16x128xbf16>, vector<128x32xbf16>, vector<16x32xf32> -> vector<16x32xf32>
    %c392 = arith.constant 392 : index
    %c0_226 = arith.constant 0 : index
    %673 = vector.load %arg2[%c392, %c0_226] : memref<496x128xf32, #tpu.memory_space<vmem>>, vector<1x32xf32>
    %674 = vector.broadcast %673 : vector<1x32xf32> to vector<16x32xf32>
    %675 = arith.addf %672, %674 : vector<16x32xf32>
    %676 = arith.addf %626, %675 : vector<16x32xf32>
    %c24 = arith.constant 24 : index
    %c0_227 = arith.constant 0 : index
    %677 = vector.load %arg2[%c24, %c0_227] : memref<496x128xf32, #tpu.memory_space<vmem>>, vector<1x32xf32>
    %cst_228 = arith.constant dense<0.000000e+00> : vector<1xf32>
    %678 = vector.multi_reduction <add>, %677, %cst_228 [1] : vector<1x32xf32> to vector<1xf32>
    %679 = vector.shape_cast %678 : vector<1xf32> to vector<1x1xf32>
    %cst_229 = arith.constant 3.200000e+01 : f32
    %680 = vector.broadcast %cst_229 : f32 to vector<1x1xf32>
    %681 = arith.divf %679, %680 : vector<1x1xf32>
    %682 = vector.broadcast %681 : vector<1x1xf32> to vector<1x32xf32>
    %683 = arith.subf %677, %682 : vector<1x32xf32>
    %684 = arith.mulf %683, %683 : vector<1x32xf32>
    %cst_230 = arith.constant dense<0.000000e+00> : vector<1xf32>
    %685 = vector.multi_reduction <add>, %684, %cst_230 [1] : vector<1x32xf32> to vector<1xf32>
    %686 = vector.shape_cast %685 : vector<1xf32> to vector<1x1xf32>
    %cst_231 = arith.constant 3.200000e+01 : f32
    %687 = vector.broadcast %cst_231 : f32 to vector<1x1xf32>
    %688 = arith.divf %686, %687 : vector<1x1xf32>
    %689 = vector.broadcast %681 : vector<1x1xf32> to vector<1x32xf32>
    %690 = arith.subf %677, %689 : vector<1x32xf32>
    %cst_232 = arith.constant 9.99999974E-6 : f32
    %691 = vector.broadcast %cst_232 : f32 to vector<1x1xf32>
    %692 = arith.addf %688, %691 : vector<1x1xf32>
    %693 = math.rsqrt %692 : vector<1x1xf32>
    %694 = vector.broadcast %693 : vector<1x1xf32> to vector<1x32xf32>
    %695 = arith.mulf %690, %694 : vector<1x32xf32>
    %c456 = arith.constant 456 : index
    %c0_233 = arith.constant 0 : index
    %696 = vector.load %arg2[%c456, %c0_233] : memref<496x128xf32, #tpu.memory_space<vmem>>, vector<1x32xf32>
    %697 = arith.mulf %695, %696 : vector<1x32xf32>
    %c464_234 = arith.constant 464 : index
    %c0_235 = arith.constant 0 : index
    %698 = vector.load %arg2[%c464_234, %c0_235] : memref<496x128xf32, #tpu.memory_space<vmem>>, vector<1x32xf32>
    %699 = arith.addf %697, %698 : vector<1x32xf32>
    %cst_236 = arith.constant dense<0.000000e+00> : vector<16xf32>
    %700 = vector.multi_reduction <add>, %676, %cst_236 [1] : vector<16x32xf32> to vector<16xf32>
    %701 = vector.shape_cast %700 : vector<16xf32> to vector<16x1xf32>
    %cst_237 = arith.constant 3.200000e+01 : f32
    %702 = vector.broadcast %cst_237 : f32 to vector<16x1xf32>
    %703 = arith.divf %701, %702 : vector<16x1xf32>
    %704 = vector.broadcast %703 : vector<16x1xf32> to vector<16x32xf32>
    %705 = arith.subf %676, %704 : vector<16x32xf32>
    %706 = arith.mulf %705, %705 : vector<16x32xf32>
    %cst_238 = arith.constant dense<0.000000e+00> : vector<16xf32>
    %707 = vector.multi_reduction <add>, %706, %cst_238 [1] : vector<16x32xf32> to vector<16xf32>
    %708 = vector.shape_cast %707 : vector<16xf32> to vector<16x1xf32>
    %cst_239 = arith.constant 3.200000e+01 : f32
    %709 = vector.broadcast %cst_239 : f32 to vector<16x1xf32>
    %710 = arith.divf %708, %709 : vector<16x1xf32>
    %711 = vector.broadcast %703 : vector<16x1xf32> to vector<16x32xf32>
    %712 = arith.subf %676, %711 : vector<16x32xf32>
    %cst_240 = arith.constant 9.99999974E-6 : f32
    %713 = vector.broadcast %cst_240 : f32 to vector<16x1xf32>
    %714 = arith.addf %710, %713 : vector<16x1xf32>
    %715 = math.rsqrt %714 : vector<16x1xf32>
    %716 = vector.broadcast %715 : vector<16x1xf32> to vector<16x32xf32>
    %717 = arith.mulf %712, %716 : vector<16x32xf32>
    %c472 = arith.constant 472 : index
    %c0_241 = arith.constant 0 : index
    %718 = vector.load %arg2[%c472, %c0_241] : memref<496x128xf32, #tpu.memory_space<vmem>>, vector<1x32xf32>
    %719 = vector.broadcast %718 : vector<1x32xf32> to vector<16x32xf32>
    %720 = arith.mulf %717, %719 : vector<16x32xf32>
    %c480 = arith.constant 480 : index
    %c0_242 = arith.constant 0 : index
    %721 = vector.load %arg2[%c480, %c0_242] : memref<496x128xf32, #tpu.memory_space<vmem>>, vector<1x32xf32>
    %722 = vector.broadcast %721 : vector<1x32xf32> to vector<16x32xf32>
    %723 = arith.addf %720, %722 : vector<16x32xf32>
    %c1200 = arith.constant 1200 : index
    %c0_243 = arith.constant 0 : index
    %724 = vector.load %arg1[%c1200, %c0_243] : memref<1456x128xbf16, #tpu.memory_space<vmem>>, vector<32x16xbf16>
    %725 = arith.truncf %699 : vector<1x32xf32> to vector<1x32xbf16>
    %cst_244 = arith.constant dense<0.000000e+00> : vector<1x16xf32>
    %726 = tpu.matmul %725, %724, %cst_244 {dimension_numbers = #tpu.dot_dimension_numbers<[1], [0], [0], [1], [0, 0, 1, 1], [], []>} : vector<1x32xbf16>, vector<32x16xbf16>, vector<1x16xf32> -> vector<1x16xf32>
    %c400 = arith.constant 400 : index
    %c0_245 = arith.constant 0 : index
    %727 = vector.load %arg2[%c400, %c0_245] : memref<496x128xf32, #tpu.memory_space<vmem>>, vector<1x16xf32>
    %728 = arith.addf %726, %727 : vector<1x16xf32>
    %c1232 = arith.constant 1232 : index
    %c0_246 = arith.constant 0 : index
    %729 = vector.load %arg1[%c1232, %c0_246] : memref<1456x128xbf16, #tpu.memory_space<vmem>>, vector<32x16xbf16>
    %730 = arith.truncf %723 : vector<16x32xf32> to vector<16x32xbf16>
    %cst_247 = arith.constant dense<0.000000e+00> : vector<16x16xf32>
    %731 = tpu.matmul %730, %729, %cst_247 {dimension_numbers = #tpu.dot_dimension_numbers<[1], [0], [0], [1], [0, 0, 1, 1], [], []>} : vector<16x32xbf16>, vector<32x16xbf16>, vector<16x16xf32> -> vector<16x16xf32>
    %c408 = arith.constant 408 : index
    %c0_248 = arith.constant 0 : index
    %732 = vector.load %arg2[%c408, %c0_248] : memref<496x128xf32, #tpu.memory_space<vmem>>, vector<1x16xf32>
    %733 = vector.broadcast %732 : vector<1x16xf32> to vector<16x16xf32>
    %734 = arith.addf %731, %733 : vector<16x16xf32>
    %c1264 = arith.constant 1264 : index
    %c0_249 = arith.constant 0 : index
    %735 = vector.load %arg1[%c1264, %c0_249] : memref<1456x128xbf16, #tpu.memory_space<vmem>>, vector<32x16xbf16>
    %736 = arith.truncf %723 : vector<16x32xf32> to vector<16x32xbf16>
    %cst_250 = arith.constant dense<0.000000e+00> : vector<16x16xf32>
    %737 = tpu.matmul %736, %735, %cst_250 {dimension_numbers = #tpu.dot_dimension_numbers<[1], [0], [0], [1], [0, 0, 1, 1], [], []>} : vector<16x32xbf16>, vector<32x16xbf16>, vector<16x16xf32> -> vector<16x16xf32>
    %c416 = arith.constant 416 : index
    %c0_251 = arith.constant 0 : index
    %738 = vector.load %arg2[%c416, %c0_251] : memref<496x128xf32, #tpu.memory_space<vmem>>, vector<1x16xf32>
    %739 = vector.broadcast %738 : vector<1x16xf32> to vector<16x16xf32>
    %740 = arith.addf %737, %739 : vector<16x16xf32>
    %741 = vector.extract_strided_slice %734 {offsets = [0, 0], sizes = [8, 16], strides = [1, 1]} : vector<16x16xf32> to vector<8x16xf32>
    %742 = arith.truncf %728 : vector<1x16xf32> to vector<1x16xbf16>
    %743 = arith.truncf %741 : vector<8x16xf32> to vector<8x16xbf16>
    %cst_252 = arith.constant dense<0.000000e+00> : vector<1x8xf32>
    %744 = tpu.matmul %742, %743, %cst_252 {dimension_numbers = #tpu.dot_dimension_numbers<[1], [1], [0], [0], [0, 0, 1, 0], [], []>} : vector<1x16xbf16>, vector<8x16xbf16>, vector<1x8xf32> -> vector<1x8xf32>
    %cst_253 = arith.constant dense<0xFF800000> : vector<1xf32>
    %745 = vector.multi_reduction <maximumf>, %744, %cst_253 [1] : vector<1x8xf32> to vector<1xf32>
    %746 = vector.shape_cast %745 : vector<1xf32> to vector<1x1xf32>
    %747 = vector.broadcast %746 : vector<1x1xf32> to vector<1x8xf32>
    %748 = arith.subf %744, %747 : vector<1x8xf32>
    %749 = math.exp %748 : vector<1x8xf32>
    %cst_254 = arith.constant dense<0.000000e+00> : vector<1xf32>
    %750 = vector.multi_reduction <add>, %749, %cst_254 [1] : vector<1x8xf32> to vector<1xf32>
    %751 = vector.shape_cast %750 : vector<1xf32> to vector<1x1xf32>
    %752 = tpu.reciprocal %751 {approx = true} : vector<1x1xf32> -> vector<1x1xf32>
    %753 = vector.broadcast %752 : vector<1x1xf32> to vector<1x8xf32>
    %754 = arith.mulf %749, %753 : vector<1x8xf32>
    %755 = vector.extract_strided_slice %740 {offsets = [0, 0], sizes = [8, 16], strides = [1, 1]} : vector<16x16xf32> to vector<8x16xf32>
    %756 = arith.truncf %754 : vector<1x8xf32> to vector<1x8xbf16>
    %757 = arith.truncf %755 : vector<8x16xf32> to vector<8x16xbf16>
    %cst_255 = arith.constant dense<0.000000e+00> : vector<1x16xf32>
    %758 = tpu.matmul %756, %757, %cst_255 {dimension_numbers = #tpu.dot_dimension_numbers<[1], [0], [0], [1], [0, 0, 1, 1], [], []>} : vector<1x8xbf16>, vector<8x16xbf16>, vector<1x16xf32> -> vector<1x16xf32>
    %759 = vector.extract_strided_slice %734 {offsets = [8, 0], sizes = [8, 16], strides = [1, 1]} : vector<16x16xf32> to vector<8x16xf32>
    %760 = arith.truncf %728 : vector<1x16xf32> to vector<1x16xbf16>
    %761 = arith.truncf %759 : vector<8x16xf32> to vector<8x16xbf16>
    %cst_256 = arith.constant dense<0.000000e+00> : vector<1x8xf32>
    %762 = tpu.matmul %760, %761, %cst_256 {dimension_numbers = #tpu.dot_dimension_numbers<[1], [1], [0], [0], [0, 0, 1, 0], [], []>} : vector<1x16xbf16>, vector<8x16xbf16>, vector<1x8xf32> -> vector<1x8xf32>
    %cst_257 = arith.constant dense<0xFF800000> : vector<1xf32>
    %763 = vector.multi_reduction <maximumf>, %762, %cst_257 [1] : vector<1x8xf32> to vector<1xf32>
    %764 = vector.shape_cast %763 : vector<1xf32> to vector<1x1xf32>
    %765 = vector.broadcast %764 : vector<1x1xf32> to vector<1x8xf32>
    %766 = arith.subf %762, %765 : vector<1x8xf32>
    %767 = math.exp %766 : vector<1x8xf32>
    %cst_258 = arith.constant dense<0.000000e+00> : vector<1xf32>
    %768 = vector.multi_reduction <add>, %767, %cst_258 [1] : vector<1x8xf32> to vector<1xf32>
    %769 = vector.shape_cast %768 : vector<1xf32> to vector<1x1xf32>
    %770 = tpu.reciprocal %769 {approx = true} : vector<1x1xf32> -> vector<1x1xf32>
    %771 = vector.broadcast %770 : vector<1x1xf32> to vector<1x8xf32>
    %772 = arith.mulf %767, %771 : vector<1x8xf32>
    %773 = vector.extract_strided_slice %740 {offsets = [8, 0], sizes = [8, 16], strides = [1, 1]} : vector<16x16xf32> to vector<8x16xf32>
    %774 = arith.truncf %772 : vector<1x8xf32> to vector<1x8xbf16>
    %775 = arith.truncf %773 : vector<8x16xf32> to vector<8x16xbf16>
    %cst_259 = arith.constant dense<0.000000e+00> : vector<1x16xf32>
    %776 = tpu.matmul %774, %775, %cst_259 {dimension_numbers = #tpu.dot_dimension_numbers<[1], [0], [0], [1], [0, 0, 1, 1], [], []>} : vector<1x8xbf16>, vector<8x16xbf16>, vector<1x16xf32> -> vector<1x16xf32>
    %777 = tpu.concatenate %758, %776 in 0 : vector<1x16xf32>, vector<1x16xf32> -> vector<2x16xf32>
    %c1296 = arith.constant 1296 : index
    %c0_260 = arith.constant 0 : index
    %778 = vector.load %arg1[%c1296, %c0_260] : memref<1456x128xbf16, #tpu.memory_space<vmem>>, vector<16x32xbf16>
    %779 = arith.truncf %777 : vector<2x16xf32> to vector<2x16xbf16>
    %cst_261 = arith.constant dense<0.000000e+00> : vector<2x32xf32>
    %780 = tpu.matmul %779, %778, %cst_261 {dimension_numbers = #tpu.dot_dimension_numbers<[1], [0], [0], [1], [0, 0, 1, 1], [], []>} : vector<2x16xbf16>, vector<16x32xbf16>, vector<2x32xf32> -> vector<2x32xf32>
    %c1312 = arith.constant 1312 : index
    %c0_262 = arith.constant 0 : index
    %781 = vector.load %arg1[%c1312, %c0_262] : memref<1456x128xbf16, #tpu.memory_space<vmem>>, vector<32x16xbf16>
    %782 = arith.truncf %699 : vector<1x32xf32> to vector<1x32xbf16>
    %cst_263 = arith.constant dense<0.000000e+00> : vector<1x16xf32>
    %783 = tpu.matmul %782, %781, %cst_263 {dimension_numbers = #tpu.dot_dimension_numbers<[1], [0], [0], [1], [0, 0, 1, 1], [], []>} : vector<1x32xbf16>, vector<32x16xbf16>, vector<1x16xf32> -> vector<1x16xf32>
    %c424 = arith.constant 424 : index
    %c0_264 = arith.constant 0 : index
    %784 = vector.load %arg2[%c424, %c0_264] : memref<496x128xf32, #tpu.memory_space<vmem>>, vector<1x16xf32>
    %785 = arith.addf %783, %784 : vector<1x16xf32>
    %c1344 = arith.constant 1344 : index
    %c0_265 = arith.constant 0 : index
    %786 = vector.load %arg1[%c1344, %c0_265] : memref<1456x128xbf16, #tpu.memory_space<vmem>>, vector<32x16xbf16>
    %787 = arith.truncf %723 : vector<16x32xf32> to vector<16x32xbf16>
    %cst_266 = arith.constant dense<0.000000e+00> : vector<16x16xf32>
    %788 = tpu.matmul %787, %786, %cst_266 {dimension_numbers = #tpu.dot_dimension_numbers<[1], [0], [0], [1], [0, 0, 1, 1], [], []>} : vector<16x32xbf16>, vector<32x16xbf16>, vector<16x16xf32> -> vector<16x16xf32>
    %c432_267 = arith.constant 432 : index
    %c0_268 = arith.constant 0 : index
    %789 = vector.load %arg2[%c432_267, %c0_268] : memref<496x128xf32, #tpu.memory_space<vmem>>, vector<1x16xf32>
    %790 = vector.broadcast %789 : vector<1x16xf32> to vector<16x16xf32>
    %791 = arith.addf %788, %790 : vector<16x16xf32>
    %c1376 = arith.constant 1376 : index
    %c0_269 = arith.constant 0 : index
    %792 = vector.load %arg1[%c1376, %c0_269] : memref<1456x128xbf16, #tpu.memory_space<vmem>>, vector<32x16xbf16>
    %793 = arith.truncf %723 : vector<16x32xf32> to vector<16x32xbf16>
    %cst_270 = arith.constant dense<0.000000e+00> : vector<16x16xf32>
    %794 = tpu.matmul %793, %792, %cst_270 {dimension_numbers = #tpu.dot_dimension_numbers<[1], [0], [0], [1], [0, 0, 1, 1], [], []>} : vector<16x32xbf16>, vector<32x16xbf16>, vector<16x16xf32> -> vector<16x16xf32>
    %c440 = arith.constant 440 : index
    %c0_271 = arith.constant 0 : index
    %795 = vector.load %arg2[%c440, %c0_271] : memref<496x128xf32, #tpu.memory_space<vmem>>, vector<1x16xf32>
    %796 = vector.broadcast %795 : vector<1x16xf32> to vector<16x16xf32>
    %797 = arith.addf %794, %796 : vector<16x16xf32>
    %798 = vector.extract_strided_slice %791 {offsets = [0, 0], sizes = [8, 16], strides = [1, 1]} : vector<16x16xf32> to vector<8x16xf32>
    %799 = arith.truncf %785 : vector<1x16xf32> to vector<1x16xbf16>
    %800 = arith.truncf %798 : vector<8x16xf32> to vector<8x16xbf16>
    %cst_272 = arith.constant dense<0.000000e+00> : vector<1x8xf32>
    %801 = tpu.matmul %799, %800, %cst_272 {dimension_numbers = #tpu.dot_dimension_numbers<[1], [1], [0], [0], [0, 0, 1, 0], [], []>} : vector<1x16xbf16>, vector<8x16xbf16>, vector<1x8xf32> -> vector<1x8xf32>
    %cst_273 = arith.constant dense<0xFF800000> : vector<1xf32>
    %802 = vector.multi_reduction <maximumf>, %801, %cst_273 [1] : vector<1x8xf32> to vector<1xf32>
    %803 = vector.shape_cast %802 : vector<1xf32> to vector<1x1xf32>
    %804 = vector.broadcast %803 : vector<1x1xf32> to vector<1x8xf32>
    %805 = arith.subf %801, %804 : vector<1x8xf32>
    %806 = math.exp %805 : vector<1x8xf32>
    %cst_274 = arith.constant dense<0.000000e+00> : vector<1xf32>
    %807 = vector.multi_reduction <add>, %806, %cst_274 [1] : vector<1x8xf32> to vector<1xf32>
    %808 = vector.shape_cast %807 : vector<1xf32> to vector<1x1xf32>
    %809 = tpu.reciprocal %808 {approx = true} : vector<1x1xf32> -> vector<1x1xf32>
    %810 = vector.broadcast %809 : vector<1x1xf32> to vector<1x8xf32>
    %811 = arith.mulf %806, %810 : vector<1x8xf32>
    %812 = vector.extract_strided_slice %797 {offsets = [0, 0], sizes = [8, 16], strides = [1, 1]} : vector<16x16xf32> to vector<8x16xf32>
    %813 = arith.truncf %811 : vector<1x8xf32> to vector<1x8xbf16>
    %814 = arith.truncf %812 : vector<8x16xf32> to vector<8x16xbf16>
    %cst_275 = arith.constant dense<0.000000e+00> : vector<1x16xf32>
    %815 = tpu.matmul %813, %814, %cst_275 {dimension_numbers = #tpu.dot_dimension_numbers<[1], [0], [0], [1], [0, 0, 1, 1], [], []>} : vector<1x8xbf16>, vector<8x16xbf16>, vector<1x16xf32> -> vector<1x16xf32>
    %816 = vector.extract_strided_slice %791 {offsets = [8, 0], sizes = [8, 16], strides = [1, 1]} : vector<16x16xf32> to vector<8x16xf32>
    %817 = arith.truncf %785 : vector<1x16xf32> to vector<1x16xbf16>
    %818 = arith.truncf %816 : vector<8x16xf32> to vector<8x16xbf16>
    %cst_276 = arith.constant dense<0.000000e+00> : vector<1x8xf32>
    %819 = tpu.matmul %817, %818, %cst_276 {dimension_numbers = #tpu.dot_dimension_numbers<[1], [1], [0], [0], [0, 0, 1, 0], [], []>} : vector<1x16xbf16>, vector<8x16xbf16>, vector<1x8xf32> -> vector<1x8xf32>
    %cst_277 = arith.constant dense<0xFF800000> : vector<1xf32>
    %820 = vector.multi_reduction <maximumf>, %819, %cst_277 [1] : vector<1x8xf32> to vector<1xf32>
    %821 = vector.shape_cast %820 : vector<1xf32> to vector<1x1xf32>
    %822 = vector.broadcast %821 : vector<1x1xf32> to vector<1x8xf32>
    %823 = arith.subf %819, %822 : vector<1x8xf32>
    %824 = math.exp %823 : vector<1x8xf32>
    %cst_278 = arith.constant dense<0.000000e+00> : vector<1xf32>
    %825 = vector.multi_reduction <add>, %824, %cst_278 [1] : vector<1x8xf32> to vector<1xf32>
    %826 = vector.shape_cast %825 : vector<1xf32> to vector<1x1xf32>
    %827 = tpu.reciprocal %826 {approx = true} : vector<1x1xf32> -> vector<1x1xf32>
    %828 = vector.broadcast %827 : vector<1x1xf32> to vector<1x8xf32>
    %829 = arith.mulf %824, %828 : vector<1x8xf32>
    %830 = vector.extract_strided_slice %797 {offsets = [8, 0], sizes = [8, 16], strides = [1, 1]} : vector<16x16xf32> to vector<8x16xf32>
    %831 = arith.truncf %829 : vector<1x8xf32> to vector<1x8xbf16>
    %832 = arith.truncf %830 : vector<8x16xf32> to vector<8x16xbf16>
    %cst_279 = arith.constant dense<0.000000e+00> : vector<1x16xf32>
    %833 = tpu.matmul %831, %832, %cst_279 {dimension_numbers = #tpu.dot_dimension_numbers<[1], [0], [0], [1], [0, 0, 1, 1], [], []>} : vector<1x8xbf16>, vector<8x16xbf16>, vector<1x16xf32> -> vector<1x16xf32>
    %834 = tpu.concatenate %815, %833 in 0 : vector<1x16xf32>, vector<1x16xf32> -> vector<2x16xf32>
    %c1408 = arith.constant 1408 : index
    %c0_280 = arith.constant 0 : index
    %835 = vector.load %arg1[%c1408, %c0_280] : memref<1456x128xbf16, #tpu.memory_space<vmem>>, vector<16x32xbf16>
    %836 = arith.truncf %834 : vector<2x16xf32> to vector<2x16xbf16>
    %cst_281 = arith.constant dense<0.000000e+00> : vector<2x32xf32>
    %837 = tpu.matmul %836, %835, %cst_281 {dimension_numbers = #tpu.dot_dimension_numbers<[1], [0], [0], [1], [0, 0, 1, 1], [], []>} : vector<2x16xbf16>, vector<16x32xbf16>, vector<2x32xf32> -> vector<2x32xf32>
    %838 = arith.addf %780, %837 : vector<2x32xf32>
    %c448 = arith.constant 448 : index
    %c0_282 = arith.constant 0 : index
    %839 = vector.load %arg2[%c448, %c0_282] : memref<496x128xf32, #tpu.memory_space<vmem>>, vector<1x32xf32>
    %840 = vector.broadcast %839 : vector<1x32xf32> to vector<2x32xf32>
    %841 = arith.addf %838, %840 : vector<2x32xf32>
    %c1424 = arith.constant 1424 : index
    %c0_283 = arith.constant 0 : index
    %842 = vector.load %arg1[%c1424, %c0_283] : memref<1456x128xbf16, #tpu.memory_space<vmem>>, vector<32x128xbf16>
    %843 = arith.truncf %841 : vector<2x32xf32> to vector<2x32xbf16>
    %cst_284 = arith.constant dense<0.000000e+00> : vector<2x128xf32>
    %844 = tpu.matmul %843, %842, %cst_284 {dimension_numbers = #tpu.dot_dimension_numbers<[1], [0], [0], [1], [0, 0, 1, 1], [], []>} : vector<2x32xbf16>, vector<32x128xbf16>, vector<2x128xf32> -> vector<2x128xf32>
    %c488 = arith.constant 488 : index
    %c0_285 = arith.constant 0 : index
    %845 = vector.load %arg2[%c488, %c0_285] : memref<496x128xf32, #tpu.memory_space<vmem>>, vector<1x128xf32>
    %846 = vector.broadcast %845 : vector<1x128xf32> to vector<2x128xf32>
    %847 = arith.addf %844, %846 : vector<2x128xf32>
    %c0_286 = arith.constant 0 : index
    %c0_287 = arith.constant 0 : index
    %848 = vector.load %arg3[%c0_286, %c0_287] : memref<2x128xf32, #tpu.memory_space<vmem>>, vector<2x128xf32>
    tpu.vector_store %arg3[%c0_286, %c0_287], %847 {strides = array<i32>} : memref<2x128xf32, #tpu.memory_space<vmem>>, vector<2x128xf32>,
    return
  }
}

</mosaic_0001>

<llo_original>
// kernel: forward.1
$region0: #{forward.1}
  #allocation0 [shape = 'u32[]', space=smem, size = 0x4, offset = 0x4, fixed_abs, tag = 'smem constant byte address 0x4 - core index']
  #allocation1 [shape = 'u32[72,128]{1,0:T(1,128)}', space=vmem, size = 0x9000, scoped, tag = 'internal scratch']
  %s0 = inlined_call_operand.vmem [shape: f32[32,48], index: 0, kind: input, shape index: {}]
  %s1 = inlined_call_operand.vmem [shape: bf16[1456,128], index: 1, kind: input, shape index: {}]
  %s2 = inlined_call_operand.vmem [shape: f32[496,128], index: 2, kind: input, shape index: {}]
  %s3 = inlined_call_operand.hbm [shape: f32[2,128], index: 3, kind: output, shape index: {}]
  %s4 = sld [smem:[#allocation0]]
  $region22: #{forward.1} parent=0
    _
  %s6 = ssub.s32 1, %s4
  %s7 = scalar_select 0, %s6, %s4
  $region1: #{forward.1} parent=0
    #allocation2 [shape = 'u8[1024]{0}', space=vmem, size = 0x400, scoped, tag = 'output window, operand 0, single buffered']
    #allocation3 [shape = 's32[1]{0}', space=sflag, size = 0x4, scoped, tag = 'scoped memory for forward.1']
    %8 = vsyncpa [#allocation3], 0
    // Predicated region
    $region2: #{forward.1} parent=1 // pred_check
      _
    $region3: #{forward.1} parent=1 // pred_check_branch
      %10 = sbr.rel (0) target = $region5
    $region4: #{forward.1} parent=1 // pred_region
      _
    $region5: #{forward.1} parent=1 // pred_fallthru
      _
    // Predicated region
    $region6: #{forward.1} parent=1 // pred_check
      _
    $region7: #{forward.1} parent=1 // pred_check_branch
      %12 = sbr.rel (0) target = $region9
    $region8: #{forward.1} parent=1 // pred_region
      _
    $region9: #{forward.1} parent=1 // pred_fallthru
      _
    // Predicated region
    $region10: #{forward.1} parent=1 // pred_check
      _
    $region11: #{forward.1} parent=1 // pred_check_branch
      %14 = sbr.rel (0) target = $region13
    $region12: #{forward.1} parent=1 // pred_region
      _
    $region13: #{forward.1} parent=1 // pred_fallthru
      _
    %v16 = vld [vmem:[%s0] sm:$0xff]
    %v17 = vld [vmem:[%s0 + $0x8] sm:$0xff]
    %v18 = vld [vmem:[%s0 + $0x10] sm:$0xff]
    %v19 = vld [vmem:[%s0 + $0x18] sm:$0xff]
    %v20 = vld [vmem:[%s2 + $0x8] sm:$0xff]
    %v21 = vld [vmem:[%s2 + $0x10] sm:$0xff]
    %v22 = vld [vmem:[%s1] sm:$0xf]
    %v23 = vld [vmem:[%s1 + $0x4] sm:$0xf]
    %v24 = vld [vmem:[%s1 + $0x8] sm:$0xf]
    %v25 = vld [vmem:[%s1 + $0xc] sm:$0xf]
    %v26 = vld [vmem:[%s1 + $0x10] sm:$0xf]
    %v27 = vld [vmem:[%s1 + $0x14] sm:$0xf]
    %v28 = vpack.c.bf16 %v17, %v16
    %v29 = vpack.c.bf16 %v19, %v18
    %v30 = vld [vmem:[%s2] sm:$0x1]
    %v31 = vperm.slane %v30, 0
    %v38 = vunpack.c.l.b16 %v22
    %v39 = vunpack.c.l.b16 %v23
    %v40 = vunpack.c.l.b16 %v24
    %v41 = vunpack.c.l.b16 %v25
    %v42 = vunpack.c.l.b16 %v26
    %v43 = vunpack.c.l.b16 %v27
    %v44 = vpack.c.b16 %v39, %v38
    %v45 = vpack.c.b16 %v41, %v40
    %v46 = vpack.c.b16 %v43, %v42
    %vm50 = vcmask 392192
    %v52 = vsel %vm50, %v28, 0
    %v55 = vsel %vm50, %v29, 0
    %57 = vmatpush.bf16.msra.mxu0 0
    %58 = vmatpush.bf16.msra.mxu0 0
    %59 = vmatpush.bf16.msra.mxu0 0
    %60 = vmatpush.bf16.msra.mxu0 0
    %61 = vmatpush.bf16.msra.mxu0 0
    %62 = vmatpush.bf16.msra.mxu0 %v46
    %63 = vmatpush.bf16.msra.mxu0 %v45
    %64 = vmatpush.bf16.msra.mxu0 %v44
    %65 = vmatmul.bf16.gmra.mxu0 %v52
    %v66 = vpop.f32.mrf.mxu0
    %v67 = vadd.f32 %v31, %v66
    %v68 = vpop.f32.mrf.mxu0
    %v69 = vadd.f32 %v31, %v68
    %70 = vmatmul.bf16.gmra.mxu0 %v55
    %v71 = vpop.f32.mrf.mxu0
    %v72 = vadd.f32 %v31, %v71
    %v73 = vpop.f32.mrf.mxu0
    %v74 = vadd.f32 %v31, %v73
    %75 = vdwg.mxu0
    %v76 = vadd.f32 %v67, %v20
    %v77 = vadd.f32 %v69, %v21
    %v78 = vadd.f32 %v72, %v20
    %v79 = vadd.f32 %v74, %v21
    %v80 = vld [vmem:[%s2 + $0x20] sm:$0xff]
    %vm81 = vcmask 261120
    %v82 = vsel %vm81, %v80, 0.0
    %83 = vadd.xlane.f32.xlu0 %v82
    %v84 = vpop.xlane.xlu0 %83
    %v85 = vrcp.pop 32.0
    %v86 = vmul.f32 32.0, %v85
    %v87 = vsub.f32 1.0, %v86
    %v88 = vmul.f32 %v85, %v87
    %v89 = vadd.f32 %v85, %v88
    %vm90 = vweird.f32 %v85
    %v91 = vsel %vm90, %v85, %v89
    %v92 = vmul.f32 %v84, %v91
    %v93 = vsub.f32 %v80, %v92
    %v94 = vmul.f32 %v93, %v93
    %v95 = vsel %vm81, %v94, 0.0
    %96 = vadd.xlane.f32.xlu0 %v95
    %v97 = vpop.xlane.xlu0 %96
    %v98 = vmul.f32 %v97, %v91
    %v99 = vadd.f32 %v98, 1e-05
    %v100 = vrsqrt.pop %v99
    %v101 = vmul.f32 %v100, %v99
    %v102 = vmul.f32 %v101, %v100
    %v103 = vmul.f32 0.5, %v102
    %v104 = vsub.f32 1.5, %v103
    %v105 = vmul.f32 %v100, %v104
    %vm106 = vweird.f32 %v99
    %vm107 = vweird.f32 %v100
    %vm108 = vmor %vm106, %vm107
    %v109 = vsel %vm108, %v100, %v105
    %v110 = vmul.f32 %v93, %v109
    %v111 = vld [vmem:[%s2 + $0x60] sm:$0x1]
    %v112 = vperm.slane %v111, 0
    %v113 = vmul.f32 %v110, %v112
    %v114 = vld [vmem:[%s2 + $0x68] sm:$0x1]
    %v115 = vperm.slane %v114, 0
    %v116 = vadd.f32 %v113, %v115
    %v117 = vsel %vm81, %v76, 0.0
    %118 = vadd.xlane.f32.xlu0 %v117
    %v119 = vpop.xlane.xlu0 %118
    %v120 = vsel %vm81, %v77, 0.0
    %121 = vadd.xlane.f32.xlu0 %v120
    %v122 = vpop.xlane.xlu0 %121
    %v123 = vsel %vm81, %v78, 0.0
    %124 = vadd.xlane.f32.xlu0 %v123
    %v125 = vpop.xlane.xlu0 %124
    %v126 = vsel %vm81, %v79, 0.0
    %127 = vadd.xlane.f32.xlu0 %v126
    %v128 = vpop.xlane.xlu0 %127
    %v129 = vmul.f32 %v119, %v91
    %v130 = vmul.f32 %v122, %v91
    %v131 = vmul.f32 %v125, %v91
    %v132 = vmul.f32 %v128, %v91
    %v133 = vsub.f32 %v76, %v129
    %v134 = vsub.f32 %v77, %v130
    %v135 = vsub.f32 %v78, %v131
    %v136 = vsub.f32 %v79, %v132
    %v137 = vmul.f32 %v133, %v133
    %v138 = vmul.f32 %v134, %v134
    %v139 = vmul.f32 %v135, %v135
    %v140 = vmul.f32 %v136, %v136
    %v141 = vsel %vm81, %v137, 0.0
    %142 = vadd.xlane.f32.xlu0 %v141
    %v143 = vpop.xlane.xlu0 %142
    %v144 = vsel %vm81, %v138, 0.0
    %145 = vadd.xlane.f32.xlu0 %v144
    %v146 = vpop.xlane.xlu0 %145
    %v147 = vsel %vm81, %v139, 0.0
    %148 = vadd.xlane.f32.xlu0 %v147
    %v149 = vpop.xlane.xlu0 %148
    %v150 = vsel %vm81, %v140, 0.0
    %151 = vadd.xlane.f32.xlu0 %v150
    %v152 = vpop.xlane.xlu0 %151
    %v153 = vmul.f32 %v143, %v91
    %v154 = vmul.f32 %v146, %v91
    %v155 = vmul.f32 %v149, %v91
    %v156 = vmul.f32 %v152, %v91
    %v157 = vadd.f32 %v153, 1e-05
    %v158 = vadd.f32 %v154, 1e-05
    %v159 = vadd.f32 %v155, 1e-05
    %v160 = vadd.f32 %v156, 1e-05
    %v161 = vrsqrt.pop %v157
    %v162 = vmul.f32 %v161, %v157
    %v163 = vmul.f32 %v162, %v161
    %v164 = vmul.f32 0.5, %v163
    %v165 = vsub.f32 1.5, %v164
    %v166 = vmul.f32 %v161, %v165
    %vm167 = vweird.f32 %v157
    %vm168 = vweird.f32 %v161
    %vm169 = vmor %vm167, %vm168
    %v170 = vsel %vm169, %v161, %v166
    %v171 = vrsqrt.pop %v158
    %v172 = vmul.f32 %v171, %v158
    %v173 = vmul.f32 %v172, %v171
    %v174 = vmul.f32 0.5, %v173
    %v175 = vsub.f32 1.5, %v174
    %v176 = vmul.f32 %v171, %v175
    %vm177 = vweird.f32 %v158
    %vm178 = vweird.f32 %v171
    %vm179 = vmor %vm177, %vm178
    %v180 = vsel %vm179, %v171, %v176
    %v181 = vrsqrt.pop %v159
    %v182 = vmul.f32 %v181, %v159
    %v183 = vmul.f32 %v182, %v181
    %v184 = vmul.f32 0.5, %v183
    %v185 = vsub.f32 1.5, %v184
    %v186 = vmul.f32 %v181, %v185
    %vm187 = vweird.f32 %v159
    %vm188 = vweird.f32 %v181
    %vm189 = vmor %vm187, %vm188
    %v190 = vsel %vm189, %v181, %v186
    %v191 = vrsqrt.pop %v160
    %v192 = vmul.f32 %v191, %v160
    %v193 = vmul.f32 %v192, %v191
    %v194 = vmul.f32 0.5, %v193
    %v195 = vsub.f32 1.5, %v194
    %v196 = vmul.f32 %v191, %v195
    %vm197 = vweird.f32 %v160
    %vm198 = vweird.f32 %v191
    %vm199 = vmor %vm197, %vm198
    %v200 = vsel %vm199, %v191, %v196
    %v201 = vmul.f32 %v133, %v170
    %v202 = vmul.f32 %v134, %v180
    %v203 = vmul.f32 %v135, %v190
    %v204 = vmul.f32 %v136, %v200
    %v205 = vld [vmem:[%s2 + $0x70] sm:$0x1]
    %v206 = vperm.slane %v205, 0
    %v207 = vmul.f32 %v201, %v206
    %v208 = vmul.f32 %v202, %v206
    %v209 = vmul.f32 %v203, %v206
    %v210 = vmul.f32 %v204, %v206
    %v211 = vld [vmem:[%s2 + $0x78] sm:$0x1]
    %v212 = vperm.slane %v211, 0
    %v213 = vadd.f32 %v207, %v212
    %v214 = vadd.f32 %v208, %v212
    %v215 = vadd.f32 %v209, %v212
    %v216 = vadd.f32 %v210, %v212
    %v217 = vld [vmem:[%s1 + $0x18] sm:$0xf]
    %v218 = vld [vmem:[%s1 + $0x1c] sm:$0xf]
    %v219 = vld [vmem:[%s1 + $0x20] sm:$0xf]
    %v220 = vld [vmem:[%s1 + $0x24] sm:$0xf]
    %v221 = vpack.c.bf16 %v116, %v116
    %v222 = vld [vmem:[%s2 + $0x28] sm:$0x1]
    %v223 = vperm.slane %v222, 0
    %v228 = vunpack.c.l.b16 %v217
    %v229 = vunpack.c.l.b16 %v218
    %v230 = vunpack.c.l.b16 %v219
    %v231 = vunpack.c.l.b16 %v220
    %v232 = vpack.c.b16 %v229, %v228
    %v233 = vpack.c.b16 %v231, %v230
    %v237 = vsel %vm81, %v221, 0
    %239 = vmatpush.bf16.msra.mxu0 0
    %240 = vmatpush.bf16.msra.mxu0 0
    %241 = vmatpush.bf16.msra.mxu0 0
    %242 = vmatpush.bf16.msra.mxu0 0
    %243 = vmatpush.bf16.msra.mxu0 0
    %244 = vmatpush.bf16.msra.mxu0 0
    %245 = vmatpush.bf16.msra.mxu0 %v233
    %246 = vmatpush.bf16.msra.mxu0 %v232
    %247 = vmatmul.bf16.gmra.mxu0 %v237
    %v248 = vpop.f32.mrf.mxu0
    %v249 = vadd.f32 %v223, %v248
    %v250 = vpop.f32.mrf.mxu0
    %251 = vdwg.mxu0
    %v252 = vld [vmem:[%s1 + $0x28] sm:$0xf]
    %v253 = vld [vmem:[%s1 + $0x2c] sm:$0xf]
    %v254 = vld [vmem:[%s1 + $0x30] sm:$0xf]
    %v255 = vld [vmem:[%s1 + $0x34] sm:$0xf]
    %v256 = vpack.c.bf16 %v214, %v213
    %v257 = vpack.c.bf16 %v216, %v215
    %v258 = vld [vmem:[%s2 + $0x30] sm:$0x1]
    %v259 = vperm.slane %v258, 0
    %v264 = vunpack.c.l.b16 %v252
    %v265 = vunpack.c.l.b16 %v253
    %v266 = vunpack.c.l.b16 %v254
    %v267 = vunpack.c.l.b16 %v255
    %v268 = vpack.c.b16 %v265, %v264
    %v269 = vpack.c.b16 %v267, %v266
    %v273 = vsel %vm81, %v256, 0
    %v276 = vsel %vm81, %v257, 0
    %278 = vmatpush.bf16.msra.mxu0 0
    %279 = vmatpush.bf16.msra.mxu0 0
    %280 = vmatpush.bf16.msra.mxu0 0
    %281 = vmatpush.bf16.msra.mxu0 0
    %282 = vmatpush.bf16.msra.mxu0 0
    %283 = vmatpush.bf16.msra.mxu0 0
    %284 = vmatpush.bf16.msra.mxu0 %v269
    %285 = vmatpush.bf16.msra.mxu0 %v268
    %286 = vmatmul.bf16.gmra.mxu0 %v273
    %v287 = vpop.f32.mrf.mxu0
    %v288 = vadd.f32 %v259, %v287
    %v289 = vpop.f32.mrf.mxu0
    %v290 = vadd.f32 %v259, %v289
    %291 = vmatmul.bf16.gmra.mxu0 %v276
    %v292 = vpop.f32.mrf.mxu0
    %v293 = vadd.f32 %v259, %v292
    %v294 = vpop.f32.mrf.mxu0
    %v295 = vadd.f32 %v259, %v294
    %296 = vdwg.mxu0
    %v297 = vld [vmem:[%s1 + $0x38] sm:$0xf]
    %v298 = vld [vmem:[%s1 + $0x3c] sm:$0xf]
    %v299 = vld [vmem:[%s1 + $0x40] sm:$0xf]
    %v300 = vld [vmem:[%s1 + $0x44] sm:$0xf]
    %v301 = vld [vmem:[%s2 + $0x38] sm:$0x1]
    %v302 = vperm.slane %v301, 0
    %v307 = vunpack.c.l.b16 %v297
    %v308 = vunpack.c.l.b16 %v298
    %v309 = vunpack.c.l.b16 %v299
    %v310 = vunpack.c.l.b16 %v300
    %v311 = vpack.c.b16 %v308, %v307
    %v312 = vpack.c.b16 %v310, %v309
    %315 = vmatpush.bf16.msra.mxu0 0
    %316 = vmatpush.bf16.msra.mxu0 0
    %317 = vmatpush.bf16.msra.mxu0 0
    %318 = vmatpush.bf16.msra.mxu0 0
    %319 = vmatpush.bf16.msra.mxu0 0
    %320 = vmatpush.bf16.msra.mxu0 0
    %321 = vmatpush.bf16.msra.mxu0 %v312
    %322 = vmatpush.bf16.msra.mxu0 %v311
    %323 = vmatmul.bf16.gmra.mxu0 %v273
    %v324 = vpop.f32.mrf.mxu0
    %v325 = vadd.f32 %v302, %v324
    %v326 = vpop.f32.mrf.mxu0
    %v327 = vadd.f32 %v302, %v326
    %328 = vmatmul.bf16.gmra.mxu0 %v276
    %v329 = vpop.f32.mrf.mxu0
    %v330 = vadd.f32 %v302, %v329
    %v331 = vpop.f32.mrf.mxu0
    %v332 = vadd.f32 %v302, %v331
    %333 = vdwg.mxu0
    %v334 = vpack.c.bf16 %v249, %v249
    %v335 = vpack.c.bf16 %v290, %v288
    %vm336 = vcmask 130048
    %v338 = vsel %vm336, %v334, 0
    %v341 = vsel %vm336, %v335, 0
    %343 = vmatpush.bf16.xpose.msra.mxu0 0
    %344 = vmatpush.bf16.xpose.msra.mxu0 0
    %345 = vmatpush.bf16.xpose.msra.mxu0 0
    %346 = vmatpush.bf16.xpose.msra.mxu0 0
    %347 = vmatpush.bf16.xpose.msra.mxu0 0
    %348 = vmatpush.bf16.xpose.msra.mxu0 0
    %349 = vmatpush.bf16.xpose.msra.mxu0 0
    %350 = vmatpush.bf16.xpose.msra.mxu0 %v341
    %351 = vmatmul.bf16.gmra.mxu0 %v338
    %v352 = vpop.f32.mrf.mxu0
    %v353 = vadd.f32 0.0, %v352
    %v354 = vpop.f32.mrf.mxu0
    %355 = vdwg.mxu0
    %v356 = vsel %vm336, %v353, -inf
    %357 = vmax.xlane.f32.xlu0 %v356
    %v358 = vpop.xlane.xlu0 %357
    %v359 = vsub.f32 %v353, %v358
    %v360 = vmul.f32 %v359, 1.442695
    %v361 = vpow.pop %v360
    %v362 = vsel %vm336, %v361, 0.0
    %363 = vadd.xlane.f32.xlu0 %v362
    %v364 = vpop.xlane.xlu0 %363
    %v365 = vrcp.pop %v364
    %v366 = vmul.f32 %v361, %v365
    %v367 = vpack.c.bf16 %v366, %v366
    %v368 = vpack.c.bf16 %v327, %v325
    %v370 = vsel %vm336, %v367, 0
    %372 = vmatpush.bf16.msra.mxu0 0
    %373 = vmatpush.bf16.msra.mxu0 0
    %374 = vmatpush.bf16.msra.mxu0 0
    %375 = vmatpush.bf16.msra.mxu0 0
    %376 = vmatpush.bf16.msra.mxu0 0
    %377 = vmatpush.bf16.msra.mxu0 0
    %378 = vmatpush.bf16.msra.mxu0 0
    %379 = vmatpush.bf16.msra.mxu0 %v368
    %380 = vmatmul.bf16.gmra.mxu0 %v370
    %v381 = vpop.f32.mrf.mxu0
    %v382 = vadd.f32 0.0, %v381
    %v383 = vpop.f32.mrf.mxu0
    %384 = vdwg.mxu0
    %v385 = vpack.c.bf16 %v295, %v293
    %v387 = vsel %vm336, %v385, 0
    %389 = vmatpush.bf16.xpose.msra.mxu0 0
    %390 = vmatpush.bf16.xpose.msra.mxu0 0
    %391 = vmatpush.bf16.xpose.msra.mxu0 0
    %392 = vmatpush.bf16.xpose.msra.mxu0 0
    %393 = vmatpush.bf16.xpose.msra.mxu0 0
    %394 = vmatpush.bf16.xpose.msra.mxu0 0
    %395 = vmatpush.bf16.xpose.msra.mxu0 0
    %396 = vmatpush.bf16.xpose.msra.mxu0 %v387
    %397 = vmatmul.bf16.gmra.mxu0 %v338
    %v398 = vpop.f32.mrf.mxu0
    %v399 = vadd.f32 0.0, %v398
    %v400 = vpop.f32.mrf.mxu0
    %401 = vdwg.mxu0
    %v402 = vsel %vm336, %v399, -inf
    %403 = vmax.xlane.f32.xlu0 %v402
    %v404 = vpop.xlane.xlu0 %403
    %v405 = vsub.f32 %v399, %v404
    %v406 = vmul.f32 %v405, 1.442695
    %v407 = vpow.pop %v406
    %v408 = vsel %vm336, %v407, 0.0
    %409 = vadd.xlane.f32.xlu0 %v408
    %v410 = vpop.xlane.xlu0 %409
    %v411 = vrcp.pop %v410
    %v412 = vmul.f32 %v407, %v411
    %v413 = vpack.c.bf16 %v412, %v412
    %v414 = vpack.c.bf16 %v332, %v330
    %v416 = vsel %vm336, %v413, 0
    %418 = vmatpush.bf16.msra.mxu0 0
    %419 = vmatpush.bf16.msra.mxu0 0
    %420 = vmatpush.bf16.msra.mxu0 0
    %421 = vmatpush.bf16.msra.mxu0 0
    %422 = vmatpush.bf16.msra.mxu0 0
    %423 = vmatpush.bf16.msra.mxu0 0
    %424 = vmatpush.bf16.msra.mxu0 0
    %425 = vmatpush.bf16.msra.mxu0 %v414
    %426 = vmatmul.bf16.gmra.mxu0 %v416
    %v427 = vpop.f32.mrf.mxu0
    %v428 = vadd.f32 0.0, %v427
    %v429 = vpop.f32.mrf.mxu0
    %430 = vdwg.mxu0
    %v431 = vld [vmem:[%s1 + $0x48] sm:$0xf]
    %v432 = vld [vmem:[%s1 + $0x4c] sm:$0xf]
    %v433 = vpack.c.bf16 %v428, %v382
    %v434 = vld [vmem:[%s1 + $0x50] sm:$0xf]
    %v435 = vld [vmem:[%s1 + $0x54] sm:$0xf]
    %v436 = vld [vmem:[%s1 + $0x58] sm:$0xf]
    %v437 = vld [vmem:[%s1 + $0x5c] sm:$0xf]
    %v438 = vld [vmem:[%s2 + $0x40] sm:$0x1]
    %v439 = vperm.slane %v438, 0
    %v444 = vunpack.c.l.b16 %v434
    %v445 = vunpack.c.l.b16 %v435
    %v446 = vunpack.c.l.b16 %v436
    %v447 = vunpack.c.l.b16 %v437
    %v448 = vpack.c.b16 %v445, %v444
    %v449 = vpack.c.b16 %v447, %v446
    %452 = vmatpush.bf16.msra.mxu0 0
    %453 = vmatpush.bf16.msra.mxu0 0
    %454 = vmatpush.bf16.msra.mxu0 0
    %455 = vmatpush.bf16.msra.mxu0 0
    %456 = vmatpush.bf16.msra.mxu0 0
    %457 = vmatpush.bf16.msra.mxu0 0
    %458 = vmatpush.bf16.msra.mxu0 %v449
    %459 = vmatpush.bf16.msra.mxu0 %v448
    %460 = vmatmul.bf16.gmra.mxu0 %v237
    %v461 = vpop.f32.mrf.mxu0
    %v462 = vadd.f32 %v439, %v461
    %v463 = vpop.f32.mrf.mxu0
    %464 = vdwg.mxu0
    %v465 = vld [vmem:[%s1 + $0x60] sm:$0xf]
    %v466 = vld [vmem:[%s1 + $0x64] sm:$0xf]
    %v467 = vld [vmem:[%s1 + $0x68] sm:$0xf]
    %v468 = vld [vmem:[%s1 + $0x6c] sm:$0xf]
    %v469 = vld [vmem:[%s2 + $0x48] sm:$0x1]
    %v470 = vperm.slane %v469, 0
    %v475 = vunpack.c.l.b16 %v465
    %v476 = vunpack.c.l.b16 %v466
    %v477 = vunpack.c.l.b16 %v467
    %v478 = vunpack.c.l.b16 %v468
    %v479 = vpack.c.b16 %v476, %v475
    %v480 = vpack.c.b16 %v478, %v477
    %483 = vmatpush.bf16.msra.mxu0 0
    %484 = vmatpush.bf16.msra.mxu0 0
    %485 = vmatpush.bf16.msra.mxu0 0
    %486 = vmatpush.bf16.msra.mxu0 0
    %487 = vmatpush.bf16.msra.mxu0 0
    %488 = vmatpush.bf16.msra.mxu0 0
    %489 = vmatpush.bf16.msra.mxu0 %v480
    %490 = vmatpush.bf16.msra.mxu0 %v479
    %491 = vmatmul.bf16.gmra.mxu0 %v273
    %v492 = vpop.f32.mrf.mxu0
    %v493 = vadd.f32 %v470, %v492
    %v494 = vpop.f32.mrf.mxu0
    %v495 = vadd.f32 %v470, %v494
    %496 = vmatmul.bf16.gmra.mxu0 %v276
    %v497 = vpop.f32.mrf.mxu0
    %v498 = vadd.f32 %v470, %v497
    %v499 = vpop.f32.mrf.mxu0
    %v500 = vadd.f32 %v470, %v499
    %501 = vdwg.mxu0
    %v502 = vld [vmem:[%s1 + $0x70] sm:$0xf]
    %v503 = vld [vmem:[%s1 + $0x74] sm:$0xf]
    %v504 = vld [vmem:[%s1 + $0x78] sm:$0xf]
    %v505 = vld [vmem:[%s1 + $0x7c] sm:$0xf]
    %v506 = vld [vmem:[%s2 + $0x50] sm:$0x1]
    %v507 = vperm.slane %v506, 0
    %v512 = vunpack.c.l.b16 %v502
    %v513 = vunpack.c.l.b16 %v503
    %v514 = vunpack.c.l.b16 %v504
    %v515 = vunpack.c.l.b16 %v505
    %v516 = vpack.c.b16 %v513, %v512
    %v517 = vpack.c.b16 %v515, %v514
    %520 = vmatpush.bf16.msra.mxu0 0
    %521 = vmatpush.bf16.msra.mxu0 0
    %522 = vmatpush.bf16.msra.mxu0 0
    %523 = vmatpush.bf16.msra.mxu0 0
    %524 = vmatpush.bf16.msra.mxu0 0
    %525 = vmatpush.bf16.msra.mxu0 0
    %526 = vmatpush.bf16.msra.mxu0 %v517
    %527 = vmatpush.bf16.msra.mxu0 %v516
    %528 = vmatmul.bf16.gmra.mxu0 %v273
    %v529 = vpop.f32.mrf.mxu0
    %v530 = vadd.f32 %v507, %v529
    %v531 = vpop.f32.mrf.mxu0
    %v532 = vadd.f32 %v507, %v531
    %533 = vmatmul.bf16.gmra.mxu0 %v276
    %v534 = vpop.f32.mrf.mxu0
    %v535 = vadd.f32 %v507, %v534
    %v536 = vpop.f32.mrf.mxu0
    %v537 = vadd.f32 %v507, %v536
    %538 = vdwg.mxu0
    %v539 = vpack.c.bf16 %v462, %v462
    %v540 = vpack.c.bf16 %v495, %v493
    %v542 = vsel %vm336, %v539, 0
    %v545 = vsel %vm336, %v540, 0
    %547 = vmatpush.bf16.xpose.msra.mxu0 0
    %548 = vmatpush.bf16.xpose.msra.mxu0 0
    %549 = vmatpush.bf16.xpose.msra.mxu0 0
    %550 = vmatpush.bf16.xpose.msra.mxu0 0
    %551 = vmatpush.bf16.xpose.msra.mxu0 0
    %552 = vmatpush.bf16.xpose.msra.mxu0 0
    %553 = vmatpush.bf16.xpose.msra.mxu0 0
    %554 = vmatpush.bf16.xpose.msra.mxu0 %v545
    %555 = vmatmul.bf16.gmra.mxu0 %v542
    %v556 = vpop.f32.mrf.mxu0
    %v557 = vadd.f32 0.0, %v556
    %v558 = vpop.f32.mrf.mxu0
    %559 = vdwg.mxu0
    %v560 = vsel %vm336, %v557, -inf
    %561 = vmax.xlane.f32.xlu0 %v560
    %v562 = vpop.xlane.xlu0 %561
    %v563 = vsub.f32 %v557, %v562
    %v564 = vmul.f32 %v563, 1.442695
    %v565 = vpow.pop %v564
    %v566 = vsel %vm336, %v565, 0.0
    %567 = vadd.xlane.f32.xlu0 %v566
    %v568 = vpop.xlane.xlu0 %567
    %v569 = vrcp.pop %v568
    %v570 = vmul.f32 %v565, %v569
    %v571 = vpack.c.bf16 %v570, %v570
    %v572 = vpack.c.bf16 %v532, %v530
    %v574 = vsel %vm336, %v571, 0
    %576 = vmatpush.bf16.msra.mxu0 0
    %577 = vmatpush.bf16.msra.mxu0 0
    %578 = vmatpush.bf16.msra.mxu0 0
    %579 = vmatpush.bf16.msra.mxu0 0
    %580 = vmatpush.bf16.msra.mxu0 0
    %581 = vmatpush.bf16.msra.mxu0 0
    %582 = vmatpush.bf16.msra.mxu0 0
    %583 = vmatpush.bf16.msra.mxu0 %v572
    %584 = vmatmul.bf16.gmra.mxu0 %v574
    %v585 = vpop.f32.mrf.mxu0
    %v586 = vadd.f32 0.0, %v585
    %v587 = vpop.f32.mrf.mxu0
    %588 = vdwg.mxu0
    %v589 = vpack.c.bf16 %v500, %v498
    %v591 = vsel %vm336, %v589, 0
    %593 = vmatpush.bf16.xpose.msra.mxu0 0
    %594 = vmatpush.bf16.xpose.msra.mxu0 0
    %595 = vmatpush.bf16.xpose.msra.mxu0 0
    %596 = vmatpush.bf16.xpose.msra.mxu0 0
    %597 = vmatpush.bf16.xpose.msra.mxu0 0
    %598 = vmatpush.bf16.xpose.msra.mxu0 0
    %599 = vmatpush.bf16.xpose.msra.mxu0 0
    %600 = vmatpush.bf16.xpose.msra.mxu0 %v591
    %601 = vmatmul.bf16.gmra.mxu0 %v542
    %v602 = vpop.f32.mrf.mxu0
    %v603 = vadd.f32 0.0, %v602
    %v604 = vpop.f32.mrf.mxu0
    %605 = vdwg.mxu0
    %v606 = vsel %vm336, %v603, -inf
    %607 = vmax.xlane.f32.xlu0 %v606
    %v608 = vpop.xlane.xlu0 %607
    %v609 = vsub.f32 %v603, %v608
    %v610 = vmul.f32 %v609, 1.442695
    %v611 = vpow.pop %v610
    %v612 = vsel %vm336, %v611, 0.0
    %613 = vadd.xlane.f32.xlu0 %v612
    %v614 = vpop.xlane.xlu0 %613
    %v615 = vrcp.pop %v614
    %v616 = vmul.f32 %v611, %v615
    %v617 = vpack.c.bf16 %v616, %v616
    %v618 = vpack.c.bf16 %v537, %v535
    %v620 = vsel %vm336, %v617, 0
    %622 = vmatpush.bf16.msra.mxu0 0
    %623 = vmatpush.bf16.msra.mxu0 0
    %624 = vmatpush.bf16.msra.mxu0 0
    %625 = vmatpush.bf16.msra.mxu0 0
    %626 = vmatpush.bf16.msra.mxu0 0
    %627 = vmatpush.bf16.msra.mxu0 0
    %628 = vmatpush.bf16.msra.mxu0 0
    %629 = vmatpush.bf16.msra.mxu0 %v618
    %630 = vmatmul.bf16.gmra.mxu0 %v620
    %v631 = vpop.f32.mrf.mxu0
    %v632 = vadd.f32 0.0, %v631
    %v633 = vpop.f32.mrf.mxu0
    %634 = vdwg.mxu0
    %v635 = vld [vmem:[%s1 + $0x80] sm:$0xf]
    %v636 = vld [vmem:[%s1 + $0x84] sm:$0xf]
    %v637 = vpack.c.bf16 %v632, %v586
    %v640 = vunpack.c.l.b16 %v635
    %v641 = vunpack.c.l.b16 %v636
    %v642 = vpack.c.b16 %v641, %v640
    %v645 = vsel %vm336, %v637, 0
    %647 = vmatpush.bf16.msra.mxu0 0
    %648 = vmatpush.bf16.msra.mxu0 0
    %649 = vmatpush.bf16.msra.mxu0 0
    %650 = vmatpush.bf16.msra.mxu0 0
    %651 = vmatpush.bf16.msra.mxu0 0
    %652 = vmatpush.bf16.msra.mxu0 0
    %653 = vmatpush.bf16.msra.mxu0 0
    %654 = vmatpush.bf16.msra.mxu0 %v642
    %655 = vmatmul.bf16.gmra.mxu0 %v645
    %v656 = vpop.f32.mrf.mxu0
    %v657 = vadd.f32 0.0, %v656
    %v658 = vpop.f32.mrf.mxu0
    %v659 = vadd.f32 0.0, %v658
    %660 = vdwg.mxu0
    %v663 = vunpack.c.l.b16 %v431
    %v664 = vunpack.c.l.b16 %v432
    %v665 = vpack.c.b16 %v664, %v663
    %v668 = vsel %vm336, %v433, 0
    %670 = vmatpush.bf16.msra.mxu0 0
    %671 = vmatpush.bf16.msra.mxu0 0
    %672 = vmatpush.bf16.msra.mxu0 0
    %673 = vmatpush.bf16.msra.mxu0 0
    %674 = vmatpush.bf16.msra.mxu0 0
    %675 = vmatpush.bf16.msra.mxu0 0
    %676 = vmatpush.bf16.msra.mxu0 0
    %677 = vmatpush.bf16.msra.mxu0 %v665
    %678 = vmatmul.bf16.gmra.mxu0 %v668
    %v679 = vpop.f32.mrf.mxu0
    %v680 = vadd.f32 %v657, %v679
    %v681 = vpop.f32.mrf.mxu0
    %v682 = vadd.f32 %v659, %v681
    %683 = vdwg.mxu0
    %v684 = vld [vmem:[%s2 + $0x58] sm:$0x1]
    %v685 = vperm.slane %v684, 0
    %v686 = vadd.f32 %v680, %v685
    %v687 = vadd.f32 %v682, %v685
    %v688 = vadd.f32 %v80, %v686
    %v689 = vadd.f32 %v80, %v687
    %v690 = vsel %vm81, %v688, 0.0
    %691 = vadd.xlane.f32.xlu0 %v690
    %v692 = vpop.xlane.xlu0 %691
    %v693 = vsel %vm81, %v689, 0.0
    %694 = vadd.xlane.f32.xlu0 %v693
    %v695 = vpop.xlane.xlu0 %694
    %v696 = vmul.f32 %v692, %v91
    %v697 = vmul.f32 %v695, %v91
    %v698 = vsub.f32 %v688, %v696
    %v699 = vsub.f32 %v689, %v697
    %v700 = vmul.f32 %v698, %v698
    %v701 = vmul.f32 %v699, %v699
    %v702 = vsel %vm81, %v700, 0.0
    %703 = vadd.xlane.f32.xlu0 %v702
    %v704 = vpop.xlane.xlu0 %703
    %v705 = vsel %vm81, %v701, 0.0
    %706 = vadd.xlane.f32.xlu0 %v705
    %v707 = vpop.xlane.xlu0 %706
    %v708 = vmul.f32 %v704, %v91
    %v709 = vmul.f32 %v707, %v91
    %v710 = vadd.f32 %v708, 1e-05
    %v711 = vadd.f32 %v709, 1e-05
    %v712 = vrsqrt.pop %v710
    %v713 = vmul.f32 %v712, %v710
    %v714 = vmul.f32 %v713, %v712
    %v715 = vmul.f32 0.5, %v714
    %v716 = vsub.f32 1.5, %v715
    %v717 = vmul.f32 %v712, %v716
    %vm718 = vweird.f32 %v710
    %vm719 = vweird.f32 %v712
    %vm720 = vmor %vm718, %vm719
    %v721 = vsel %vm720, %v712, %v717
    %v722 = vrsqrt.pop %v711
    %v723 = vmul.f32 %v722, %v711
    %v724 = vmul.f32 %v723, %v722
    %v725 = vmul.f32 0.5, %v724
    %v726 = vsub.f32 1.5, %v725
    %v727 = vmul.f32 %v722, %v726
    %vm728 = vweird.f32 %v711
    %vm729 = vweird.f32 %v722
    %vm730 = vmor %vm728, %vm729
    %v731 = vsel %vm730, %v722, %v727
    %v732 = vmul.f32 %v698, %v721
    %v733 = vmul.f32 %v699, %v731
    %v734 = vld [vmem:[%s2 + $0x80] sm:$0x1]
    %v735 = vperm.slane %v734, 0
    %v736 = vmul.f32 %v732, %v735
    %v737 = vmul.f32 %v733, %v735
    %v738 = vld [vmem:[%s2 + $0x88] sm:$0x1]
    %v739 = vperm.slane %v738, 0
    %v740 = vadd.f32 %v736, %v739
    %v741 = vadd.f32 %v737, %v739
    %v742 = vld [vmem:[%s1 + $0x88] sm:$0xf]
    %v743 = vld [vmem:[%s1 + $0x8c] sm:$0xf]
    %v744 = vld [vmem:[%s1 + $0x90] sm:$0xf]
    %v745 = vld [vmem:[%s1 + $0x94] sm:$0xf]
    %v746 = vpack.c.bf16 %v741, %v740
    %v747 = vld [vmem:[%s2 + $0x90] sm:$0x1]
    %v748 = vperm.slane %v747, 0
    %v753 = vunpack.c.l.b16 %v742
    %v754 = vunpack.c.l.b16 %v743
    %v755 = vunpack.c.l.b16 %v744
    %v756 = vunpack.c.l.b16 %v745
    %v757 = vpack.c.b16 %v754, %v753
    %v758 = vpack.c.b16 %v756, %v755
    %v762 = vsel %vm81, %v746, 0
    %764 = vmatpush.bf16.msra.mxu0 0
    %765 = vmatpush.bf16.msra.mxu0 0
    %766 = vmatpush.bf16.msra.mxu0 0
    %767 = vmatpush.bf16.msra.mxu0 0
    %768 = vmatpush.bf16.msra.mxu0 0
    %769 = vmatpush.bf16.msra.mxu0 0
    %770 = vmatpush.bf16.msra.mxu0 %v758
    %771 = vmatpush.bf16.msra.mxu0 %v757
    %772 = vmatmul.bf16.gmra.mxu0 %v762
    %v773 = vpop.f32.mrf.mxu0
    %v774 = vadd.f32 %v748, %v773
    %v775 = vpop.f32.mrf.mxu0
    %v776 = vadd.f32 %v748, %v775
    %777 = vdwg.mxu0
    %v778 = vmul.f32 %v774, %v774
    %v779 = vmul.f32 %v776, %v776
    %v780 = vmul.f32 %v774, %v778
    %v781 = vmul.f32 %v776, %v779
    %v782 = vmul.f32 %v780, 0.044715
    %v783 = vmul.f32 %v781, 0.044715
    %v784 = vadd.f32 %v774, %v782
    %v785 = vadd.f32 %v776, %v783
    %v786 = vmul.f32 %v784, 0.7978846
    %v787 = vmul.f32 %v785, 0.7978846
    %v788 = vtanh.pop %v786
    %v789 = vtanh.pop %v787
    %v790 = vadd.f32 %v788, 1.0
    %v791 = vadd.f32 %v789, 1.0
    %v792 = vmul.f32 %v790, 0.5
    %v793 = vmul.f32 %v791, 0.5
    %v794 = vmul.f32 %v774, %v792
    %v795 = vmul.f32 %v776, %v793
    %v796 = vld [vmem:[%s1 + $0x98] sm:$0xf]
    %v797 = vld [vmem:[%s1 + $0x9c] sm:$0xf]
    %v798 = vld [vmem:[%s1 + $0xa0] sm:$0xf]
    %v799 = vld [vmem:[%s1 + $0xa4] sm:$0xf]
    %v800 = vld [vmem:[%s1 + $0xa8] sm:$0xf]
    %v801 = vld [vmem:[%s1 + $0xac] sm:$0xf]
    %v802 = vld [vmem:[%s1 + $0xb0] sm:$0xf]
    %v803 = vld [vmem:[%s1 + $0xb4] sm:$0xf]
    %v804 = vld [vmem:[%s1 + $0xb8] sm:$0xf]
    %v805 = vld [vmem:[%s1 + $0xbc] sm:$0xf]
    %v806 = vld [vmem:[%s1 + $0xc0] sm:$0xf]
    %v807 = vld [vmem:[%s1 + $0xc4] sm:$0xf]
    %v808 = vld [vmem:[%s1 + $0xc8] sm:$0xf]
    %v809 = vld [vmem:[%s1 + $0xcc] sm:$0xf]
    %v810 = vld [vmem:[%s1 + $0xd0] sm:$0xf]
    %v811 = vld [vmem:[%s1 + $0xd4] sm:$0xf]
    %v812 = vpack.c.bf16 %v795, %v794
    %v813 = vld [vmem:[%s2 + $0x98] sm:$0x1]
    %v814 = vperm.slane %v813, 0
    %v831 = vunpack.c.l.b16 %v796
    %v832 = vunpack.c.l.b16 %v797
    %v833 = vunpack.c.l.b16 %v798
    %v834 = vunpack.c.l.b16 %v799
    %v835 = vunpack.c.l.b16 %v800
    %v836 = vunpack.c.l.b16 %v801
    %v837 = vunpack.c.l.b16 %v802
    %v838 = vunpack.c.l.b16 %v803
    %v839 = vunpack.c.l.b16 %v804
    %v840 = vunpack.c.l.b16 %v805
    %v841 = vunpack.c.l.b16 %v806
    %v842 = vunpack.c.l.b16 %v807
    %v843 = vunpack.c.l.b16 %v808
    %v844 = vunpack.c.l.b16 %v809
    %v845 = vunpack.c.l.b16 %v810
    %v846 = vunpack.c.l.b16 %v811
    %v847 = vpack.c.b16 %v832, %v831
    %v848 = vpack.c.b16 %v834, %v833
    %v849 = vpack.c.b16 %v836, %v835
    %v850 = vpack.c.b16 %v838, %v837
    %v851 = vpack.c.b16 %v840, %v839
    %v852 = vpack.c.b16 %v842, %v841
    %v853 = vpack.c.b16 %v844, %v843
    %v854 = vpack.c.b16 %v846, %v845
    %863 = vmatpush.bf16.msra.mxu0 %v854
    %864 = vmatpush.bf16.msra.mxu0 %v853
    %865 = vmatpush.bf16.msra.mxu0 %v852
    %866 = vmatpush.bf16.msra.mxu0 %v851
    %867 = vmatpush.bf16.msra.mxu0 %v850
    %868 = vmatpush.bf16.msra.mxu0 %v849
    %869 = vmatpush.bf16.msra.mxu0 %v848
    %870 = vmatpush.bf16.msra.mxu0 %v847
    %871 = vmatmul.bf16.gmra.mxu0 %v812
    %v872 = vpop.f32.mrf.mxu0
    %v873 = vadd.f32 %v814, %v872
    %v874 = vpop.f32.mrf.mxu0
    %v875 = vadd.f32 %v814, %v874
    %876 = vdwg.mxu0
    %v877 = vadd.f32 %v688, %v873
    %v878 = vadd.f32 %v689, %v875
    %v879 = vsel %vm81, %v877, 0.0
    %880 = vadd.xlane.f32.xlu0 %v879
    %v881 = vpop.xlane.xlu0 %880
    %v882 = vsel %vm81, %v878, 0.0
    %883 = vadd.xlane.f32.xlu0 %v882
    %v884 = vpop.xlane.xlu0 %883
    %v885 = vmul.f32 %v881, %v91
    %v886 = vmul.f32 %v884, %v91
    %v887 = vsub.f32 %v877, %v885
    %v888 = vsub.f32 %v878, %v886
    %v889 = vmul.f32 %v887, %v887
    %v890 = vmul.f32 %v888, %v888
    %v891 = vsel %vm81, %v889, 0.0
    %892 = vadd.xlane.f32.xlu0 %v891
    %v893 = vpop.xlane.xlu0 %892
    %v894 = vsel %vm81, %v890, 0.0
    %895 = vadd.xlane.f32.xlu0 %v894
    %v896 = vpop.xlane.xlu0 %895
    %v897 = vmul.f32 %v893, %v91
    %v898 = vmul.f32 %v896, %v91
    %v899 = vadd.f32 %v897, 1e-05
    %v900 = vadd.f32 %v898, 1e-05
    %v901 = vrsqrt.pop %v899
    %v902 = vmul.f32 %v901, %v899
    %v903 = vmul.f32 %v902, %v901
    %v904 = vmul.f32 0.5, %v903
    %v905 = vsub.f32 1.5, %v904
    %v906 = vmul.f32 %v901, %v905
    %vm907 = vweird.f32 %v899
    %vm908 = vweird.f32 %v901
    %vm909 = vmor %vm907, %vm908
    %v910 = vsel %vm909, %v901, %v906
    %v911 = vrsqrt.pop %v900
    %v912 = vmul.f32 %v911, %v900
    %v913 = vmul.f32 %v912, %v911
    %v914 = vmul.f32 0.5, %v913
    %v915 = vsub.f32 1.5, %v914
    %v916 = vmul.f32 %v911, %v915
    %vm917 = vweird.f32 %v900
    %vm918 = vweird.f32 %v911
    %vm919 = vmor %vm917, %vm918
    %v920 = vsel %vm919, %v911, %v916
    %v921 = vmul.f32 %v887, %v910
    %v922 = vmul.f32 %v888, %v920
    %v923 = vld [vmem:[%s2 + $0xd8] sm:$0x1]
    %v924 = vperm.slane %v923, 0
    %v925 = vmul.f32 %v921, %v924
    %v926 = vmul.f32 %v922, %v924
    %v927 = vld [vmem:[%s2 + $0xe0] sm:$0x1]
    %v928 = vperm.slane %v927, 0
    %v929 = vadd.f32 %v925, %v928
    %v930 = vadd.f32 %v926, %v928
    %v931 = vld [vmem:[%s2 + $0xe8] sm:$0x1]
    %v932 = vperm.slane %v931, 0
    %v933 = vmul.f32 %v921, %v932
    %v934 = vmul.f32 %v922, %v932
    %v935 = vld [vmem:[%s2 + $0xf0] sm:$0x1]
    %v936 = vperm.slane %v935, 0
    %v937 = vadd.f32 %v933, %v936
    %v938 = vadd.f32 %v934, %v936
    %v939 = vld [vmem:[%s1 + $0xd8] sm:$0xf]
    %v940 = vld [vmem:[%s1 + $0xdc] sm:$0xf]
    %v941 = vld [vmem:[%s1 + $0xe0] sm:$0xf]
    %v942 = vld [vmem:[%s1 + $0xe4] sm:$0xf]
    %v943 = vpack.c.bf16 %v930, %v929
    %v944 = vld [vmem:[%s2 + $0xa0] sm:$0x1]
    %v945 = vperm.slane %v944, 0
    %v950 = vunpack.c.l.b16 %v939
    %v951 = vunpack.c.l.b16 %v940
    %v952 = vunpack.c.l.b16 %v941
    %v953 = vunpack.c.l.b16 %v942
    %v954 = vpack.c.b16 %v951, %v950
    %v955 = vpack.c.b16 %v953, %v952
    %v959 = vsel %vm81, %v943, 0
    %961 = vmatpush.bf16.msra.mxu0 0
    %962 = vmatpush.bf16.msra.mxu0 0
    %963 = vmatpush.bf16.msra.mxu0 0
    %964 = vmatpush.bf16.msra.mxu0 0
    %965 = vmatpush.bf16.msra.mxu0 0
    %966 = vmatpush.bf16.msra.mxu0 0
    %967 = vmatpush.bf16.msra.mxu0 %v955
    %968 = vmatpush.bf16.msra.mxu0 %v954
    %969 = vmatmul.bf16.gmra.mxu0 %v959
    %v970 = vpop.f32.mrf.mxu0
    %v971 = vadd.f32 %v945, %v970
    %v972 = vpop.f32.mrf.mxu0
    %v973 = vadd.f32 %v945, %v972
    %974 = vdwg.mxu0
    %v975 = vld [vmem:[%s1 + $0xe8] sm:$0xf]
    %v976 = vld [vmem:[%s1 + $0xec] sm:$0xf]
    %v977 = vld [vmem:[%s1 + $0xf0] sm:$0xf]
    %v978 = vld [vmem:[%s1 + $0xf4] sm:$0xf]
    %v979 = vpack.c.bf16 %v938, %v937
    %v980 = vld [vmem:[%s2 + $0xa8] sm:$0x1]
    %v981 = vperm.slane %v980, 0
    %v986 = vunpack.c.l.b16 %v975
    %v987 = vunpack.c.l.b16 %v976
    %v988 = vunpack.c.l.b16 %v977
    %v989 = vunpack.c.l.b16 %v978
    %v990 = vpack.c.b16 %v987, %v986
    %v991 = vpack.c.b16 %v989, %v988
    %v995 = vsel %vm81, %v979, 0
    %997 = vmatpush.bf16.msra.mxu0 0
    %998 = vmatpush.bf16.msra.mxu0 0
    %999 = vmatpush.bf16.msra.mxu0 0
    %1000 = vmatpush.bf16.msra.mxu0 0
    %1001 = vmatpush.bf16.msra.mxu0 0
    %1002 = vmatpush.bf16.msra.mxu0 0
    %1003 = vmatpush.bf16.msra.mxu0 %v991
    %1004 = vmatpush.bf16.msra.mxu0 %v990
    %1005 = vmatmul.bf16.gmra.mxu0 %v995
    %v1006 = vpop.f32.mrf.mxu0
    %v1007 = vadd.f32 %v981, %v1006
    %v1008 = vpop.f32.mrf.mxu0
    %v1009 = vadd.f32 %v981, %v1008
    %1010 = vdwg.mxu0
    %v1011 = vld [vmem:[%s1 + $0xf8] sm:$0xf]
    %v1012 = vld [vmem:[%s1 + $0xfc] sm:$0xf]
    %v1013 = vld [vmem:[%s1 + $0x100] sm:$0xf]
    %v1014 = vld [vmem:[%s1 + $0x104] sm:$0xf]
    %v1015 = vld [vmem:[%s2 + $0xb0] sm:$0x1]
    %v1016 = vperm.slane %v1015, 0
    %v1021 = vunpack.c.l.b16 %v1011
    %v1022 = vunpack.c.l.b16 %v1012
    %v1023 = vunpack.c.l.b16 %v1013
    %v1024 = vunpack.c.l.b16 %v1014
    %v1025 = vpack.c.b16 %v1022, %v1021
    %v1026 = vpack.c.b16 %v1024, %v1023
    %1029 = vmatpush.bf16.msra.mxu0 0
    %1030 = vmatpush.bf16.msra.mxu0 0
    %1031 = vmatpush.bf16.msra.mxu0 0
    %1032 = vmatpush.bf16.msra.mxu0 0
    %1033 = vmatpush.bf16.msra.mxu0 0
    %1034 = vmatpush.bf16.msra.mxu0 0
    %1035 = vmatpush.bf16.msra.mxu0 %v1026
    %1036 = vmatpush.bf16.msra.mxu0 %v1025
    %1037 = vmatmul.bf16.gmra.mxu0 %v995
    %v1038 = vpop.f32.mrf.mxu0
    %v1039 = vadd.f32 %v1016, %v1038
    %v1040 = vpop.f32.mrf.mxu0
    %v1041 = vadd.f32 %v1016, %v1040
    %1042 = vdwg.mxu0
    %v1043 = vpack.c.bf16 %v971, %v971
    %v1044 = vpack.c.bf16 %v1007, %v1007
    %v1046 = vsel %vm336, %v1043, 0
    %v1049 = vsel %vm336, %v1044, 0
    %1051 = vmatpush.bf16.xpose.msra.mxu0 0
    %1052 = vmatpush.bf16.xpose.msra.mxu0 0
    %1053 = vmatpush.bf16.xpose.msra.mxu0 0
    %1054 = vmatpush.bf16.xpose.msra.mxu0 0
    %1055 = vmatpush.bf16.xpose.msra.mxu0 0
    %1056 = vmatpush.bf16.xpose.msra.mxu0 0
    %1057 = vmatpush.bf16.xpose.msra.mxu0 0
    %1058 = vmatpush.bf16.xpose.msra.mxu0 %v1049
    %1059 = vmatmul.bf16.gmra.mxu0 %v1046
    %v1060 = vpop.f32.mrf.mxu0
    %v1061 = vadd.f32 0.0, %v1060
    %v1062 = vpop.f32.mrf.mxu0
    %1063 = vdwg.mxu0
    %vm1064 = vcmask 64512
    %v1065 = vsel %vm1064, %v1061, -inf
    %1066 = vmax.xlane.f32.xlu0 %v1065
    %v1067 = vpop.xlane.xlu0 %1066
    %v1068 = vsub.f32 %v1061, %v1067
    %v1069 = vmul.f32 %v1068, 1.442695
    %v1070 = vpow.pop %v1069
    %v1071 = vsel %vm1064, %v1070, 0.0
    %1072 = vadd.xlane.f32.xlu0 %v1071
    %v1073 = vpop.xlane.xlu0 %1072
    %v1074 = vrcp.pop %v1073
    %v1075 = vmul.f32 %v1070, %v1074
    %v1076 = vpack.c.bf16 %v1075, %v1075
    %v1077 = vpack.c.bf16 %v1039, %v1039
    %v1079 = vsel %vm1064, %v1076, 0
    %vm1081 = vcmask 1043456
    %v1083 = vsel %vm1081, %v1077, 0
    %1085 = vmatpush.bf16.msra.mxu0 0
    %1086 = vmatpush.bf16.msra.mxu0 0
    %1087 = vmatpush.bf16.msra.mxu0 0
    %1088 = vmatpush.bf16.msra.mxu0 0
    %1089 = vmatpush.bf16.msra.mxu0 0
    %1090 = vmatpush.bf16.msra.mxu0 0
    %1091 = vmatpush.bf16.msra.mxu0 0
    %1092 = vmatpush.bf16.msra.mxu0 %v1083
    %1093 = vmatmul.bf16.gmra.mxu0 %v1079
    %v1094 = vpop.f32.mrf.mxu0
    %v1095 = vadd.f32 0.0, %v1094
    %v1096 = vpop.f32.mrf.mxu0
    %1097 = vdwg.mxu0
    %v1098 = vpack.c.bf16 %v973, %v973
    %v1099 = vpack.c.bf16 %v1009, %v1009
    %v1101 = vsel %vm336, %v1098, 0
    %v1104 = vsel %vm336, %v1099, 0
    %1106 = vmatpush.bf16.xpose.msra.mxu0 0
    %1107 = vmatpush.bf16.xpose.msra.mxu0 0
    %1108 = vmatpush.bf16.xpose.msra.mxu0 0
    %1109 = vmatpush.bf16.xpose.msra.mxu0 0
    %1110 = vmatpush.bf16.xpose.msra.mxu0 0
    %1111 = vmatpush.bf16.xpose.msra.mxu0 0
    %1112 = vmatpush.bf16.xpose.msra.mxu0 0
    %1113 = vmatpush.bf16.xpose.msra.mxu0 %v1104
    %1114 = vmatmul.bf16.gmra.mxu0 %v1101
    %v1115 = vpop.f32.mrf.mxu0
    %v1116 = vadd.f32 0.0, %v1115
    %v1117 = vpop.f32.mrf.mxu0
    %1118 = vdwg.mxu0
    %v1119 = vsel %vm1064, %v1116, -inf
    %1120 = vmax.xlane.f32.xlu0 %v1119
    %v1121 = vpop.xlane.xlu0 %1120
    %v1122 = vsub.f32 %v1116, %v1121
    %v1123 = vmul.f32 %v1122, 1.442695
    %v1124 = vpow.pop %v1123
    %v1125 = vsel %vm1064, %v1124, 0.0
    %1126 = vadd.xlane.f32.xlu0 %v1125
    %v1127 = vpop.xlane.xlu0 %1126
    %v1128 = vrcp.pop %v1127
    %v1129 = vmul.f32 %v1124, %v1128
    %v1130 = vpack.c.bf16 %v1129, %v1129
    %v1131 = vpack.c.bf16 %v1041, %v1041
    %v1133 = vsel %vm1064, %v1130, 0
    %v1136 = vsel %vm1081, %v1131, 0
    %1138 = vmatpush.bf16.msra.mxu0 0
    %1139 = vmatpush.bf16.msra.mxu0 0
    %1140 = vmatpush.bf16.msra.mxu0 0
    %1141 = vmatpush.bf16.msra.mxu0 0
    %1142 = vmatpush.bf16.msra.mxu0 0
    %1143 = vmatpush.bf16.msra.mxu0 0
    %1144 = vmatpush.bf16.msra.mxu0 0
    %1145 = vmatpush.bf16.msra.mxu0 %v1136
    %1146 = vmatmul.bf16.gmra.mxu0 %v1133
    %v1147 = vpop.f32.mrf.mxu0
    %v1148 = vadd.f32 0.0, %v1147
    %v1149 = vpop.f32.mrf.mxu0
    %1150 = vdwg.mxu0
    %v1151 = vld [vmem:[%s1 + $0x108] sm:$0xf]
    %v1152 = vld [vmem:[%s1 + $0x10c] sm:$0xf]
    %v1153 = vpack.c.bf16 %v1148, %v1095
    %v1154 = vld [vmem:[%s1 + $0x110] sm:$0xf]
    %v1155 = vld [vmem:[%s1 + $0x114] sm:$0xf]
    %v1156 = vld [vmem:[%s1 + $0x118] sm:$0xf]
    %v1157 = vld [vmem:[%s1 + $0x11c] sm:$0xf]
    %v1158 = vld [vmem:[%s2 + $0xb8] sm:$0x1]
    %v1159 = vperm.slane %v1158, 0
    %v1164 = vunpack.c.l.b16 %v1154
    %v1165 = vunpack.c.l.b16 %v1155
    %v1166 = vunpack.c.l.b16 %v1156
    %v1167 = vunpack.c.l.b16 %v1157
    %v1168 = vpack.c.b16 %v1165, %v1164
    %v1169 = vpack.c.b16 %v1167, %v1166
    %1172 = vmatpush.bf16.msra.mxu0 0
    %1173 = vmatpush.bf16.msra.mxu0 0
    %1174 = vmatpush.bf16.msra.mxu0 0
    %1175 = vmatpush.bf16.msra.mxu0 0
    %1176 = vmatpush.bf16.msra.mxu0 0
    %1177 = vmatpush.bf16.msra.mxu0 0
    %1178 = vmatpush.bf16.msra.mxu0 %v1169
    %1179 = vmatpush.bf16.msra.mxu0 %v1168
    %1180 = vmatmul.bf16.gmra.mxu0 %v959
    %v1181 = vpop.f32.mrf.mxu0
    %v1182 = vadd.f32 %v1159, %v1181
    %v1183 = vpop.f32.mrf.mxu0
    %v1184 = vadd.f32 %v1159, %v1183
    %1185 = vdwg.mxu0
    %v1186 = vld [vmem:[%s1 + $0x120] sm:$0xf]
    %v1187 = vld [vmem:[%s1 + $0x124] sm:$0xf]
    %v1188 = vld [vmem:[%s1 + $0x128] sm:$0xf]
    %v1189 = vld [vmem:[%s1 + $0x12c] sm:$0xf]
    %v1190 = vld [vmem:[%s2 + $0xc0] sm:$0x1]
    %v1191 = vperm.slane %v1190, 0
    %v1196 = vunpack.c.l.b16 %v1186
    %v1197 = vunpack.c.l.b16 %v1187
    %v1198 = vunpack.c.l.b16 %v1188
    %v1199 = vunpack.c.l.b16 %v1189
    %v1200 = vpack.c.b16 %v1197, %v1196
    %v1201 = vpack.c.b16 %v1199, %v1198
    %1204 = vmatpush.bf16.msra.mxu0 0
    %1205 = vmatpush.bf16.msra.mxu0 0
    %1206 = vmatpush.bf16.msra.mxu0 0
    %1207 = vmatpush.bf16.msra.mxu0 0
    %1208 = vmatpush.bf16.msra.mxu0 0
    %1209 = vmatpush.bf16.msra.mxu0 0
    %1210 = vmatpush.bf16.msra.mxu0 %v1201
    %1211 = vmatpush.bf16.msra.mxu0 %v1200
    %1212 = vmatmul.bf16.gmra.mxu0 %v995
    %v1213 = vpop.f32.mrf.mxu0
    %v1214 = vadd.f32 %v1191, %v1213
    %v1215 = vpop.f32.mrf.mxu0
    %v1216 = vadd.f32 %v1191, %v1215
    %1217 = vdwg.mxu0
    %v1218 = vld [vmem:[%s1 + $0x130] sm:$0xf]
    %v1219 = vld [vmem:[%s1 + $0x134] sm:$0xf]
    %v1220 = vld [vmem:[%s1 + $0x138] sm:$0xf]
    %v1221 = vld [vmem:[%s1 + $0x13c] sm:$0xf]
    %v1222 = vld [vmem:[%s2 + $0xc8] sm:$0x1]
    %v1223 = vperm.slane %v1222, 0
    %v1228 = vunpack.c.l.b16 %v1218
    %v1229 = vunpack.c.l.b16 %v1219
    %v1230 = vunpack.c.l.b16 %v1220
    %v1231 = vunpack.c.l.b16 %v1221
    %v1232 = vpack.c.b16 %v1229, %v1228
    %v1233 = vpack.c.b16 %v1231, %v1230
    %1236 = vmatpush.bf16.msra.mxu0 0
    %1237 = vmatpush.bf16.msra.mxu0 0
    %1238 = vmatpush.bf16.msra.mxu0 0
    %1239 = vmatpush.bf16.msra.mxu0 0
    %1240 = vmatpush.bf16.msra.mxu0 0
    %1241 = vmatpush.bf16.msra.mxu0 0
    %1242 = vmatpush.bf16.msra.mxu0 %v1233
    %1243 = vmatpush.bf16.msra.mxu0 %v1232
    %1244 = vmatmul.bf16.gmra.mxu0 %v995
    %v1245 = vpop.f32.mrf.mxu0
    %v1246 = vadd.f32 %v1223, %v1245
    %v1247 = vpop.f32.mrf.mxu0
    %v1248 = vadd.f32 %v1223, %v1247
    %1249 = vdwg.mxu0
    %v1250 = vpack.c.bf16 %v1182, %v1182
    %v1251 = vpack.c.bf16 %v1214, %v1214
    %v1253 = vsel %vm336, %v1250, 0
    %v1256 = vsel %vm336, %v1251, 0
    %1258 = vmatpush.bf16.xpose.msra.mxu0 0
    %1259 = vmatpush.bf16.xpose.msra.mxu0 0
    %1260 = vmatpush.bf16.xpose.msra.mxu0 0
    %1261 = vmatpush.bf16.xpose.msra.mxu0 0
    %1262 = vmatpush.bf16.xpose.msra.mxu0 0
    %1263 = vmatpush.bf16.xpose.msra.mxu0 0
    %1264 = vmatpush.bf16.xpose.msra.mxu0 0
    %1265 = vmatpush.bf16.xpose.msra.mxu0 %v1256
    %1266 = vmatmul.bf16.gmra.mxu0 %v1253
    %v1267 = vpop.f32.mrf.mxu0
    %v1268 = vadd.f32 0.0, %v1267
    %v1269 = vpop.f32.mrf.mxu0
    %1270 = vdwg.mxu0
    %v1271 = vsel %vm1064, %v1268, -inf
    %1272 = vmax.xlane.f32.xlu0 %v1271
    %v1273 = vpop.xlane.xlu0 %1272
    %v1274 = vsub.f32 %v1268, %v1273
    %v1275 = vmul.f32 %v1274, 1.442695
    %v1276 = vpow.pop %v1275
    %v1277 = vsel %vm1064, %v1276, 0.0
    %1278 = vadd.xlane.f32.xlu0 %v1277
    %v1279 = vpop.xlane.xlu0 %1278
    %v1280 = vrcp.pop %v1279
    %v1281 = vmul.f32 %v1276, %v1280
    %v1282 = vpack.c.bf16 %v1281, %v1281
    %v1283 = vpack.c.bf16 %v1246, %v1246
    %v1285 = vsel %vm1064, %v1282, 0
    %v1288 = vsel %vm1081, %v1283, 0
    %1290 = vmatpush.bf16.msra.mxu0 0
    %1291 = vmatpush.bf16.msra.mxu0 0
    %1292 = vmatpush.bf16.msra.mxu0 0
    %1293 = vmatpush.bf16.msra.mxu0 0
    %1294 = vmatpush.bf16.msra.mxu0 0
    %1295 = vmatpush.bf16.msra.mxu0 0
    %1296 = vmatpush.bf16.msra.mxu0 0
    %1297 = vmatpush.bf16.msra.mxu0 %v1288
    %1298 = vmatmul.bf16.gmra.mxu0 %v1285
    %v1299 = vpop.f32.mrf.mxu0
    %v1300 = vadd.f32 0.0, %v1299
    %v1301 = vpop.f32.mrf.mxu0
    %1302 = vdwg.mxu0
    %v1303 = vpack.c.bf16 %v1184, %v1184
    %v1304 = vpack.c.bf16 %v1216, %v1216
    %v1306 = vsel %vm336, %v1303, 0
    %v1309 = vsel %vm336, %v1304, 0
    %1311 = vmatpush.bf16.xpose.msra.mxu0 0
    %1312 = vmatpush.bf16.xpose.msra.mxu0 0
    %1313 = vmatpush.bf16.xpose.msra.mxu0 0
    %1314 = vmatpush.bf16.xpose.msra.mxu0 0
    %1315 = vmatpush.bf16.xpose.msra.mxu0 0
    %1316 = vmatpush.bf16.xpose.msra.mxu0 0
    %1317 = vmatpush.bf16.xpose.msra.mxu0 0
    %1318 = vmatpush.bf16.xpose.msra.mxu0 %v1309
    %1319 = vmatmul.bf16.gmra.mxu0 %v1306
    %v1320 = vpop.f32.mrf.mxu0
    %v1321 = vadd.f32 0.0, %v1320
    %v1322 = vpop.f32.mrf.mxu0
    %1323 = vdwg.mxu0
    %v1324 = vsel %vm1064, %v1321, -inf
    %1325 = vmax.xlane.f32.xlu0 %v1324
    %v1326 = vpop.xlane.xlu0 %1325
    %v1327 = vsub.f32 %v1321, %v1326
    %v1328 = vmul.f32 %v1327, 1.442695
    %v1329 = vpow.pop %v1328
    %v1330 = vsel %vm1064, %v1329, 0.0
    %1331 = vadd.xlane.f32.xlu0 %v1330
    %v1332 = vpop.xlane.xlu0 %1331
    %v1333 = vrcp.pop %v1332
    %v1334 = vmul.f32 %v1329, %v1333
    %v1335 = vpack.c.bf16 %v1334, %v1334
    %v1336 = vpack.c.bf16 %v1248, %v1248
    %v1338 = vsel %vm1064, %v1335, 0
    %v1341 = vsel %vm1081, %v1336, 0
    %1343 = vmatpush.bf16.msra.mxu0 0
    %1344 = vmatpush.bf16.msra.mxu0 0
    %1345 = vmatpush.bf16.msra.mxu0 0
    %1346 = vmatpush.bf16.msra.mxu0 0
    %1347 = vmatpush.bf16.msra.mxu0 0
    %1348 = vmatpush.bf16.msra.mxu0 0
    %1349 = vmatpush.bf16.msra.mxu0 0
    %1350 = vmatpush.bf16.msra.mxu0 %v1341
    %1351 = vmatmul.bf16.gmra.mxu0 %v1338
    %v1352 = vpop.f32.mrf.mxu0
    %v1353 = vadd.f32 0.0, %v1352
    %v1354 = vpop.f32.mrf.mxu0
    %1355 = vdwg.mxu0
    %v1356 = vld [vmem:[%s1 + $0x140] sm:$0xf]
    %v1357 = vld [vmem:[%s1 + $0x144] sm:$0xf]
    %v1358 = vpack.c.bf16 %v1353, %v1300
    %v1361 = vunpack.c.l.b16 %v1356
    %v1362 = vunpack.c.l.b16 %v1357
    %v1363 = vpack.c.b16 %v1362, %v1361
    %v1366 = vsel %vm336, %v1358, 0
    %1368 = vmatpush.bf16.msra.mxu0 0
    %1369 = vmatpush.bf16.msra.mxu0 0
    %1370 = vmatpush.bf16.msra.mxu0 0
    %1371 = vmatpush.bf16.msra.mxu0 0
    %1372 = vmatpush.bf16.msra.mxu0 0
    %1373 = vmatpush.bf16.msra.mxu0 0
    %1374 = vmatpush.bf16.msra.mxu0 0
    %1375 = vmatpush.bf16.msra.mxu0 %v1363
    %1376 = vmatmul.bf16.gmra.mxu0 %v1366
    %v1377 = vpop.f32.mrf.mxu0
    %v1378 = vadd.f32 0.0, %v1377
    %v1379 = vpop.f32.mrf.mxu0
    %v1380 = vadd.f32 0.0, %v1379
    %1381 = vdwg.mxu0
    %v1384 = vunpack.c.l.b16 %v1151
    %v1385 = vunpack.c.l.b16 %v1152
    %v1386 = vpack.c.b16 %v1385, %v1384
    %v1389 = vsel %vm336, %v1153, 0
    %1391 = vmatpush.bf16.msra.mxu0 0
    %1392 = vmatpush.bf16.msra.mxu0 0
    %1393 = vmatpush.bf16.msra.mxu0 0
    %1394 = vmatpush.bf16.msra.mxu0 0
    %1395 = vmatpush.bf16.msra.mxu0 0
    %1396 = vmatpush.bf16.msra.mxu0 0
    %1397 = vmatpush.bf16.msra.mxu0 0
    %1398 = vmatpush.bf16.msra.mxu0 %v1386
    %1399 = vmatmul.bf16.gmra.mxu0 %v1389
    %v1400 = vpop.f32.mrf.mxu0
    %v1401 = vadd.f32 %v1378, %v1400
    %v1402 = vpop.f32.mrf.mxu0
    %v1403 = vadd.f32 %v1380, %v1402
    %1404 = vdwg.mxu0
    %v1405 = vld [vmem:[%s2 + $0xd0] sm:$0x1]
    %v1406 = vperm.slane %v1405, 0
    %v1407 = vadd.f32 %v1401, %v1406
    %v1408 = vadd.f32 %v1403, %v1406
    %v1409 = vadd.f32 %v877, %v1407
    %v1410 = vadd.f32 %v878, %v1408
    %v1411 = vsel %vm81, %v1409, 0.0
    %1412 = vadd.xlane.f32.xlu0 %v1411
    %v1413 = vpop.xlane.xlu0 %1412
    %v1414 = vsel %vm81, %v1410, 0.0
    %1415 = vadd.xlane.f32.xlu0 %v1414
    %v1416 = vpop.xlane.xlu0 %1415
    %v1417 = vmul.f32 %v1413, %v91
    %v1418 = vmul.f32 %v1416, %v91
    %v1419 = vsub.f32 %v1409, %v1417
    %v1420 = vsub.f32 %v1410, %v1418
    %v1421 = vmul.f32 %v1419, %v1419
    %v1422 = vmul.f32 %v1420, %v1420
    %v1423 = vsel %vm81, %v1421, 0.0
    %1424 = vadd.xlane.f32.xlu0 %v1423
    %v1425 = vpop.xlane.xlu0 %1424
    %v1426 = vsel %vm81, %v1422, 0.0
    %1427 = vadd.xlane.f32.xlu0 %v1426
    %v1428 = vpop.xlane.xlu0 %1427
    %v1429 = vmul.f32 %v1425, %v91
    %v1430 = vmul.f32 %v1428, %v91
    %v1431 = vadd.f32 %v1429, 1e-05
    %v1432 = vadd.f32 %v1430, 1e-05
    %v1433 = vrsqrt.pop %v1431
    %v1434 = vmul.f32 %v1433, %v1431
    %v1435 = vmul.f32 %v1434, %v1433
    %v1436 = vmul.f32 0.5, %v1435
    %v1437 = vsub.f32 1.5, %v1436
    %v1438 = vmul.f32 %v1433, %v1437
    %vm1439 = vweird.f32 %v1431
    %vm1440 = vweird.f32 %v1433
    %vm1441 = vmor %vm1439, %vm1440
    %v1442 = vsel %vm1441, %v1433, %v1438
    %v1443 = vrsqrt.pop %v1432
    %v1444 = vmul.f32 %v1443, %v1432
    %v1445 = vmul.f32 %v1444, %v1443
    %v1446 = vmul.f32 0.5, %v1445
    %v1447 = vsub.f32 1.5, %v1446
    %v1448 = vmul.f32 %v1443, %v1447
    %vm1449 = vweird.f32 %v1432
    %vm1450 = vweird.f32 %v1443
    %vm1451 = vmor %vm1449, %vm1450
    %v1452 = vsel %vm1451, %v1443, %v1448
    %v1453 = vmul.f32 %v1419, %v1442
    %v1454 = vmul.f32 %v1420, %v1452
    %v1455 = vld [vmem:[%s2 + $0xf8] sm:$0x1]
    %v1456 = vperm.slane %v1455, 0
    %v1457 = vmul.f32 %v1453, %v1456
    %v1458 = vmul.f32 %v1454, %v1456
    %v1459 = vld [vmem:[%s2 + $0x100] sm:$0x1]
    %v1460 = vperm.slane %v1459, 0
    %v1461 = vadd.f32 %v1457, %v1460
    %v1462 = vadd.f32 %v1458, %v1460
    %v1463 = vld [vmem:[%s1 + $0x148] sm:$0xf]
    %v1464 = vld [vmem:[%s1 + $0x14c] sm:$0xf]
    %v1465 = vld [vmem:[%s1 + $0x150] sm:$0xf]
    %v1466 = vld [vmem:[%s1 + $0x154] sm:$0xf]
    %v1467 = vpack.c.bf16 %v1462, %v1461
    %v1468 = vld [vmem:[%s2 + $0x108] sm:$0x1]
    %v1469 = vperm.slane %v1468, 0
    %v1474 = vunpack.c.l.b16 %v1463
    %v1475 = vunpack.c.l.b16 %v1464
    %v1476 = vunpack.c.l.b16 %v1465
    %v1477 = vunpack.c.l.b16 %v1466
    %v1478 = vpack.c.b16 %v1475, %v1474
    %v1479 = vpack.c.b16 %v1477, %v1476
    %v1483 = vsel %vm81, %v1467, 0
    %1485 = vmatpush.bf16.msra.mxu0 0
    %1486 = vmatpush.bf16.msra.mxu0 0
    %1487 = vmatpush.bf16.msra.mxu0 0
    %1488 = vmatpush.bf16.msra.mxu0 0
    %1489 = vmatpush.bf16.msra.mxu0 0
    %1490 = vmatpush.bf16.msra.mxu0 0
    %1491 = vmatpush.bf16.msra.mxu0 %v1479
    %1492 = vmatpush.bf16.msra.mxu0 %v1478
    %1493 = vmatmul.bf16.gmra.mxu0 %v1483
    %v1494 = vpop.f32.mrf.mxu0
    %v1495 = vadd.f32 %v1469, %v1494
    %v1496 = vpop.f32.mrf.mxu0
    %v1497 = vadd.f32 %v1469, %v1496
    %1498 = vdwg.mxu0
    %v1499 = vmul.f32 %v1495, %v1495
    %v1500 = vmul.f32 %v1497, %v1497
    %v1501 = vmul.f32 %v1495, %v1499
    %v1502 = vmul.f32 %v1497, %v1500
    %v1503 = vmul.f32 %v1501, 0.044715
    %v1504 = vmul.f32 %v1502, 0.044715
    %v1505 = vadd.f32 %v1495, %v1503
    %v1506 = vadd.f32 %v1497, %v1504
    %v1507 = vmul.f32 %v1505, 0.7978846
    %v1508 = vmul.f32 %v1506, 0.7978846
    %v1509 = vtanh.pop %v1507
    %v1510 = vtanh.pop %v1508
    %v1511 = vadd.f32 %v1509, 1.0
    %v1512 = vadd.f32 %v1510, 1.0
    %v1513 = vmul.f32 %v1511, 0.5
    %v1514 = vmul.f32 %v1512, 0.5
    %v1515 = vmul.f32 %v1495, %v1513
    %v1516 = vmul.f32 %v1497, %v1514
    %v1517 = vld [vmem:[%s1 + $0x158] sm:$0xf]
    %v1518 = vld [vmem:[%s1 + $0x15c] sm:$0xf]
    %v1519 = vld [vmem:[%s1 + $0x160] sm:$0xf]
    %v1520 = vld [vmem:[%s1 + $0x164] sm:$0xf]
    %v1521 = vld [vmem:[%s1 + $0x168] sm:$0xf]
    %v1522 = vld [vmem:[%s1 + $0x16c] sm:$0xf]
    %v1523 = vld [vmem:[%s1 + $0x170] sm:$0xf]
    %v1524 = vld [vmem:[%s1 + $0x174] sm:$0xf]
    %v1525 = vld [vmem:[%s1 + $0x178] sm:$0xf]
    %v1526 = vld [vmem:[%s1 + $0x17c] sm:$0xf]
    %v1527 = vld [vmem:[%s1 + $0x180] sm:$0xf]
    %v1528 = vld [vmem:[%s1 + $0x184] sm:$0xf]
    %v1529 = vld [vmem:[%s1 + $0x188] sm:$0xf]
    %v1530 = vld [vmem:[%s1 + $0x18c] sm:$0xf]
    %v1531 = vld [vmem:[%s1 + $0x190] sm:$0xf]
    %v1532 = vld [vmem:[%s1 + $0x194] sm:$0xf]
    %v1533 = vpack.c.bf16 %v1516, %v1515
    %v1534 = vld [vmem:[%s2 + $0x110] sm:$0x1]
    %v1535 = vperm.slane %v1534, 0
    %v1552 = vunpack.c.l.b16 %v1517
    %v1553 = vunpack.c.l.b16 %v1518
    %v1554 = vunpack.c.l.b16 %v1519
    %v1555 = vunpack.c.l.b16 %v1520
    %v1556 = vunpack.c.l.b16 %v1521
    %v1557 = vunpack.c.l.b16 %v1522
    %v1558 = vunpack.c.l.b16 %v1523
    %v1559 = vunpack.c.l.b16 %v1524
    %v1560 = vunpack.c.l.b16 %v1525
    %v1561 = vunpack.c.l.b16 %v1526
    %v1562 = vunpack.c.l.b16 %v1527
    %v1563 = vunpack.c.l.b16 %v1528
    %v1564 = vunpack.c.l.b16 %v1529
    %v1565 = vunpack.c.l.b16 %v1530
    %v1566 = vunpack.c.l.b16 %v1531
    %v1567 = vunpack.c.l.b16 %v1532
    %v1568 = vpack.c.b16 %v1553, %v1552
    %v1569 = vpack.c.b16 %v1555, %v1554
    %v1570 = vpack.c.b16 %v1557, %v1556
    %v1571 = vpack.c.b16 %v1559, %v1558
    %v1572 = vpack.c.b16 %v1561, %v1560
    %v1573 = vpack.c.b16 %v1563, %v1562
    %v1574 = vpack.c.b16 %v1565, %v1564
    %v1575 = vpack.c.b16 %v1567, %v1566
    %1584 = vmatpush.bf16.msra.mxu0 %v1575
    %1585 = vmatpush.bf16.msra.mxu0 %v1574
    %1586 = vmatpush.bf16.msra.mxu0 %v1573
    %1587 = vmatpush.bf16.msra.mxu0 %v1572
    %1588 = vmatpush.bf16.msra.mxu0 %v1571
    %1589 = vmatpush.bf16.msra.mxu0 %v1570
    %1590 = vmatpush.bf16.msra.mxu0 %v1569
    %1591 = vmatpush.bf16.msra.mxu0 %v1568
    %1592 = vmatmul.bf16.gmra.mxu0 %v1533
    %v1593 = vpop.f32.mrf.mxu0
    %v1594 = vadd.f32 %v1535, %v1593
    %v1595 = vpop.f32.mrf.mxu0
    %v1596 = vadd.f32 %v1535, %v1595
    %1597 = vdwg.mxu0
    %v1598 = vadd.f32 %v1409, %v1594
    %v1599 = vadd.f32 %v1410, %v1596
    %v1600 = vsel %vm81, %v1598, 0.0
    %1601 = vadd.xlane.f32.xlu0 %v1600
    %v1602 = vpop.xlane.xlu0 %1601
    %v1603 = vsel %vm81, %v1599, 0.0
    %1604 = vadd.xlane.f32.xlu0 %v1603
    %v1605 = vpop.xlane.xlu0 %1604
    %v1606 = vmul.f32 %v1602, %v91
    %v1607 = vmul.f32 %v1605, %v91
    %v1608 = vsub.f32 %v1598, %v1606
    %v1609 = vsub.f32 %v1599, %v1607
    %v1610 = vmul.f32 %v1608, %v1608
    %v1611 = vmul.f32 %v1609, %v1609
    %v1612 = vsel %vm81, %v1610, 0.0
    %1613 = vadd.xlane.f32.xlu0 %v1612
    %v1614 = vpop.xlane.xlu0 %1613
    %v1615 = vsel %vm81, %v1611, 0.0
    %1616 = vadd.xlane.f32.xlu0 %v1615
    %v1617 = vpop.xlane.xlu0 %1616
    %v1618 = vmul.f32 %v1614, %v91
    %v1619 = vmul.f32 %v1617, %v91
    %v1620 = vadd.f32 %v1618, 1e-05
    %v1621 = vadd.f32 %v1619, 1e-05
    %v1622 = vrsqrt.pop %v1620
    %v1623 = vmul.f32 %v1622, %v1620
    %v1624 = vmul.f32 %v1623, %v1622
    %v1625 = vmul.f32 0.5, %v1624
    %v1626 = vsub.f32 1.5, %v1625
    %v1627 = vmul.f32 %v1622, %v1626
    %vm1628 = vweird.f32 %v1620
    %vm1629 = vweird.f32 %v1622
    %vm1630 = vmor %vm1628, %vm1629
    %v1631 = vsel %vm1630, %v1622, %v1627
    %v1632 = vrsqrt.pop %v1621
    %v1633 = vmul.f32 %v1632, %v1621
    %v1634 = vmul.f32 %v1633, %v1632
    %v1635 = vmul.f32 0.5, %v1634
    %v1636 = vsub.f32 1.5, %v1635
    %v1637 = vmul.f32 %v1632, %v1636
    %vm1638 = vweird.f32 %v1621
    %vm1639 = vweird.f32 %v1632
    %vm1640 = vmor %vm1638, %vm1639
    %v1641 = vsel %vm1640, %v1632, %v1637
    %v1642 = vmul.f32 %v1608, %v1631
    %v1643 = vmul.f32 %v1609, %v1641
    %v1644 = vld [vmem:[%s2 + $0x150] sm:$0x1]
    %v1645 = vperm.slane %v1644, 0
    %v1646 = vmul.f32 %v1642, %v1645
    %v1647 = vmul.f32 %v1643, %v1645
    %v1648 = vld [vmem:[%s2 + $0x158] sm:$0x1]
    %v1649 = vperm.slane %v1648, 0
    %v1650 = vadd.f32 %v1646, %v1649
    %v1651 = vadd.f32 %v1647, %v1649
    %v1652 = vld [vmem:[%s2 + $0x160] sm:$0x1]
    %v1653 = vperm.slane %v1652, 0
    %v1654 = vmul.f32 %v1642, %v1653
    %v1655 = vmul.f32 %v1643, %v1653
    %v1656 = vld [vmem:[%s2 + $0x168] sm:$0x1]
    %v1657 = vperm.slane %v1656, 0
    %v1658 = vadd.f32 %v1654, %v1657
    %v1659 = vadd.f32 %v1655, %v1657
    %v1660 = vld [vmem:[%s1 + $0x198] sm:$0xf]
    %v1661 = vld [vmem:[%s1 + $0x19c] sm:$0xf]
    %v1662 = vld [vmem:[%s1 + $0x1a0] sm:$0xf]
    %v1663 = vld [vmem:[%s1 + $0x1a4] sm:$0xf]
    %v1664 = vpack.c.bf16 %v1651, %v1650
    %v1665 = vld [vmem:[%s2 + $0x118] sm:$0x1]
    %v1666 = vperm.slane %v1665, 0
    %v1671 = vunpack.c.l.b16 %v1660
    %v1672 = vunpack.c.l.b16 %v1661
    %v1673 = vunpack.c.l.b16 %v1662
    %v1674 = vunpack.c.l.b16 %v1663
    %v1675 = vpack.c.b16 %v1672, %v1671
    %v1676 = vpack.c.b16 %v1674, %v1673
    %v1680 = vsel %vm81, %v1664, 0
    %1682 = vmatpush.bf16.msra.mxu0 0
    %1683 = vmatpush.bf16.msra.mxu0 0
    %1684 = vmatpush.bf16.msra.mxu0 0
    %1685 = vmatpush.bf16.msra.mxu0 0
    %1686 = vmatpush.bf16.msra.mxu0 0
    %1687 = vmatpush.bf16.msra.mxu0 0
    %1688 = vmatpush.bf16.msra.mxu0 %v1676
    %1689 = vmatpush.bf16.msra.mxu0 %v1675
    %1690 = vmatmul.bf16.gmra.mxu0 %v1680
    %v1691 = vpop.f32.mrf.mxu0
    %v1692 = vadd.f32 %v1666, %v1691
    %v1693 = vpop.f32.mrf.mxu0
    %v1694 = vadd.f32 %v1666, %v1693
    %1695 = vdwg.mxu0
    %v1696 = vld [vmem:[%s1 + $0x1a8] sm:$0xf]
    %v1697 = vld [vmem:[%s1 + $0x1ac] sm:$0xf]
    %v1698 = vld [vmem:[%s1 + $0x1b0] sm:$0xf]
    %v1699 = vld [vmem:[%s1 + $0x1b4] sm:$0xf]
    %v1700 = vpack.c.bf16 %v1659, %v1658
    %v1701 = vld [vmem:[%s2 + $0x120] sm:$0x1]
    %v1702 = vperm.slane %v1701, 0
    %v1707 = vunpack.c.l.b16 %v1696
    %v1708 = vunpack.c.l.b16 %v1697
    %v1709 = vunpack.c.l.b16 %v1698
    %v1710 = vunpack.c.l.b16 %v1699
    %v1711 = vpack.c.b16 %v1708, %v1707
    %v1712 = vpack.c.b16 %v1710, %v1709
    %v1716 = vsel %vm81, %v1700, 0
    %1718 = vmatpush.bf16.msra.mxu0 0
    %1719 = vmatpush.bf16.msra.mxu0 0
    %1720 = vmatpush.bf16.msra.mxu0 0
    %1721 = vmatpush.bf16.msra.mxu0 0
    %1722 = vmatpush.bf16.msra.mxu0 0
    %1723 = vmatpush.bf16.msra.mxu0 0
    %1724 = vmatpush.bf16.msra.mxu0 %v1712
    %1725 = vmatpush.bf16.msra.mxu0 %v1711
    %1726 = vmatmul.bf16.gmra.mxu0 %v1716
    %v1727 = vpop.f32.mrf.mxu0
    %v1728 = vadd.f32 %v1702, %v1727
    %v1729 = vpop.f32.mrf.mxu0
    %v1730 = vadd.f32 %v1702, %v1729
    %1731 = vdwg.mxu0
    %v1732 = vld [vmem:[%s1 + $0x1b8] sm:$0xf]
    %v1733 = vld [vmem:[%s1 + $0x1bc] sm:$0xf]
    %v1734 = vld [vmem:[%s1 + $0x1c0] sm:$0xf]
    %v1735 = vld [vmem:[%s1 + $0x1c4] sm:$0xf]
    %v1736 = vld [vmem:[%s2 + $0x128] sm:$0x1]
    %v1737 = vperm.slane %v1736, 0
    %v1742 = vunpack.c.l.b16 %v1732
    %v1743 = vunpack.c.l.b16 %v1733
    %v1744 = vunpack.c.l.b16 %v1734
    %v1745 = vunpack.c.l.b16 %v1735
    %v1746 = vpack.c.b16 %v1743, %v1742
    %v1747 = vpack.c.b16 %v1745, %v1744
    %1750 = vmatpush.bf16.msra.mxu0 0
    %1751 = vmatpush.bf16.msra.mxu0 0
    %1752 = vmatpush.bf16.msra.mxu0 0
    %1753 = vmatpush.bf16.msra.mxu0 0
    %1754 = vmatpush.bf16.msra.mxu0 0
    %1755 = vmatpush.bf16.msra.mxu0 0
    %1756 = vmatpush.bf16.msra.mxu0 %v1747
    %1757 = vmatpush.bf16.msra.mxu0 %v1746
    %1758 = vmatmul.bf16.gmra.mxu0 %v1716
    %v1759 = vpop.f32.mrf.mxu0
    %v1760 = vadd.f32 %v1737, %v1759
    %v1761 = vpop.f32.mrf.mxu0
    %v1762 = vadd.f32 %v1737, %v1761
    %1763 = vdwg.mxu0
    %v1764 = vpack.c.bf16 %v1692, %v1692
    %v1765 = vpack.c.bf16 %v1728, %v1728
    %v1767 = vsel %vm336, %v1764, 0
    %v1770 = vsel %vm336, %v1765, 0
    %1772 = vmatpush.bf16.xpose.msra.mxu0 0
    %1773 = vmatpush.bf16.xpose.msra.mxu0 0
    %1774 = vmatpush.bf16.xpose.msra.mxu0 0
    %1775 = vmatpush.bf16.xpose.msra.mxu0 0
    %1776 = vmatpush.bf16.xpose.msra.mxu0 0
    %1777 = vmatpush.bf16.xpose.msra.mxu0 0
    %1778 = vmatpush.bf16.xpose.msra.mxu0 0
    %1779 = vmatpush.bf16.xpose.msra.mxu0 %v1770
    %1780 = vmatmul.bf16.gmra.mxu0 %v1767
    %v1781 = vpop.f32.mrf.mxu0
    %v1782 = vadd.f32 0.0, %v1781
    %v1783 = vpop.f32.mrf.mxu0
    %1784 = vdwg.mxu0
    %v1785 = vsel %vm1064, %v1782, -inf
    %1786 = vmax.xlane.f32.xlu0 %v1785
    %v1787 = vpop.xlane.xlu0 %1786
    %v1788 = vsub.f32 %v1782, %v1787
    %v1789 = vmul.f32 %v1788, 1.442695
    %v1790 = vpow.pop %v1789
    %v1791 = vsel %vm1064, %v1790, 0.0
    %1792 = vadd.xlane.f32.xlu0 %v1791
    %v1793 = vpop.xlane.xlu0 %1792
    %v1794 = vrcp.pop %v1793
    %v1795 = vmul.f32 %v1790, %v1794
    %v1796 = vpack.c.bf16 %v1795, %v1795
    %v1797 = vpack.c.bf16 %v1760, %v1760
    %v1799 = vsel %vm1064, %v1796, 0
    %v1802 = vsel %vm1081, %v1797, 0
    %1804 = vmatpush.bf16.msra.mxu0 0
    %1805 = vmatpush.bf16.msra.mxu0 0
    %1806 = vmatpush.bf16.msra.mxu0 0
    %1807 = vmatpush.bf16.msra.mxu0 0
    %1808 = vmatpush.bf16.msra.mxu0 0
    %1809 = vmatpush.bf16.msra.mxu0 0
    %1810 = vmatpush.bf16.msra.mxu0 0
    %1811 = vmatpush.bf16.msra.mxu0 %v1802
    %1812 = vmatmul.bf16.gmra.mxu0 %v1799
    %v1813 = vpop.f32.mrf.mxu0
    %v1814 = vadd.f32 0.0, %v1813
    %v1815 = vpop.f32.mrf.mxu0
    %1816 = vdwg.mxu0
    %v1817 = vpack.c.bf16 %v1694, %v1694
    %v1818 = vpack.c.bf16 %v1730, %v1730
    %v1820 = vsel %vm336, %v1817, 0
    %v1823 = vsel %vm336, %v1818, 0
    %1825 = vmatpush.bf16.xpose.msra.mxu0 0
    %1826 = vmatpush.bf16.xpose.msra.mxu0 0
    %1827 = vmatpush.bf16.xpose.msra.mxu0 0
    %1828 = vmatpush.bf16.xpose.msra.mxu0 0
    %1829 = vmatpush.bf16.xpose.msra.mxu0 0
    %1830 = vmatpush.bf16.xpose.msra.mxu0 0
    %1831 = vmatpush.bf16.xpose.msra.mxu0 0
    %1832 = vmatpush.bf16.xpose.msra.mxu0 %v1823
    %1833 = vmatmul.bf16.gmra.mxu0 %v1820
    %v1834 = vpop.f32.mrf.mxu0
    %v1835 = vadd.f32 0.0, %v1834
    %v1836 = vpop.f32.mrf.mxu0
    %1837 = vdwg.mxu0
    %v1838 = vsel %vm1064, %v1835, -inf
    %1839 = vmax.xlane.f32.xlu0 %v1838
    %v1840 = vpop.xlane.xlu0 %1839
    %v1841 = vsub.f32 %v1835, %v1840
    %v1842 = vmul.f32 %v1841, 1.442695
    %v1843 = vpow.pop %v1842
    %v1844 = vsel %vm1064, %v1843, 0.0
    %1845 = vadd.xlane.f32.xlu0 %v1844
    %v1846 = vpop.xlane.xlu0 %1845
    %v1847 = vrcp.pop %v1846
    %v1848 = vmul.f32 %v1843, %v1847
    %v1849 = vpack.c.bf16 %v1848, %v1848
    %v1850 = vpack.c.bf16 %v1762, %v1762
    %v1852 = vsel %vm1064, %v1849, 0
    %v1855 = vsel %vm1081, %v1850, 0
    %1857 = vmatpush.bf16.msra.mxu0 0
    %1858 = vmatpush.bf16.msra.mxu0 0
    %1859 = vmatpush.bf16.msra.mxu0 0
    %1860 = vmatpush.bf16.msra.mxu0 0
    %1861 = vmatpush.bf16.msra.mxu0 0
    %1862 = vmatpush.bf16.msra.mxu0 0
    %1863 = vmatpush.bf16.msra.mxu0 0
    %1864 = vmatpush.bf16.msra.mxu0 %v1855
    %1865 = vmatmul.bf16.gmra.mxu0 %v1852
    %v1866 = vpop.f32.mrf.mxu0
    %v1867 = vadd.f32 0.0, %v1866
    %v1868 = vpop.f32.mrf.mxu0
    %1869 = vdwg.mxu0
    %v1870 = vld [vmem:[%s1 + $0x1c8] sm:$0xf]
    %v1871 = vld [vmem:[%s1 + $0x1cc] sm:$0xf]
    %v1872 = vpack.c.bf16 %v1867, %v1814
    %v1873 = vld [vmem:[%s1 + $0x1d0] sm:$0xf]
    %v1874 = vld [vmem:[%s1 + $0x1d4] sm:$0xf]
    %v1875 = vld [vmem:[%s1 + $0x1d8] sm:$0xf]
    %v1876 = vld [vmem:[%s1 + $0x1dc] sm:$0xf]
    %v1877 = vld [vmem:[%s2 + $0x130] sm:$0x1]
    %v1878 = vperm.slane %v1877, 0
    %v1883 = vunpack.c.l.b16 %v1873
    %v1884 = vunpack.c.l.b16 %v1874
    %v1885 = vunpack.c.l.b16 %v1875
    %v1886 = vunpack.c.l.b16 %v1876
    %v1887 = vpack.c.b16 %v1884, %v1883
    %v1888 = vpack.c.b16 %v1886, %v1885
    %1891 = vmatpush.bf16.msra.mxu0 0
    %1892 = vmatpush.bf16.msra.mxu0 0
    %1893 = vmatpush.bf16.msra.mxu0 0
    %1894 = vmatpush.bf16.msra.mxu0 0
    %1895 = vmatpush.bf16.msra.mxu0 0
    %1896 = vmatpush.bf16.msra.mxu0 0
    %1897 = vmatpush.bf16.msra.mxu0 %v1888
    %1898 = vmatpush.bf16.msra.mxu0 %v1887
    %1899 = vmatmul.bf16.gmra.mxu0 %v1680
    %v1900 = vpop.f32.mrf.mxu0
    %v1901 = vadd.f32 %v1878, %v1900
    %v1902 = vpop.f32.mrf.mxu0
    %v1903 = vadd.f32 %v1878, %v1902
    %1904 = vdwg.mxu0
    %v1905 = vld [vmem:[%s1 + $0x1e0] sm:$0xf]
    %v1906 = vld [vmem:[%s1 + $0x1e4] sm:$0xf]
    %v1907 = vld [vmem:[%s1 + $0x1e8] sm:$0xf]
    %v1908 = vld [vmem:[%s1 + $0x1ec] sm:$0xf]
    %v1909 = vld [vmem:[%s2 + $0x138] sm:$0x1]
    %v1910 = vperm.slane %v1909, 0
    %v1915 = vunpack.c.l.b16 %v1905
    %v1916 = vunpack.c.l.b16 %v1906
    %v1917 = vunpack.c.l.b16 %v1907
    %v1918 = vunpack.c.l.b16 %v1908
    %v1919 = vpack.c.b16 %v1916, %v1915
    %v1920 = vpack.c.b16 %v1918, %v1917
    %1923 = vmatpush.bf16.msra.mxu0 0
    %1924 = vmatpush.bf16.msra.mxu0 0
    %1925 = vmatpush.bf16.msra.mxu0 0
    %1926 = vmatpush.bf16.msra.mxu0 0
    %1927 = vmatpush.bf16.msra.mxu0 0
    %1928 = vmatpush.bf16.msra.mxu0 0
    %1929 = vmatpush.bf16.msra.mxu0 %v1920
    %1930 = vmatpush.bf16.msra.mxu0 %v1919
    %1931 = vmatmul.bf16.gmra.mxu0 %v1716
    %v1932 = vpop.f32.mrf.mxu0
    %v1933 = vadd.f32 %v1910, %v1932
    %v1934 = vpop.f32.mrf.mxu0
    %v1935 = vadd.f32 %v1910, %v1934
    %1936 = vdwg.mxu0
    %v1937 = vld [vmem:[%s1 + $0x1f0] sm:$0xf]
    %v1938 = vld [vmem:[%s1 + $0x1f4] sm:$0xf]
    %v1939 = vld [vmem:[%s1 + $0x1f8] sm:$0xf]
    %v1940 = vld [vmem:[%s1 + $0x1fc] sm:$0xf]
    %v1941 = vld [vmem:[%s2 + $0x140] sm:$0x1]
    %v1942 = vperm.slane %v1941, 0
    %v1947 = vunpack.c.l.b16 %v1937
    %v1948 = vunpack.c.l.b16 %v1938
    %v1949 = vunpack.c.l.b16 %v1939
    %v1950 = vunpack.c.l.b16 %v1940
    %v1951 = vpack.c.b16 %v1948, %v1947
    %v1952 = vpack.c.b16 %v1950, %v1949
    %1955 = vmatpush.bf16.msra.mxu0 0
    %1956 = vmatpush.bf16.msra.mxu0 0
    %1957 = vmatpush.bf16.msra.mxu0 0
    %1958 = vmatpush.bf16.msra.mxu0 0
    %1959 = vmatpush.bf16.msra.mxu0 0
    %1960 = vmatpush.bf16.msra.mxu0 0
    %1961 = vmatpush.bf16.msra.mxu0 %v1952
    %1962 = vmatpush.bf16.msra.mxu0 %v1951
    %1963 = vmatmul.bf16.gmra.mxu0 %v1716
    %v1964 = vpop.f32.mrf.mxu0
    %v1965 = vadd.f32 %v1942, %v1964
    %v1966 = vpop.f32.mrf.mxu0
    %v1967 = vadd.f32 %v1942, %v1966
    %1968 = vdwg.mxu0
    %v1969 = vpack.c.bf16 %v1901, %v1901
    %v1970 = vpack.c.bf16 %v1933, %v1933
    %v1972 = vsel %vm336, %v1969, 0
    %v1975 = vsel %vm336, %v1970, 0
    %1977 = vmatpush.bf16.xpose.msra.mxu0 0
    %1978 = vmatpush.bf16.xpose.msra.mxu0 0
    %1979 = vmatpush.bf16.xpose.msra.mxu0 0
    %1980 = vmatpush.bf16.xpose.msra.mxu0 0
    %1981 = vmatpush.bf16.xpose.msra.mxu0 0
    %1982 = vmatpush.bf16.xpose.msra.mxu0 0
    %1983 = vmatpush.bf16.xpose.msra.mxu0 0
    %1984 = vmatpush.bf16.xpose.msra.mxu0 %v1975
    %1985 = vmatmul.bf16.gmra.mxu0 %v1972
    %v1986 = vpop.f32.mrf.mxu0
    %v1987 = vadd.f32 0.0, %v1986
    %v1988 = vpop.f32.mrf.mxu0
    %1989 = vdwg.mxu0
    %v1990 = vsel %vm1064, %v1987, -inf
    %1991 = vmax.xlane.f32.xlu0 %v1990
    %v1992 = vpop.xlane.xlu0 %1991
    %v1993 = vsub.f32 %v1987, %v1992
    %v1994 = vmul.f32 %v1993, 1.442695
    %v1995 = vpow.pop %v1994
    %v1996 = vsel %vm1064, %v1995, 0.0
    %1997 = vadd.xlane.f32.xlu0 %v1996
    %v1998 = vpop.xlane.xlu0 %1997
    %v1999 = vrcp.pop %v1998
    %v2000 = vmul.f32 %v1995, %v1999
    %v2001 = vpack.c.bf16 %v2000, %v2000
    %v2002 = vpack.c.bf16 %v1965, %v1965
    %v2004 = vsel %vm1064, %v2001, 0
    %v2007 = vsel %vm1081, %v2002, 0
    %2009 = vmatpush.bf16.msra.mxu0 0
    %2010 = vmatpush.bf16.msra.mxu0 0
    %2011 = vmatpush.bf16.msra.mxu0 0
    %2012 = vmatpush.bf16.msra.mxu0 0
    %2013 = vmatpush.bf16.msra.mxu0 0
    %2014 = vmatpush.bf16.msra.mxu0 0
    %2015 = vmatpush.bf16.msra.mxu0 0
    %2016 = vmatpush.bf16.msra.mxu0 %v2007
    %2017 = vmatmul.bf16.gmra.mxu0 %v2004
    %v2018 = vpop.f32.mrf.mxu0
    %v2019 = vadd.f32 0.0, %v2018
    %v2020 = vpop.f32.mrf.mxu0
    %2021 = vdwg.mxu0
    %v2022 = vpack.c.bf16 %v1903, %v1903
    %v2023 = vpack.c.bf16 %v1935, %v1935
    %v2025 = vsel %vm336, %v2022, 0
    %v2028 = vsel %vm336, %v2023, 0
    %2030 = vmatpush.bf16.xpose.msra.mxu0 0
    %2031 = vmatpush.bf16.xpose.msra.mxu0 0
    %2032 = vmatpush.bf16.xpose.msra.mxu0 0
    %2033 = vmatpush.bf16.xpose.msra.mxu0 0
    %2034 = vmatpush.bf16.xpose.msra.mxu0 0
    %2035 = vmatpush.bf16.xpose.msra.mxu0 0
    %2036 = vmatpush.bf16.xpose.msra.mxu0 0
    %2037 = vmatpush.bf16.xpose.msra.mxu0 %v2028
    %2038 = vmatmul.bf16.gmra.mxu0 %v2025
    %v2039 = vpop.f32.mrf.mxu0
    %v2040 = vadd.f32 0.0, %v2039
    %v2041 = vpop.f32.mrf.mxu0
    %2042 = vdwg.mxu0
    %v2043 = vsel %vm1064, %v2040, -inf
    %2044 = vmax.xlane.f32.xlu0 %v2043
    %v2045 = vpop.xlane.xlu0 %2044
    %v2046 = vsub.f32 %v2040, %v2045
    %v2047 = vmul.f32 %v2046, 1.442695
    %v2048 = vpow.pop %v2047
    %v2049 = vsel %vm1064, %v2048, 0.0
    %2050 = vadd.xlane.f32.xlu0 %v2049
    %v2051 = vpop.xlane.xlu0 %2050
    %v2052 = vrcp.pop %v2051
    %v2053 = vmul.f32 %v2048, %v2052
    %v2054 = vpack.c.bf16 %v2053, %v2053
    %v2055 = vpack.c.bf16 %v1967, %v1967
    %v2057 = vsel %vm1064, %v2054, 0
    %v2060 = vsel %vm1081, %v2055, 0
    %2062 = vmatpush.bf16.msra.mxu0 0
    %2063 = vmatpush.bf16.msra.mxu0 0
    %2064 = vmatpush.bf16.msra.mxu0 0
    %2065 = vmatpush.bf16.msra.mxu0 0
    %2066 = vmatpush.bf16.msra.mxu0 0
    %2067 = vmatpush.bf16.msra.mxu0 0
    %2068 = vmatpush.bf16.msra.mxu0 0
    %2069 = vmatpush.bf16.msra.mxu0 %v2060
    %2070 = vmatmul.bf16.gmra.mxu0 %v2057
    %v2071 = vpop.f32.mrf.mxu0
    %v2072 = vadd.f32 0.0, %v2071
    %v2073 = vpop.f32.mrf.mxu0
    %2074 = vdwg.mxu0
    %v2075 = vld [vmem:[%s1 + $0x200] sm:$0xf]
    %v2076 = vld [vmem:[%s1 + $0x204] sm:$0xf]
    %v2077 = vpack.c.bf16 %v2072, %v2019
    %v2080 = vunpack.c.l.b16 %v2075
    %v2081 = vunpack.c.l.b16 %v2076
    %v2082 = vpack.c.b16 %v2081, %v2080
    %v2085 = vsel %vm336, %v2077, 0
    %2087 = vmatpush.bf16.msra.mxu0 0
    %2088 = vmatpush.bf16.msra.mxu0 0
    %2089 = vmatpush.bf16.msra.mxu0 0
    %2090 = vmatpush.bf16.msra.mxu0 0
    %2091 = vmatpush.bf16.msra.mxu0 0
    %2092 = vmatpush.bf16.msra.mxu0 0
    %2093 = vmatpush.bf16.msra.mxu0 0
    %2094 = vmatpush.bf16.msra.mxu0 %v2082
    %2095 = vmatmul.bf16.gmra.mxu0 %v2085
    %v2096 = vpop.f32.mrf.mxu0
    %v2097 = vadd.f32 0.0, %v2096
    %v2098 = vpop.f32.mrf.mxu0
    %v2099 = vadd.f32 0.0, %v2098
    %2100 = vdwg.mxu0
    %v2103 = vunpack.c.l.b16 %v1870
    %v2104 = vunpack.c.l.b16 %v1871
    %v2105 = vpack.c.b16 %v2104, %v2103
    %v2108 = vsel %vm336, %v1872, 0
    %2110 = vmatpush.bf16.msra.mxu0 0
    %2111 = vmatpush.bf16.msra.mxu0 0
    %2112 = vmatpush.bf16.msra.mxu0 0
    %2113 = vmatpush.bf16.msra.mxu0 0
    %2114 = vmatpush.bf16.msra.mxu0 0
    %2115 = vmatpush.bf16.msra.mxu0 0
    %2116 = vmatpush.bf16.msra.mxu0 0
    %2117 = vmatpush.bf16.msra.mxu0 %v2105
    %2118 = vmatmul.bf16.gmra.mxu0 %v2108
    %v2119 = vpop.f32.mrf.mxu0
    %v2120 = vadd.f32 %v2097, %v2119
    %v2121 = vpop.f32.mrf.mxu0
    %v2122 = vadd.f32 %v2099, %v2121
    %2123 = vdwg.mxu0
    %v2124 = vld [vmem:[%s2 + $0x148] sm:$0x1]
    %v2125 = vperm.slane %v2124, 0
    %v2126 = vadd.f32 %v2120, %v2125
    %v2127 = vadd.f32 %v2122, %v2125
    %v2128 = vadd.f32 %v1598, %v2126
    %v2129 = vadd.f32 %v1599, %v2127
    %v2130 = vsel %vm81, %v2128, 0.0
    %2131 = vadd.xlane.f32.xlu0 %v2130
    %v2132 = vpop.xlane.xlu0 %2131
    %v2133 = vsel %vm81, %v2129, 0.0
    %2134 = vadd.xlane.f32.xlu0 %v2133
    %v2135 = vpop.xlane.xlu0 %2134
    %v2136 = vmul.f32 %v2132, %v91
    %v2137 = vmul.f32 %v2135, %v91
    %v2138 = vsub.f32 %v2128, %v2136
    %v2139 = vsub.f32 %v2129, %v2137
    %v2140 = vmul.f32 %v2138, %v2138
    %v2141 = vmul.f32 %v2139, %v2139
    %v2142 = vsel %vm81, %v2140, 0.0
    %2143 = vadd.xlane.f32.xlu0 %v2142
    %v2144 = vpop.xlane.xlu0 %2143
    %v2145 = vsel %vm81, %v2141, 0.0
    %2146 = vadd.xlane.f32.xlu0 %v2145
    %v2147 = vpop.xlane.xlu0 %2146
    %v2148 = vmul.f32 %v2144, %v91
    %v2149 = vmul.f32 %v2147, %v91
    %v2150 = vadd.f32 %v2148, 1e-05
    %v2151 = vadd.f32 %v2149, 1e-05
    %v2152 = vrsqrt.pop %v2150
    %v2153 = vmul.f32 %v2152, %v2150
    %v2154 = vmul.f32 %v2153, %v2152
    %v2155 = vmul.f32 0.5, %v2154
    %v2156 = vsub.f32 1.5, %v2155
    %v2157 = vmul.f32 %v2152, %v2156
    %vm2158 = vweird.f32 %v2150
    %vm2159 = vweird.f32 %v2152
    %vm2160 = vmor %vm2158, %vm2159
    %v2161 = vsel %vm2160, %v2152, %v2157
    %v2162 = vrsqrt.pop %v2151
    %v2163 = vmul.f32 %v2162, %v2151
    %v2164 = vmul.f32 %v2163, %v2162
    %v2165 = vmul.f32 0.5, %v2164
    %v2166 = vsub.f32 1.5, %v2165
    %v2167 = vmul.f32 %v2162, %v2166
    %vm2168 = vweird.f32 %v2151
    %vm2169 = vweird.f32 %v2162
    %vm2170 = vmor %vm2168, %vm2169
    %v2171 = vsel %vm2170, %v2162, %v2167
    %v2172 = vmul.f32 %v2138, %v2161
    %v2173 = vmul.f32 %v2139, %v2171
    %v2174 = vld [vmem:[%s2 + $0x170] sm:$0x1]
    %v2175 = vperm.slane %v2174, 0
    %v2176 = vmul.f32 %v2172, %v2175
    %v2177 = vmul.f32 %v2173, %v2175
    %v2178 = vld [vmem:[%s2 + $0x178] sm:$0x1]
    %v2179 = vperm.slane %v2178, 0
    %v2180 = vadd.f32 %v2176, %v2179
    %v2181 = vadd.f32 %v2177, %v2179
    %v2182 = vld [vmem:[%s1 + $0x208] sm:$0xf]
    %v2183 = vld [vmem:[%s1 + $0x20c] sm:$0xf]
    %v2184 = vld [vmem:[%s1 + $0x210] sm:$0xf]
    %v2185 = vld [vmem:[%s1 + $0x214] sm:$0xf]
    %v2186 = vpack.c.bf16 %v2181, %v2180
    %v2187 = vld [vmem:[%s2 + $0x180] sm:$0x1]
    %v2188 = vperm.slane %v2187, 0
    %v2193 = vunpack.c.l.b16 %v2182
    %v2194 = vunpack.c.l.b16 %v2183
    %v2195 = vunpack.c.l.b16 %v2184
    %v2196 = vunpack.c.l.b16 %v2185
    %v2197 = vpack.c.b16 %v2194, %v2193
    %v2198 = vpack.c.b16 %v2196, %v2195
    %v2202 = vsel %vm81, %v2186, 0
    %2204 = vmatpush.bf16.msra.mxu0 0
    %2205 = vmatpush.bf16.msra.mxu0 0
    %2206 = vmatpush.bf16.msra.mxu0 0
    %2207 = vmatpush.bf16.msra.mxu0 0
    %2208 = vmatpush.bf16.msra.mxu0 0
    %2209 = vmatpush.bf16.msra.mxu0 0
    %2210 = vmatpush.bf16.msra.mxu0 %v2198
    %2211 = vmatpush.bf16.msra.mxu0 %v2197
    %2212 = vmatmul.bf16.gmra.mxu0 %v2202
    %v2213 = vpop.f32.mrf.mxu0
    %v2214 = vadd.f32 %v2188, %v2213
    %v2215 = vpop.f32.mrf.mxu0
    %v2216 = vadd.f32 %v2188, %v2215
    %2217 = vdwg.mxu0
    %v2218 = vmul.f32 %v2214, %v2214
    %v2219 = vmul.f32 %v2216, %v2216
    %v2220 = vmul.f32 %v2214, %v2218
    %v2221 = vmul.f32 %v2216, %v2219
    %v2222 = vmul.f32 %v2220, 0.044715
    %v2223 = vmul.f32 %v2221, 0.044715
    %v2224 = vadd.f32 %v2214, %v2222
    %v2225 = vadd.f32 %v2216, %v2223
    %v2226 = vmul.f32 %v2224, 0.7978846
    %v2227 = vmul.f32 %v2225, 0.7978846
    %v2228 = vtanh.pop %v2226
    %v2229 = vtanh.pop %v2227
    %v2230 = vadd.f32 %v2228, 1.0
    %v2231 = vadd.f32 %v2229, 1.0
    %v2232 = vmul.f32 %v2230, 0.5
    %v2233 = vmul.f32 %v2231, 0.5
    %v2234 = vmul.f32 %v2214, %v2232
    %v2235 = vmul.f32 %v2216, %v2233
    %v2236 = vld [vmem:[%s1 + $0x218] sm:$0xf]
    %v2237 = vld [vmem:[%s1 + $0x21c] sm:$0xf]
    %v2238 = vld [vmem:[%s1 + $0x220] sm:$0xf]
    %v2239 = vld [vmem:[%s1 + $0x224] sm:$0xf]
    %v2240 = vld [vmem:[%s1 + $0x228] sm:$0xf]
    %v2241 = vld [vmem:[%s1 + $0x22c] sm:$0xf]
    %v2242 = vld [vmem:[%s1 + $0x230] sm:$0xf]
    %v2243 = vld [vmem:[%s1 + $0x234] sm:$0xf]
    %v2244 = vld [vmem:[%s1 + $0x238] sm:$0xf]
    %v2245 = vld [vmem:[%s1 + $0x23c] sm:$0xf]
    %v2246 = vld [vmem:[%s1 + $0x240] sm:$0xf]
    %v2247 = vld [vmem:[%s1 + $0x244] sm:$0xf]
    %v2248 = vld [vmem:[%s1 + $0x248] sm:$0xf]
    %v2249 = vld [vmem:[%s1 + $0x24c] sm:$0xf]
    %v2250 = vld [vmem:[%s1 + $0x250] sm:$0xf]
    %v2251 = vld [vmem:[%s1 + $0x254] sm:$0xf]
    %v2252 = vpack.c.bf16 %v2235, %v2234
    %v2253 = vld [vmem:[%s2 + $0x188] sm:$0x1]
    %v2254 = vperm.slane %v2253, 0
    %v2271 = vunpack.c.l.b16 %v2236
    %v2272 = vunpack.c.l.b16 %v2237
    %v2273 = vunpack.c.l.b16 %v2238
    %v2274 = vunpack.c.l.b16 %v2239
    %v2275 = vunpack.c.l.b16 %v2240
    %v2276 = vunpack.c.l.b16 %v2241
    %v2277 = vunpack.c.l.b16 %v2242
    %v2278 = vunpack.c.l.b16 %v2243
    %v2279 = vunpack.c.l.b16 %v2244
    %v2280 = vunpack.c.l.b16 %v2245
    %v2281 = vunpack.c.l.b16 %v2246
    %v2282 = vunpack.c.l.b16 %v2247
    %v2283 = vunpack.c.l.b16 %v2248
    %v2284 = vunpack.c.l.b16 %v2249
    %v2285 = vunpack.c.l.b16 %v2250
    %v2286 = vunpack.c.l.b16 %v2251
    %v2287 = vpack.c.b16 %v2272, %v2271
    %v2288 = vpack.c.b16 %v2274, %v2273
    %v2289 = vpack.c.b16 %v2276, %v2275
    %v2290 = vpack.c.b16 %v2278, %v2277
    %v2291 = vpack.c.b16 %v2280, %v2279
    %v2292 = vpack.c.b16 %v2282, %v2281
    %v2293 = vpack.c.b16 %v2284, %v2283
    %v2294 = vpack.c.b16 %v2286, %v2285
    %2303 = vmatpush.bf16.msra.mxu0 %v2294
    %2304 = vmatpush.bf16.msra.mxu0 %v2293
    %2305 = vmatpush.bf16.msra.mxu0 %v2292
    %2306 = vmatpush.bf16.msra.mxu0 %v2291
    %2307 = vmatpush.bf16.msra.mxu0 %v2290
    %2308 = vmatpush.bf16.msra.mxu0 %v2289
    %2309 = vmatpush.bf16.msra.mxu0 %v2288
    %2310 = vmatpush.bf16.msra.mxu0 %v2287
    %2311 = vmatmul.bf16.gmra.mxu0 %v2252
    %v2312 = vpop.f32.mrf.mxu0
    %v2313 = vadd.f32 %v2254, %v2312
    %v2314 = vpop.f32.mrf.mxu0
    %v2315 = vadd.f32 %v2254, %v2314
    %2316 = vdwg.mxu0
    %v2317 = vadd.f32 %v2128, %v2313
    %v2318 = vadd.f32 %v2129, %v2315
    %v2319 = vld [vmem:[%s2 + $0x18] sm:$0x1]
    %vm2320 = vcmask 253952
    %v2321 = vsel %vm2320, %v2319, 0.0
    %2322 = vadd.xlane.f32.xlu0 %v2321
    %v2323 = vpop.xlane.xlu0 %2322
    %v2324 = vmul.f32 %v2323, %v91
    %v2325 = vsub.f32 %v2319, %v2324
    %v2326 = vmul.f32 %v2325, %v2325
    %v2327 = vsel %vm2320, %v2326, 0.0
    %2328 = vadd.xlane.f32.xlu0 %v2327
    %v2329 = vpop.xlane.xlu0 %2328
    %v2330 = vmul.f32 %v2329, %v91
    %v2331 = vadd.f32 %v2330, 1e-05
    %v2332 = vrsqrt.pop %v2331
    %v2333 = vmul.f32 %v2332, %v2331
    %v2334 = vmul.f32 %v2333, %v2332
    %v2335 = vmul.f32 0.5, %v2334
    %v2336 = vsub.f32 1.5, %v2335
    %v2337 = vmul.f32 %v2332, %v2336
    %vm2338 = vweird.f32 %v2331
    %vm2339 = vweird.f32 %v2332
    %vm2340 = vmor %vm2338, %vm2339
    %v2341 = vsel %vm2340, %v2332, %v2337
    %v2342 = vmul.f32 %v2325, %v2341
    %v2343 = vld [vmem:[%s2 + $0x1c8] sm:$0x1]
    %v2344 = vmul.f32 %v2342, %v2343
    %v2345 = vld [vmem:[%s2 + $0x1d0] sm:$0x1]
    %v2346 = vadd.f32 %v2344, %v2345
    %v2347 = vsel %vm81, %v2317, 0.0
    %2348 = vadd.xlane.f32.xlu0 %v2347
    %v2349 = vpop.xlane.xlu0 %2348
    %v2350 = vsel %vm81, %v2318, 0.0
    %2351 = vadd.xlane.f32.xlu0 %v2350
    %v2352 = vpop.xlane.xlu0 %2351
    %v2353 = vmul.f32 %v2349, %v91
    %v2354 = vmul.f32 %v2352, %v91
    %v2355 = vsub.f32 %v2317, %v2353
    %v2356 = vsub.f32 %v2318, %v2354
    %v2357 = vmul.f32 %v2355, %v2355
    %v2358 = vmul.f32 %v2356, %v2356
    %v2359 = vsel %vm81, %v2357, 0.0
    %2360 = vadd.xlane.f32.xlu0 %v2359
    %v2361 = vpop.xlane.xlu0 %2360
    %v2362 = vsel %vm81, %v2358, 0.0
    %2363 = vadd.xlane.f32.xlu0 %v2362
    %v2364 = vpop.xlane.xlu0 %2363
    %v2365 = vmul.f32 %v2361, %v91
    %v2366 = vmul.f32 %v2364, %v91
    %v2367 = vadd.f32 %v2365, 1e-05
    %v2368 = vadd.f32 %v2366, 1e-05
    %v2369 = vrsqrt.pop %v2367
    %v2370 = vmul.f32 %v2369, %v2367
    %v2371 = vmul.f32 %v2370, %v2369
    %v2372 = vmul.f32 0.5, %v2371
    %v2373 = vsub.f32 1.5, %v2372
    %v2374 = vmul.f32 %v2369, %v2373
    %vm2375 = vweird.f32 %v2367
    %vm2376 = vweird.f32 %v2369
    %vm2377 = vmor %vm2375, %vm2376
    %v2378 = vsel %vm2377, %v2369, %v2374
    %v2379 = vrsqrt.pop %v2368
    %v2380 = vmul.f32 %v2379, %v2368
    %v2381 = vmul.f32 %v2380, %v2379
    %v2382 = vmul.f32 0.5, %v2381
    %v2383 = vsub.f32 1.5, %v2382
    %v2384 = vmul.f32 %v2379, %v2383
    %vm2385 = vweird.f32 %v2368
    %vm2386 = vweird.f32 %v2379
    %vm2387 = vmor %vm2385, %vm2386
    %v2388 = vsel %vm2387, %v2379, %v2384
    %v2389 = vmul.f32 %v2355, %v2378
    %v2390 = vmul.f32 %v2356, %v2388
    %v2391 = vld [vmem:[%s2 + $0x1d8] sm:$0x1]
    %v2392 = vperm.slane %v2391, 0
    %v2393 = vmul.f32 %v2389, %v2392
    %v2394 = vmul.f32 %v2390, %v2392
    %v2395 = vld [vmem:[%s2 + $0x1e0] sm:$0x1]
    %v2396 = vperm.slane %v2395, 0
    %v2397 = vadd.f32 %v2393, %v2396
    %v2398 = vadd.f32 %v2394, %v2396
    %v2399 = vld [vmem:[%s1 + $0x258] sm:$0xf]
    %v2400 = vld [vmem:[%s1 + $0x25c] sm:$0xf]
    %v2401 = vld [vmem:[%s1 + $0x260] sm:$0xf]
    %v2402 = vld [vmem:[%s1 + $0x264] sm:$0xf]
    %v2403 = vpack.c.bf16 %v2346, %v2346
    %v2404 = vld [vmem:[%s2 + $0x190] sm:$0x1]
    %v2409 = vunpack.c.l.b16 %v2399
    %v2410 = vunpack.c.l.b16 %v2400
    %v2411 = vunpack.c.l.b16 %v2401
    %v2412 = vunpack.c.l.b16 %v2402
    %v2413 = vpack.c.b16 %v2410, %v2409
    %v2414 = vpack.c.b16 %v2412, %v2411
    %v2418 = vsel %vm81, %v2403, 0
    %2420 = vmatpush.bf16.msra.mxu0 0
    %2421 = vmatpush.bf16.msra.mxu0 0
    %2422 = vmatpush.bf16.msra.mxu0 0
    %2423 = vmatpush.bf16.msra.mxu0 0
    %2424 = vmatpush.bf16.msra.mxu0 0
    %2425 = vmatpush.bf16.msra.mxu0 0
    %2426 = vmatpush.bf16.msra.mxu0 %v2414
    %2427 = vmatpush.bf16.msra.mxu0 %v2413
    %2428 = vmatmul.bf16.gmra.mxu0 %v2418
    %v2429 = vpop.f32.mrf.mxu0
    %v2430 = vadd.f32 %v2404, %v2429
    %v2431 = vpop.f32.mrf.mxu0
    %2432 = vdwg.mxu0
    %v2433 = vld [vmem:[%s1 + $0x268] sm:$0xf]
    %v2434 = vld [vmem:[%s1 + $0x26c] sm:$0xf]
    %v2435 = vld [vmem:[%s1 + $0x270] sm:$0xf]
    %v2436 = vld [vmem:[%s1 + $0x274] sm:$0xf]
    %v2437 = vpack.c.bf16 %v2398, %v2397
    %v2438 = vld [vmem:[%s2 + $0x198] sm:$0x1]
    %v2439 = vperm.slane %v2438, 0
    %v2444 = vunpack.c.l.b16 %v2433
    %v2445 = vunpack.c.l.b16 %v2434
    %v2446 = vunpack.c.l.b16 %v2435
    %v2447 = vunpack.c.l.b16 %v2436
    %v2448 = vpack.c.b16 %v2445, %v2444
    %v2449 = vpack.c.b16 %v2447, %v2446
    %v2453 = vsel %vm81, %v2437, 0
    %2455 = vmatpush.bf16.msra.mxu0 0
    %2456 = vmatpush.bf16.msra.mxu0 0
    %2457 = vmatpush.bf16.msra.mxu0 0
    %2458 = vmatpush.bf16.msra.mxu0 0
    %2459 = vmatpush.bf16.msra.mxu0 0
    %2460 = vmatpush.bf16.msra.mxu0 0
    %2461 = vmatpush.bf16.msra.mxu0 %v2449
    %2462 = vmatpush.bf16.msra.mxu0 %v2448
    %2463 = vmatmul.bf16.gmra.mxu0 %v2453
    %v2464 = vpop.f32.mrf.mxu0
    %v2465 = vadd.f32 %v2439, %v2464
    %v2466 = vpop.f32.mrf.mxu0
    %v2467 = vadd.f32 %v2439, %v2466
    %2468 = vdwg.mxu0
    %v2469 = vld [vmem:[%s1 + $0x278] sm:$0xf]
    %v2470 = vld [vmem:[%s1 + $0x27c] sm:$0xf]
    %v2471 = vld [vmem:[%s1 + $0x280] sm:$0xf]
    %v2472 = vld [vmem:[%s1 + $0x284] sm:$0xf]
    %v2473 = vld [vmem:[%s2 + $0x1a0] sm:$0x1]
    %v2474 = vperm.slane %v2473, 0
    %v2479 = vunpack.c.l.b16 %v2469
    %v2480 = vunpack.c.l.b16 %v2470
    %v2481 = vunpack.c.l.b16 %v2471
    %v2482 = vunpack.c.l.b16 %v2472
    %v2483 = vpack.c.b16 %v2480, %v2479
    %v2484 = vpack.c.b16 %v2482, %v2481
    %2487 = vmatpush.bf16.msra.mxu0 0
    %2488 = vmatpush.bf16.msra.mxu0 0
    %2489 = vmatpush.bf16.msra.mxu0 0
    %2490 = vmatpush.bf16.msra.mxu0 0
    %2491 = vmatpush.bf16.msra.mxu0 0
    %2492 = vmatpush.bf16.msra.mxu0 0
    %2493 = vmatpush.bf16.msra.mxu0 %v2484
    %2494 = vmatpush.bf16.msra.mxu0 %v2483
    %2495 = vmatmul.bf16.gmra.mxu0 %v2453
    %v2496 = vpop.f32.mrf.mxu0
    %v2497 = vadd.f32 %v2474, %v2496
    %v2498 = vpop.f32.mrf.mxu0
    %v2499 = vadd.f32 %v2474, %v2498
    %2500 = vdwg.mxu0
    %v2501 = vpack.c.bf16 %v2430, %v2430
    %v2502 = vpack.c.bf16 %v2465, %v2465
    %v2504 = vsel %vm336, %v2501, 0
    %v2507 = vsel %vm336, %v2502, 0
    %2509 = vmatpush.bf16.xpose.msra.mxu0 0
    %2510 = vmatpush.bf16.xpose.msra.mxu0 0
    %2511 = vmatpush.bf16.xpose.msra.mxu0 0
    %2512 = vmatpush.bf16.xpose.msra.mxu0 0
    %2513 = vmatpush.bf16.xpose.msra.mxu0 0
    %2514 = vmatpush.bf16.xpose.msra.mxu0 0
    %2515 = vmatpush.bf16.xpose.msra.mxu0 0
    %2516 = vmatpush.bf16.xpose.msra.mxu0 %v2507
    %2517 = vmatmul.bf16.gmra.mxu0 %v2504
    %v2518 = vpop.f32.mrf.mxu0
    %v2519 = vadd.f32 0.0, %v2518
    %v2520 = vpop.f32.mrf.mxu0
    %2521 = vdwg.mxu0
    %vm2522 = vcmask 57344
    %v2523 = vsel %vm2522, %v2519, -inf
    %2524 = vmax.xlane.f32.xlu0 %v2523
    %v2525 = vpop.xlane.xlu0 %2524
    %v2526 = vsub.f32 %v2519, %v2525
    %v2527 = vmul.f32 %v2526, 1.442695
    %v2528 = vpow.pop %v2527
    %v2529 = vsel %vm2522, %v2528, 0.0
    %2530 = vadd.xlane.f32.xlu0 %v2529
    %v2531 = vpop.xlane.xlu0 %2530
    %v2532 = vrcp.pop %v2531
    %v2533 = vmul.f32 %v2528, %v2532
    %v2534 = vpack.c.bf16 %v2533, %v2533
    %v2535 = vpack.c.bf16 %v2497, %v2497
    %v2537 = vsel %vm1064, %v2534, 0
    %v2540 = vsel %vm1081, %v2535, 0
    %2542 = vmatpush.bf16.msra.mxu0 0
    %2543 = vmatpush.bf16.msra.mxu0 0
    %2544 = vmatpush.bf16.msra.mxu0 0
    %2545 = vmatpush.bf16.msra.mxu0 0
    %2546 = vmatpush.bf16.msra.mxu0 0
    %2547 = vmatpush.bf16.msra.mxu0 0
    %2548 = vmatpush.bf16.msra.mxu0 0
    %2549 = vmatpush.bf16.msra.mxu0 %v2540
    %2550 = vmatmul.bf16.gmra.mxu0 %v2537
    %v2551 = vpop.f32.mrf.mxu0
    %v2552 = vadd.f32 0.0, %v2551
    %v2553 = vpop.f32.mrf.mxu0
    %2554 = vdwg.mxu0
    %v2555 = vpack.c.bf16 %v2467, %v2467
    %v2557 = vsel %vm336, %v2555, 0
    %2559 = vmatpush.bf16.xpose.msra.mxu0 0
    %2560 = vmatpush.bf16.xpose.msra.mxu0 0
    %2561 = vmatpush.bf16.xpose.msra.mxu0 0
    %2562 = vmatpush.bf16.xpose.msra.mxu0 0
    %2563 = vmatpush.bf16.xpose.msra.mxu0 0
    %2564 = vmatpush.bf16.xpose.msra.mxu0 0
    %2565 = vmatpush.bf16.xpose.msra.mxu0 0
    %2566 = vmatpush.bf16.xpose.msra.mxu0 %v2557
    %2567 = vmatmul.bf16.gmra.mxu0 %v2504
    %v2568 = vpop.f32.mrf.mxu0
    %v2569 = vadd.f32 0.0, %v2568
    %v2570 = vpop.f32.mrf.mxu0
    %2571 = vdwg.mxu0
    %v2572 = vsel %vm2522, %v2569, -inf
    %2573 = vmax.xlane.f32.xlu0 %v2572
    %v2574 = vpop.xlane.xlu0 %2573
    %v2575 = vsub.f32 %v2569, %v2574
    %v2576 = vmul.f32 %v2575, 1.442695
    %v2577 = vpow.pop %v2576
    %v2578 = vsel %vm2522, %v2577, 0.0
    %2579 = vadd.xlane.f32.xlu0 %v2578
    %v2580 = vpop.xlane.xlu0 %2579
    %v2581 = vrcp.pop %v2580
    %v2582 = vmul.f32 %v2577, %v2581
    %v2583 = vpack.c.bf16 %v2582, %v2582
    %v2584 = vpack.c.bf16 %v2499, %v2499
    %v2586 = vsel %vm1064, %v2583, 0
    %v2589 = vsel %vm1081, %v2584, 0
    %2591 = vmatpush.bf16.msra.mxu0 0
    %2592 = vmatpush.bf16.msra.mxu0 0
    %2593 = vmatpush.bf16.msra.mxu0 0
    %2594 = vmatpush.bf16.msra.mxu0 0
    %2595 = vmatpush.bf16.msra.mxu0 0
    %2596 = vmatpush.bf16.msra.mxu0 0
    %2597 = vmatpush.bf16.msra.mxu0 0
    %2598 = vmatpush.bf16.msra.mxu0 %v2589
    %2599 = vmatmul.bf16.gmra.mxu0 %v2586
    %v2600 = vpop.f32.mrf.mxu0
    %v2601 = vadd.f32 0.0, %v2600
    %v2602 = vpop.f32.mrf.mxu0
    %2603 = vdwg.mxu0
    %v2605 = vrot.slane %v2601, 7
    %vm2607 = vcmask 1040384
    %v2608 = vsel %vm2607, %v2552, %v2605
    %v2609 = vld [vmem:[%s1 + $0x288] sm:$0xf]
    %v2610 = vld [vmem:[%s1 + $0x28c] sm:$0xf]
    %v2611 = vpack.c.bf16 %v2608, %v2608
    %v2612 = vld [vmem:[%s1 + $0x290] sm:$0xf]
    %v2613 = vld [vmem:[%s1 + $0x294] sm:$0xf]
    %v2614 = vld [vmem:[%s1 + $0x298] sm:$0xf]
    %v2615 = vld [vmem:[%s1 + $0x29c] sm:$0xf]
    %v2616 = vld [vmem:[%s2 + $0x1a8] sm:$0x1]
    %v2621 = vunpack.c.l.b16 %v2612
    %v2622 = vunpack.c.l.b16 %v2613
    %v2623 = vunpack.c.l.b16 %v2614
    %v2624 = vunpack.c.l.b16 %v2615
    %v2625 = vpack.c.b16 %v2622, %v2621
    %v2626 = vpack.c.b16 %v2624, %v2623
    %2629 = vmatpush.bf16.msra.mxu0 0
    %2630 = vmatpush.bf16.msra.mxu0 0
    %2631 = vmatpush.bf16.msra.mxu0 0
    %2632 = vmatpush.bf16.msra.mxu0 0
    %2633 = vmatpush.bf16.msra.mxu0 0
    %2634 = vmatpush.bf16.msra.mxu0 0
    %2635 = vmatpush.bf16.msra.mxu0 %v2626
    %2636 = vmatpush.bf16.msra.mxu0 %v2625
    %2637 = vmatmul.bf16.gmra.mxu0 %v2418
    %v2638 = vpop.f32.mrf.mxu0
    %v2639 = vadd.f32 %v2616, %v2638
    %v2640 = vpop.f32.mrf.mxu0
    %2641 = vdwg.mxu0
    %v2642 = vld [vmem:[%s1 + $0x2a0] sm:$0xf]
    %v2643 = vld [vmem:[%s1 + $0x2a4] sm:$0xf]
    %v2644 = vld [vmem:[%s1 + $0x2a8] sm:$0xf]
    %v2645 = vld [vmem:[%s1 + $0x2ac] sm:$0xf]
    %v2646 = vld [vmem:[%s2 + $0x1b0] sm:$0x1]
    %v2647 = vperm.slane %v2646, 0
    %v2652 = vunpack.c.l.b16 %v2642
    %v2653 = vunpack.c.l.b16 %v2643
    %v2654 = vunpack.c.l.b16 %v2644
    %v2655 = vunpack.c.l.b16 %v2645
    %v2656 = vpack.c.b16 %v2653, %v2652
    %v2657 = vpack.c.b16 %v2655, %v2654
    %2660 = vmatpush.bf16.msra.mxu0 0
    %2661 = vmatpush.bf16.msra.mxu0 0
    %2662 = vmatpush.bf16.msra.mxu0 0
    %2663 = vmatpush.bf16.msra.mxu0 0
    %2664 = vmatpush.bf16.msra.mxu0 0
    %2665 = vmatpush.bf16.msra.mxu0 0
    %2666 = vmatpush.bf16.msra.mxu0 %v2657
    %2667 = vmatpush.bf16.msra.mxu0 %v2656
    %2668 = vmatmul.bf16.gmra.mxu0 %v2453
    %v2669 = vpop.f32.mrf.mxu0
    %v2670 = vadd.f32 %v2647, %v2669
    %v2671 = vpop.f32.mrf.mxu0
    %v2672 = vadd.f32 %v2647, %v2671
    %2673 = vdwg.mxu0
    %v2674 = vld [vmem:[%s1 + $0x2b0] sm:$0xf]
    %v2675 = vld [vmem:[%s1 + $0x2b4] sm:$0xf]
    %v2676 = vld [vmem:[%s1 + $0x2b8] sm:$0xf]
    %v2677 = vld [vmem:[%s1 + $0x2bc] sm:$0xf]
    %v2678 = vld [vmem:[%s2 + $0x1b8] sm:$0x1]
    %v2679 = vperm.slane %v2678, 0
    %v2684 = vunpack.c.l.b16 %v2674
    %v2685 = vunpack.c.l.b16 %v2675
    %v2686 = vunpack.c.l.b16 %v2676
    %v2687 = vunpack.c.l.b16 %v2677
    %v2688 = vpack.c.b16 %v2685, %v2684
    %v2689 = vpack.c.b16 %v2687, %v2686
    %2692 = vmatpush.bf16.msra.mxu0 0
    %2693 = vmatpush.bf16.msra.mxu0 0
    %2694 = vmatpush.bf16.msra.mxu0 0
    %2695 = vmatpush.bf16.msra.mxu0 0
    %2696 = vmatpush.bf16.msra.mxu0 0
    %2697 = vmatpush.bf16.msra.mxu0 0
    %2698 = vmatpush.bf16.msra.mxu0 %v2689
    %2699 = vmatpush.bf16.msra.mxu0 %v2688
    %2700 = vmatmul.bf16.gmra.mxu0 %v2453
    %v2701 = vpop.f32.mrf.mxu0
    %v2702 = vadd.f32 %v2679, %v2701
    %v2703 = vpop.f32.mrf.mxu0
    %v2704 = vadd.f32 %v2679, %v2703
    %2705 = vdwg.mxu0
    %v2706 = vpack.c.bf16 %v2639, %v2639
    %v2707 = vpack.c.bf16 %v2670, %v2670
    %v2709 = vsel %vm336, %v2706, 0
    %v2712 = vsel %vm336, %v2707, 0
    %2714 = vmatpush.bf16.xpose.msra.mxu0 0
    %2715 = vmatpush.bf16.xpose.msra.mxu0 0
    %2716 = vmatpush.bf16.xpose.msra.mxu0 0
    %2717 = vmatpush.bf16.xpose.msra.mxu0 0
    %2718 = vmatpush.bf16.xpose.msra.mxu0 0
    %2719 = vmatpush.bf16.xpose.msra.mxu0 0
    %2720 = vmatpush.bf16.xpose.msra.mxu0 0
    %2721 = vmatpush.bf16.xpose.msra.mxu0 %v2712
    %2722 = vmatmul.bf16.gmra.mxu0 %v2709
    %v2723 = vpop.f32.mrf.mxu0
    %v2724 = vadd.f32 0.0, %v2723
    %v2725 = vpop.f32.mrf.mxu0
    %2726 = vdwg.mxu0
    %v2727 = vsel %vm2522, %v2724, -inf
    %2728 = vmax.xlane.f32.xlu0 %v2727
    %v2729 = vpop.xlane.xlu0 %2728
    %v2730 = vsub.f32 %v2724, %v2729
    %v2731 = vmul.f32 %v2730, 1.442695
    %v2732 = vpow.pop %v2731
    %v2733 = vsel %vm2522, %v2732, 0.0
    %2734 = vadd.xlane.f32.xlu0 %v2733
    %v2735 = vpop.xlane.xlu0 %2734
    %v2736 = vrcp.pop %v2735
    %v2737 = vmul.f32 %v2732, %v2736
    %v2738 = vpack.c.bf16 %v2737, %v2737
    %v2739 = vpack.c.bf16 %v2702, %v2702
    %v2741 = vsel %vm1064, %v2738, 0
    %v2744 = vsel %vm1081, %v2739, 0
    %2746 = vmatpush.bf16.msra.mxu0 0
    %2747 = vmatpush.bf16.msra.mxu0 0
    %2748 = vmatpush.bf16.msra.mxu0 0
    %2749 = vmatpush.bf16.msra.mxu0 0
    %2750 = vmatpush.bf16.msra.mxu0 0
    %2751 = vmatpush.bf16.msra.mxu0 0
    %2752 = vmatpush.bf16.msra.mxu0 0
    %2753 = vmatpush.bf16.msra.mxu0 %v2744
    %2754 = vmatmul.bf16.gmra.mxu0 %v2741
    %v2755 = vpop.f32.mrf.mxu0
    %v2756 = vadd.f32 0.0, %v2755
    %v2757 = vpop.f32.mrf.mxu0
    %2758 = vdwg.mxu0
    %v2759 = vpack.c.bf16 %v2672, %v2672
    %v2761 = vsel %vm336, %v2759, 0
    %2763 = vmatpush.bf16.xpose.msra.mxu0 0
    %2764 = vmatpush.bf16.xpose.msra.mxu0 0
    %2765 = vmatpush.bf16.xpose.msra.mxu0 0
    %2766 = vmatpush.bf16.xpose.msra.mxu0 0
    %2767 = vmatpush.bf16.xpose.msra.mxu0 0
    %2768 = vmatpush.bf16.xpose.msra.mxu0 0
    %2769 = vmatpush.bf16.xpose.msra.mxu0 0
    %2770 = vmatpush.bf16.xpose.msra.mxu0 %v2761
    %2771 = vmatmul.bf16.gmra.mxu0 %v2709
    %v2772 = vpop.f32.mrf.mxu0
    %v2773 = vadd.f32 0.0, %v2772
    %v2774 = vpop.f32.mrf.mxu0
    %2775 = vdwg.mxu0
    %v2776 = vsel %vm2522, %v2773, -inf
    %2777 = vmax.xlane.f32.xlu0 %v2776
    %v2778 = vpop.xlane.xlu0 %2777
    %v2779 = vsub.f32 %v2773, %v2778
    %v2780 = vmul.f32 %v2779, 1.442695
    %v2781 = vpow.pop %v2780
    %v2782 = vsel %vm2522, %v2781, 0.0
    %2783 = vadd.xlane.f32.xlu0 %v2782
    %v2784 = vpop.xlane.xlu0 %2783
    %v2785 = vrcp.pop %v2784
    %v2786 = vmul.f32 %v2781, %v2785
    %v2787 = vpack.c.bf16 %v2786, %v2786
    %v2788 = vpack.c.bf16 %v2704, %v2704
    %v2790 = vsel %vm1064, %v2787, 0
    %v2793 = vsel %vm1081, %v2788, 0
    %2795 = vmatpush.bf16.msra.mxu0 0
    %2796 = vmatpush.bf16.msra.mxu0 0
    %2797 = vmatpush.bf16.msra.mxu0 0
    %2798 = vmatpush.bf16.msra.mxu0 0
    %2799 = vmatpush.bf16.msra.mxu0 0
    %2800 = vmatpush.bf16.msra.mxu0 0
    %2801 = vmatpush.bf16.msra.mxu0 0
    %2802 = vmatpush.bf16.msra.mxu0 %v2793
    %2803 = vmatmul.bf16.gmra.mxu0 %v2790
    %v2804 = vpop.f32.mrf.mxu0
    %v2805 = vadd.f32 0.0, %v2804
    %v2806 = vpop.f32.mrf.mxu0
    %2807 = vdwg.mxu0
    %v2809 = vrot.slane %v2805, 7
    %v2811 = vsel %vm2607, %v2756, %v2809
    %v2812 = vld [vmem:[%s1 + $0x2c0] sm:$0xf]
    %v2813 = vld [vmem:[%s1 + $0x2c4] sm:$0xf]
    %v2814 = vpack.c.bf16 %v2811, %v2811
    %v2817 = vunpack.c.l.b16 %v2812
    %v2818 = vunpack.c.l.b16 %v2813
    %v2819 = vpack.c.b16 %v2818, %v2817
    %v2822 = vsel %vm336, %v2814, 0
    %2824 = vmatpush.bf16.msra.mxu0 0
    %2825 = vmatpush.bf16.msra.mxu0 0
    %2826 = vmatpush.bf16.msra.mxu0 0
    %2827 = vmatpush.bf16.msra.mxu0 0
    %2828 = vmatpush.bf16.msra.mxu0 0
    %2829 = vmatpush.bf16.msra.mxu0 0
    %2830 = vmatpush.bf16.msra.mxu0 0
    %2831 = vmatpush.bf16.msra.mxu0 %v2819
    %2832 = vmatmul.bf16.gmra.mxu0 %v2822
    %v2833 = vpop.f32.mrf.mxu0
    %v2834 = vadd.f32 0.0, %v2833
    %v2835 = vpop.f32.mrf.mxu0
    %2836 = vdwg.mxu0
    %v2839 = vunpack.c.l.b16 %v2609
    %v2840 = vunpack.c.l.b16 %v2610
    %v2841 = vpack.c.b16 %v2840, %v2839
    %v2844 = vsel %vm336, %v2611, 0
    %2846 = vmatpush.bf16.msra.mxu0 0
    %2847 = vmatpush.bf16.msra.mxu0 0
    %2848 = vmatpush.bf16.msra.mxu0 0
    %2849 = vmatpush.bf16.msra.mxu0 0
    %2850 = vmatpush.bf16.msra.mxu0 0
    %2851 = vmatpush.bf16.msra.mxu0 0
    %2852 = vmatpush.bf16.msra.mxu0 0
    %2853 = vmatpush.bf16.msra.mxu0 %v2841
    %2854 = vmatmul.bf16.gmra.mxu0 %v2844
    %v2855 = vpop.f32.mrf.mxu0
    %v2856 = vadd.f32 %v2834, %v2855
    %v2857 = vpop.f32.mrf.mxu0
    %2858 = vdwg.mxu0
    %v2859 = vld [vmem:[%s2 + $0x1c0] sm:$0x1]
    %v2860 = vperm.slane %v2859, 0
    %v2861 = vadd.f32 %v2856, %v2860
    %v2862 = vld [vmem:[%s1 + $0x2c8] sm:$0xf]
    %v2863 = vld [vmem:[%s1 + $0x2cc] sm:$0xf]
    %v2864 = vld [vmem:[%s1 + $0x2d0] sm:$0xf]
    %v2865 = vld [vmem:[%s1 + $0x2d4] sm:$0xf]
    %v2866 = vpack.c.bf16 %v2861, %v2861
    %v2867 = vld [vmem:[%s2 + $0x1e8] sm:$0x1]
    %v2868 = vperm.slane %v2867, 0
    %v2873 = vunpack.c.l.b16 %v2862
    %v2874 = vunpack.c.l.b16 %v2863
    %v2875 = vunpack.c.l.b16 %v2864
    %v2876 = vunpack.c.l.b16 %v2865
    %v2877 = vpack.c.b16 %v2874, %v2873
    %v2878 = vpack.c.b16 %v2876, %v2875
    %v2882 = vsel %vm81, %v2866, 0
    %2884 = vmatpush.bf16.msra.mxu0 0
    %2885 = vmatpush.bf16.msra.mxu0 0
    %2886 = vmatpush.bf16.msra.mxu0 0
    %2887 = vmatpush.bf16.msra.mxu0 0
    %2888 = vmatpush.bf16.msra.mxu0 0
    %2889 = vmatpush.bf16.msra.mxu0 0
    %2890 = vmatpush.bf16.msra.mxu0 %v2878
    %2891 = vmatpush.bf16.msra.mxu0 %v2877
    %2892 = vmatmul.bf16.gmra.mxu0 %v2882
    %v2893 = vpop.f32.mrf.mxu0
    %v2894 = vadd.f32 %v2868, %v2893
    %v2895 = vpop.f32.mrf.mxu0
    %2896 = vdwg.mxu0
    %2897 = vst [vmem:[#allocation2] sm:$0x3] %v2894
    // Predicated region
    $region14: #{forward.1} parent=1 // pred_check
      _
    $region15: #{forward.1} parent=1 // pred_check_branch
      %2899 = sbr.rel (0) target = $region17
    $region16: #{forward.1} parent=1 // pred_region
      %2901 = vsyncadd [#allocation3], 0
      %s2903 = sshll.u32 [#allocation2], 4
      %s2904 = int_to_ptr.vmem [resolvable:$true] %s2903
      %s2905 = sshll.u32 %s3, 4
      %s2906 = int_to_ptr.hbm [resolvable:$true] %s2905
      %2908 = dma.vmem_to_hbm [thread:$0]  %s2904, 32, %s2906, [#allocation3]
    $region17: #{forward.1} parent=1 // pred_fallthru
      _
    // Predicated region
    $region18: #{forward.1} parent=1 // pred_check
      _
    $region19: #{forward.1} parent=1 // pred_check_branch
      %2910 = sbr.rel (0) target = $region21
    $region20: #{forward.1} parent=1 // pred_region
      %2912 = dma.done [#allocation3], 32
    $region21: #{forward.1} parent=1 // pred_fallthru
      _
    %2913 = vsyncpa [#allocation3], 1

</llo_original>
